<compile_context>
chip_gen: v6e
topology: v6e:2x2x1
jax: 0.10.0
libtpu: 0.0.40
codegen_flags: <defaults>
</compile_context>

<pallas_src>
import functools

import jax
import jax.numpy as jnp
from jax.experimental import pallas as pl
from jax.experimental.pallas import tpu as pltpu


# ----------------------------- kernel helpers ------------------------------ #

def _fill_padded(pad_ref, interior, H, W, C):
    """Write `interior` (H, W, C) into pad_ref (H+2, W+2, C); zero only the halo."""
    zrow = jnp.zeros((1, W + 2, C), dtype=pad_ref.dtype)
    zcol = jnp.zeros((H + 2, 1, C), dtype=pad_ref.dtype)
    pad_ref[0:1, :, :] = zrow
    pad_ref[H + 1:H + 2, :, :] = zrow
    pad_ref[:, 0:1, :] = zcol
    pad_ref[:, W + 1:W + 2, :] = zcol
    pad_ref[1:H + 1, 1:W + 1, :] = interior.astype(pad_ref.dtype)


def _conv3x3(pad_ref, w_ref, b_ref, H, W, C):
    """'Same' 3x3 conv via 9 per-tap MXU matmuls.

    pad_ref: (H+2, W+2, C) zero-padded activation in VMEM.
    w_ref  : (9, Cin, Cout) tap-major weights (t = ky*3 + kx).
    b_ref  : (1, Cout) bias.
    Returns (H*W, Cout) float32.
    """
    acc = jnp.zeros((H * W, C), jnp.float32)
    for t in range(9):          # 9-way static unroll; each tap is one vmatmul
        dy, dx = divmod(t, 3)
        patch = pad_ref[dy:dy + H, dx:dx + W, :].reshape(H * W, C)
        acc = acc + jnp.dot(patch.astype(jnp.float32),
                            w_ref[t].astype(jnp.float32),
                            preferred_element_type=jnp.float32)
    return acc + b_ref[...].astype(jnp.float32)


# -------------------------------- kernels ---------------------------------- #

def _conv1_stats_kernel(x_ref, w1_ref, b1_ref, z1_ref, stats_ref, xpad_ref,
                        *, H, W, C):
    """Per-sample: z1 = conv1(x); emit z1 and fused (sum, sum-of-squares) stats."""
    x = x_ref[0].astype(jnp.float32)                       # (H, W, C)
    _fill_padded(xpad_ref, x, H, W, C)
    z1 = _conv3x3(xpad_ref, w1_ref, b1_ref, H, W, C)       # (H*W, C)
    z1_ref[...] = z1.reshape(1, H, W, C).astype(z1_ref.dtype)
    stats_ref[0, 0:1, :] = jnp.sum(z1, axis=0, keepdims=True)
    stats_ref[0, 1:2, :] = jnp.sum(z1 * z1, axis=0, keepdims=True)


def _bn_relu_conv2_kernel(x_ref, z1_ref, scale_ref, shift_ref, w2_ref, b2_ref,
                          out_ref, z_ref, apad_ref, *, H, W, C, h):
    """Per-sample: a = relu(z1*scale + shift); z2 = conv2(a); out = x + h*z2."""
    x = x_ref[0].astype(jnp.float32)                       # (H, W, C)
    z1 = z1_ref[0].astype(jnp.float32)
    a = jnp.maximum(z1 * scale_ref[...].astype(jnp.float32)
                    + shift_ref[...].astype(jnp.float32), 0.0)
    _fill_padded(apad_ref, a, H, W, C)
    z2 = _conv3x3(apad_ref, w2_ref, b2_ref, H, W, C).reshape(H, W, C)
    out_ref[...] = (x + h * z2)[None].astype(out_ref.dtype)
    z_ref[...] = z2[None].astype(z_ref.dtype)


def _relu_conv2_kernel(x_ref, w2_ref, b2_ref, out_ref, z_ref, apad_ref,
                       *, H, W, C, h):
    """batchnorm=False path: a = relu(x); z2 = conv2(a); out = x + h*z2.
    (cv1 output is discarded by the PyTorch forward, so it is never computed.)"""
    x = x_ref[0].astype(jnp.float32)
    a = jnp.maximum(x, 0.0)
    _fill_padded(apad_ref, a, H, W, C)
    z2 = _conv3x3(apad_ref, w2_ref, b2_ref, H, W, C).reshape(H, W, C)
    out_ref[...] = (x + h * z2)[None].astype(out_ref.dtype)
    z_ref[...] = z2[None].astype(z_ref.dtype)


# -------------------------------- wrappers ---------------------------------- #

def _to_tap_weight(w_oihw):
    # (Cout, Cin, 3, 3) -> (3, 3, Cin, Cout) -> (9, Cin, Cout), tap = ky*3 + kx
    co, ci = w_oihw.shape[0], w_oihw.shape[1]
    return jnp.transpose(w_oihw.astype(jnp.float32), (2, 3, 1, 0)).reshape(9, ci, co)


def first_res_block_nhwc(x_nhwc, params, *, h, batchnorm, eps=1e-5):
    """x_nhwc: (B, H, W, C). Returns (x + h*z, z) in NHWC."""
    B, H, W, C = x_nhwc.shape
    x_nhwc = x_nhwc.astype(jnp.float32)

    w2 = _to_tap_weight(params["w2"])
    b2 = params["b2"].astype(jnp.float32).reshape(1, C)

    sample_spec = pl.BlockSpec((1, H, W, C), lambda b: (b, 0, 0, 0))
    w_spec = pl.BlockSpec((9, C, C), lambda b: (0, 0, 0))
    vec_spec = pl.BlockSpec((1, C), lambda b: (0, 0))
    stats_spec = pl.BlockSpec((1, 2, C), lambda b: (b, 0, 0))
    cparams = pltpu.CompilerParams(dimension_semantics=("parallel",))
    pad_scratch = pltpu.VMEM((H + 2, W + 2, C), jnp.float32)

    if batchnorm:
        w1 = _to_tap_weight(params["w1"])
        b1 = params["b1"].astype(jnp.float32).reshape(1, C)

        # Pass 1: conv1 + fused per-sample statistics (one traversal of z1).
        z1, stats = pl.pallas_call(
            functools.partial(_conv1_stats_kernel, H=H, W=W, C=C),
            grid=(B,),
            in_specs=[sample_spec, w_spec, vec_spec],
            out_specs=(sample_spec, stats_spec),
            out_shape=(jax.ShapeDtypeStruct((B, H, W, C), jnp.float32),
                       jax.ShapeDtypeStruct((B, 2, C), jnp.float32)),
            scratch_shapes=[pad_scratch],
            compiler_params=cparams,
        )(x_nhwc, w1, b1)

        # Tiny host-side (XLA) reduction over B tiles; fold BN into scale/shift.
        n = float(B * H * W)
        mean = jnp.sum(stats[:, 0, :], axis=0) / n                    # (C,)
        var = jnp.maximum(jnp.sum(stats[:, 1, :], axis=0) / n - mean * mean, 0.0)
        inv = jax.lax.rsqrt(var + eps)
        gamma = params["gamma"].astype(jnp.float32)
        beta = params["beta"].astype(jnp.float32)
        scale = (gamma * inv).reshape(1, C)
        shift = (beta - mean * gamma * inv).reshape(1, C)

        # Pass 2: affine-BN + relu + conv2 + residual.
        out_nhwc, z_nhwc = pl.pallas_call(
            functools.partial(_bn_relu_conv2_kernel, H=H, W=W, C=C, h=float(h)),
            grid=(B,),
            in_specs=[sample_spec, sample_spec, vec_spec, vec_spec, w_spec, vec_spec],
            out_specs=(sample_spec, sample_spec),
            out_shape=(jax.ShapeDtypeStruct((B, H, W, C), jnp.float32),
                       jax.ShapeDtypeStruct((B, H, W, C), jnp.float32)),
            scratch_shapes=[pad_scratch],
            compiler_params=cparams,
        )(x_nhwc, z1, scale, shift, w2, b2)
    else:
        # batchnorm=False: w1/b1/gamma/beta are never DMA'd (not even passed).
        out_nhwc, z_nhwc = pl.pallas_call(
            functools.partial(_relu_conv2_kernel, H=H, W=W, C=C, h=float(h)),
            grid=(B,),
            in_specs=[sample_spec, w_spec, vec_spec],
            out_specs=(sample_spec, sample_spec),
            out_shape=(jax.ShapeDtypeStruct((B, H, W, C), jnp.float32),
                       jax.ShapeDtypeStruct((B, H, W, C), jnp.float32)),
            scratch_shapes=[pad_scratch],
            compiler_params=cparams,
        )(x_nhwc, w2, b2)

    return out_nhwc, z_nhwc


def first_res_block(x, params, *, h, batchnorm, eps=1e-5):
    """PyTorch-style NCHW entry point: x (B, C, H, W) -> (x + h*z, z) NCHW."""
    x_nhwc = jnp.transpose(x, (0, 2, 3, 1))
    out_nhwc, z_nhwc = first_res_block_nhwc(x_nhwc, params, h=h,
                                            batchnorm=batchnorm, eps=eps)
    return (jnp.transpose(out_nhwc, (0, 3, 1, 2)),
            jnp.transpose(z_nhwc, (0, 3, 1, 2)))


# ------------------------------- reference ---------------------------------- #

def _ref_forward(x, params, *, h, batchnorm, eps=1e-5):
    """Pure-JAX reference mirroring the PyTorch forward (NCHW)."""
    def conv(v, w, b):
        y = jax.lax.conv_general_dilated(
            v, w, window_strides=(1, 1), padding=((1, 1), (1, 1)),
            dimension_numbers=("NCHW", "OIHW", "NCHW"))
        return y + b[None, :, None, None]

    z = conv(x, params["w1"], params["b1"])
    if batchnorm:
        mean = jnp.mean(z, axis=(0, 2, 3), keepdims=True)
        var = jnp.mean((z - mean) ** 2, axis=(0, 2, 3), keepdims=True)
        zn = (z - mean) / jnp.sqrt(var + eps)
        zn = zn * params["gamma"][None, :, None, None] + params["beta"][None, :, None, None]
        z = jnp.maximum(zn, 0.0)
    else:
        z = jnp.maximum(x, 0.0)
    z = conv(z, params["w2"], params["b2"])
    return x + h * z, z


# --------------------------------- driver ----------------------------------- #

if __name__ == "__main__":
    B, C, H, W = 2, 8, 16, 16
    nfilters = C
    bias = True
    h = 0.1

    key = jax.random.PRNGKey(0)
    kx, kw1, kb1, kw2, kb2, kg, kb = jax.random.split(key, 7)

    x = jax.random.normal(kx, (B, C, H, W), dtype=jnp.float32)
    params = {
        "w1": jax.random.normal(kw1, (nfilters, nfilters, 3, 3), jnp.float32) * 0.1,
        "b1": (jax.random.normal(kb1, (nfilters,), jnp.float32) * 0.1
               if bias else jnp.zeros((nfilters,), jnp.float32)),
        "w2": jax.random.normal(kw2, (nfilters, nfilters, 3, 3), jnp.float32) * 0.1,
        "b2": (jax.random.normal(kb2, (nfilters,), jnp.float32) * 0.1
               if bias else jnp.zeros((nfilters,), jnp.float32)),
        "gamma": 1.0 + 0.1 * jax.random.normal(kg, (nfilters,), jnp.float32),
        "beta": 0.1 * jax.random.normal(kb, (nfilters,), jnp.float32),
    }

    for batchnorm in (True, False):
        out, z = first_res_block(x, params, h=h, batchnorm=batchnorm)
        out = jax.block_until_ready(out)
        z = jax.block_until_ready(z)
        out_ref, z_ref = _ref_forward(x, params, h=h, batchnorm=batchnorm)
        assert jnp.allclose(out, out_ref, atol=1e-4, rtol=1e-4), \
            f"residual output mismatch (batchnorm={batchnorm})"
        assert jnp.allclose(z, z_ref, atol=1e-4, rtol=1e-4), \
            f"z output mismatch (batchnorm={batchnorm})"

    print("KERNEL_OK")
</pallas_src>

<mosaic_0001>
module attributes {stable_mosaic.version = 11 : i64} {
  func.func @_conv1_stats_kernel(%arg0: i32, %arg1: memref<1x16x16x8xf32, #tpu.memory_space<vmem>>, %arg2: memref<9x8x8xf32, #tpu.memory_space<vmem>>, %arg3: memref<1x8xf32, #tpu.memory_space<vmem>>, %arg4: memref<1x16x16x8xf32, #tpu.memory_space<vmem>>, %arg5: memref<1x2x8xf32, #tpu.memory_space<vmem>>, %arg6: memref<18x18x8xf32, #tpu.memory_space<vmem>>) attributes {dimension_semantics = [#tpu.dimension_semantics<parallel>], iteration_bounds = array<i64: 2>, scalar_prefetch = 0 : i64, scratch_operands = 1 : i64, tpu.core_type = #tpu.core_type<tc>, window_params = [{transform_indices = @transform_0, window_bounds = array<i64: 1, 16, 16, 8>}, {pipeline_mode = #tpu.pipeline_mode<synchronous>, transform_indices = @transform_1, window_bounds = array<i64: 9, 8, 8>}, {pipeline_mode = #tpu.pipeline_mode<synchronous>, transform_indices = @transform_2, window_bounds = array<i64: 1, 8>}, {transform_indices = @transform_3, window_bounds = array<i64: 1, 16, 16, 8>}, {transform_indices = @transform_4, window_bounds = array<i64: 1, 2, 8>}]} {
    %c0 = arith.constant 0 : index
    %c0_0 = arith.constant 0 : index
    %c0_1 = arith.constant 0 : index
    %c0_2 = arith.constant 0 : index
    %0 = vector.load %arg1[%c0, %c0_0, %c0_1, %c0_2] : memref<1x16x16x8xf32, #tpu.memory_space<vmem>>, vector<1x16x16x8xf32>
    %1 = vector.shape_cast %0 : vector<1x16x16x8xf32> to vector<16x16x8xf32>
    %cst = arith.constant 0.000000e+00 : f32
    %2 = vector.broadcast %cst : f32 to vector<1x18x8xf32>
    %cst_3 = arith.constant 0.000000e+00 : f32
    %3 = vector.broadcast %cst_3 : f32 to vector<18x1x8xf32>
    %c0_4 = arith.constant 0 : index
    %c0_5 = arith.constant 0 : index
    %c0_6 = arith.constant 0 : index
    %4 = vector.load %arg6[%c0_4, %c0_5, %c0_6] : memref<18x18x8xf32, #tpu.memory_space<vmem>>, vector<1x18x8xf32>
    tpu.vector_store %arg6[%c0_4, %c0_5, %c0_6], %2 {strides = array<i32>} : memref<18x18x8xf32, #tpu.memory_space<vmem>>, vector<1x18x8xf32>,
    %c17 = arith.constant 17 : index
    %c0_7 = arith.constant 0 : index
    %c0_8 = arith.constant 0 : index
    %5 = vector.load %arg6[%c17, %c0_7, %c0_8] : memref<18x18x8xf32, #tpu.memory_space<vmem>>, vector<1x18x8xf32>
    tpu.vector_store %arg6[%c17, %c0_7, %c0_8], %2 {strides = array<i32>} : memref<18x18x8xf32, #tpu.memory_space<vmem>>, vector<1x18x8xf32>,
    %c0_9 = arith.constant 0 : index
    %c0_10 = arith.constant 0 : index
    %c0_11 = arith.constant 0 : index
    %6 = vector.load %arg6[%c0_9, %c0_10, %c0_11] : memref<18x18x8xf32, #tpu.memory_space<vmem>>, vector<18x1x8xf32>
    tpu.vector_store %arg6[%c0_9, %c0_10, %c0_11], %3 {strides = array<i32>} : memref<18x18x8xf32, #tpu.memory_space<vmem>>, vector<18x1x8xf32>,
    %c0_12 = arith.constant 0 : index
    %c17_13 = arith.constant 17 : index
    %c0_14 = arith.constant 0 : index
    %7 = vector.load %arg6[%c0_12, %c17_13, %c0_14] : memref<18x18x8xf32, #tpu.memory_space<vmem>>, vector<18x1x8xf32>
    tpu.vector_store %arg6[%c0_12, %c17_13, %c0_14], %3 {strides = array<i32>} : memref<18x18x8xf32, #tpu.memory_space<vmem>>, vector<18x1x8xf32>,
    %c1 = arith.constant 1 : index
    %c1_15 = arith.constant 1 : index
    %c0_16 = arith.constant 0 : index
    %8 = vector.load %arg6[%c1, %c1_15, %c0_16] : memref<18x18x8xf32, #tpu.memory_space<vmem>>, vector<16x16x8xf32>
    tpu.vector_store %arg6[%c1, %c1_15, %c0_16], %1 {strides = array<i32>} : memref<18x18x8xf32, #tpu.memory_space<vmem>>, vector<16x16x8xf32>,
    %cst_17 = arith.constant 0.000000e+00 : f32
    %9 = vector.broadcast %cst_17 : f32 to vector<256x8xf32>
    %c0_18 = arith.constant 0 : index
    %c0_19 = arith.constant 0 : index
    %c0_20 = arith.constant 0 : index
    %10 = vector.load %arg6[%c0_18, %c0_19, %c0_20] : memref<18x18x8xf32, #tpu.memory_space<vmem>>, vector<16x16x8xf32>
    %11 = vector.shape_cast %10 : vector<16x16x8xf32> to vector<256x8xf32>
    %c0_21 = arith.constant 0 : index
    %c0_22 = arith.constant 0 : index
    %c0_23 = arith.constant 0 : index
    %12 = vector.load %arg2[%c0_21, %c0_22, %c0_23] : memref<9x8x8xf32, #tpu.memory_space<vmem>>, vector<1x8x8xf32>
    %13 = vector.shape_cast %12 : vector<1x8x8xf32> to vector<8x8xf32>
    %cst_24 = arith.constant dense<0.000000e+00> : vector<256x8xf32>
    %14 = tpu.matmul %11, %13, %cst_24 {dimension_numbers = #tpu.dot_dimension_numbers<[1], [0], [0], [1], [0, 0, 1, 1], [], []>} : vector<256x8xf32>, vector<8x8xf32>, vector<256x8xf32> -> vector<256x8xf32>
    %15 = arith.addf %9, %14 : vector<256x8xf32>
    %c0_25 = arith.constant 0 : index
    %c1_26 = arith.constant 1 : index
    %c0_27 = arith.constant 0 : index
    %16 = vector.load %arg6[%c0_25, %c1_26, %c0_27] : memref<18x18x8xf32, #tpu.memory_space<vmem>>, vector<16x16x8xf32>
    %17 = vector.shape_cast %16 : vector<16x16x8xf32> to vector<256x8xf32>
    %c1_28 = arith.constant 1 : index
    %c0_29 = arith.constant 0 : index
    %c0_30 = arith.constant 0 : index
    %18 = vector.load %arg2[%c1_28, %c0_29, %c0_30] : memref<9x8x8xf32, #tpu.memory_space<vmem>>, vector<1x8x8xf32>
    %19 = vector.shape_cast %18 : vector<1x8x8xf32> to vector<8x8xf32>
    %cst_31 = arith.constant dense<0.000000e+00> : vector<256x8xf32>
    %20 = tpu.matmul %17, %19, %cst_31 {dimension_numbers = #tpu.dot_dimension_numbers<[1], [0], [0], [1], [0, 0, 1, 1], [], []>} : vector<256x8xf32>, vector<8x8xf32>, vector<256x8xf32> -> vector<256x8xf32>
    %21 = arith.addf %15, %20 : vector<256x8xf32>
    %c0_32 = arith.constant 0 : index
    %c2 = arith.constant 2 : index
    %c0_33 = arith.constant 0 : index
    %22 = vector.load %arg6[%c0_32, %c2, %c0_33] : memref<18x18x8xf32, #tpu.memory_space<vmem>>, vector<16x16x8xf32>
    %23 = vector.shape_cast %22 : vector<16x16x8xf32> to vector<256x8xf32>
    %c2_34 = arith.constant 2 : index
    %c0_35 = arith.constant 0 : index
    %c0_36 = arith.constant 0 : index
    %24 = vector.load %arg2[%c2_34, %c0_35, %c0_36] : memref<9x8x8xf32, #tpu.memory_space<vmem>>, vector<1x8x8xf32>
    %25 = vector.shape_cast %24 : vector<1x8x8xf32> to vector<8x8xf32>
    %cst_37 = arith.constant dense<0.000000e+00> : vector<256x8xf32>
    %26 = tpu.matmul %23, %25, %cst_37 {dimension_numbers = #tpu.dot_dimension_numbers<[1], [0], [0], [1], [0, 0, 1, 1], [], []>} : vector<256x8xf32>, vector<8x8xf32>, vector<256x8xf32> -> vector<256x8xf32>
    %27 = arith.addf %21, %26 : vector<256x8xf32>
    %c1_38 = arith.constant 1 : index
    %c0_39 = arith.constant 0 : index
    %c0_40 = arith.constant 0 : index
    %28 = vector.load %arg6[%c1_38, %c0_39, %c0_40] : memref<18x18x8xf32, #tpu.memory_space<vmem>>, vector<16x16x8xf32>
    %29 = vector.shape_cast %28 : vector<16x16x8xf32> to vector<256x8xf32>
    %c3 = arith.constant 3 : index
    %c0_41 = arith.constant 0 : index
    %c0_42 = arith.constant 0 : index
    %30 = vector.load %arg2[%c3, %c0_41, %c0_42] : memref<9x8x8xf32, #tpu.memory_space<vmem>>, vector<1x8x8xf32>
    %31 = vector.shape_cast %30 : vector<1x8x8xf32> to vector<8x8xf32>
    %cst_43 = arith.constant dense<0.000000e+00> : vector<256x8xf32>
    %32 = tpu.matmul %29, %31, %cst_43 {dimension_numbers = #tpu.dot_dimension_numbers<[1], [0], [0], [1], [0, 0, 1, 1], [], []>} : vector<256x8xf32>, vector<8x8xf32>, vector<256x8xf32> -> vector<256x8xf32>
    %33 = arith.addf %27, %32 : vector<256x8xf32>
    %c1_44 = arith.constant 1 : index
    %c1_45 = arith.constant 1 : index
    %c0_46 = arith.constant 0 : index
    %34 = vector.load %arg6[%c1_44, %c1_45, %c0_46] : memref<18x18x8xf32, #tpu.memory_space<vmem>>, vector<16x16x8xf32>
    %35 = vector.shape_cast %34 : vector<16x16x8xf32> to vector<256x8xf32>
    %c4 = arith.constant 4 : index
    %c0_47 = arith.constant 0 : index
    %c0_48 = arith.constant 0 : index
    %36 = vector.load %arg2[%c4, %c0_47, %c0_48] : memref<9x8x8xf32, #tpu.memory_space<vmem>>, vector<1x8x8xf32>
    %37 = vector.shape_cast %36 : vector<1x8x8xf32> to vector<8x8xf32>
    %cst_49 = arith.constant dense<0.000000e+00> : vector<256x8xf32>
    %38 = tpu.matmul %35, %37, %cst_49 {dimension_numbers = #tpu.dot_dimension_numbers<[1], [0], [0], [1], [0, 0, 1, 1], [], []>} : vector<256x8xf32>, vector<8x8xf32>, vector<256x8xf32> -> vector<256x8xf32>
    %39 = arith.addf %33, %38 : vector<256x8xf32>
    %c1_50 = arith.constant 1 : index
    %c2_51 = arith.constant 2 : index
    %c0_52 = arith.constant 0 : index
    %40 = vector.load %arg6[%c1_50, %c2_51, %c0_52] : memref<18x18x8xf32, #tpu.memory_space<vmem>>, vector<16x16x8xf32>
    %41 = vector.shape_cast %40 : vector<16x16x8xf32> to vector<256x8xf32>
    %c5 = arith.constant 5 : index
    %c0_53 = arith.constant 0 : index
    %c0_54 = arith.constant 0 : index
    %42 = vector.load %arg2[%c5, %c0_53, %c0_54] : memref<9x8x8xf32, #tpu.memory_space<vmem>>, vector<1x8x8xf32>
    %43 = vector.shape_cast %42 : vector<1x8x8xf32> to vector<8x8xf32>
    %cst_55 = arith.constant dense<0.000000e+00> : vector<256x8xf32>
    %44 = tpu.matmul %41, %43, %cst_55 {dimension_numbers = #tpu.dot_dimension_numbers<[1], [0], [0], [1], [0, 0, 1, 1], [], []>} : vector<256x8xf32>, vector<8x8xf32>, vector<256x8xf32> -> vector<256x8xf32>
    %45 = arith.addf %39, %44 : vector<256x8xf32>
    %c2_56 = arith.constant 2 : index
    %c0_57 = arith.constant 0 : index
    %c0_58 = arith.constant 0 : index
    %46 = vector.load %arg6[%c2_56, %c0_57, %c0_58] : memref<18x18x8xf32, #tpu.memory_space<vmem>>, vector<16x16x8xf32>
    %47 = vector.shape_cast %46 : vector<16x16x8xf32> to vector<256x8xf32>
    %c6 = arith.constant 6 : index
    %c0_59 = arith.constant 0 : index
    %c0_60 = arith.constant 0 : index
    %48 = vector.load %arg2[%c6, %c0_59, %c0_60] : memref<9x8x8xf32, #tpu.memory_space<vmem>>, vector<1x8x8xf32>
    %49 = vector.shape_cast %48 : vector<1x8x8xf32> to vector<8x8xf32>
    %cst_61 = arith.constant dense<0.000000e+00> : vector<256x8xf32>
    %50 = tpu.matmul %47, %49, %cst_61 {dimension_numbers = #tpu.dot_dimension_numbers<[1], [0], [0], [1], [0, 0, 1, 1], [], []>} : vector<256x8xf32>, vector<8x8xf32>, vector<256x8xf32> -> vector<256x8xf32>
    %51 = arith.addf %45, %50 : vector<256x8xf32>
    %c2_62 = arith.constant 2 : index
    %c1_63 = arith.constant 1 : index
    %c0_64 = arith.constant 0 : index
    %52 = vector.load %arg6[%c2_62, %c1_63, %c0_64] : memref<18x18x8xf32, #tpu.memory_space<vmem>>, vector<16x16x8xf32>
    %53 = vector.shape_cast %52 : vector<16x16x8xf32> to vector<256x8xf32>
    %c7 = arith.constant 7 : index
    %c0_65 = arith.constant 0 : index
    %c0_66 = arith.constant 0 : index
    %54 = vector.load %arg2[%c7, %c0_65, %c0_66] : memref<9x8x8xf32, #tpu.memory_space<vmem>>, vector<1x8x8xf32>
    %55 = vector.shape_cast %54 : vector<1x8x8xf32> to vector<8x8xf32>
    %cst_67 = arith.constant dense<0.000000e+00> : vector<256x8xf32>
    %56 = tpu.matmul %53, %55, %cst_67 {dimension_numbers = #tpu.dot_dimension_numbers<[1], [0], [0], [1], [0, 0, 1, 1], [], []>} : vector<256x8xf32>, vector<8x8xf32>, vector<256x8xf32> -> vector<256x8xf32>
    %57 = arith.addf %51, %56 : vector<256x8xf32>
    %c2_68 = arith.constant 2 : index
    %c2_69 = arith.constant 2 : index
    %c0_70 = arith.constant 0 : index
    %58 = vector.load %arg6[%c2_68, %c2_69, %c0_70] : memref<18x18x8xf32, #tpu.memory_space<vmem>>, vector<16x16x8xf32>
    %59 = vector.shape_cast %58 : vector<16x16x8xf32> to vector<256x8xf32>
    %c8 = arith.constant 8 : index
    %c0_71 = arith.constant 0 : index
    %c0_72 = arith.constant 0 : index
    %60 = vector.load %arg2[%c8, %c0_71, %c0_72] : memref<9x8x8xf32, #tpu.memory_space<vmem>>, vector<1x8x8xf32>
    %61 = vector.shape_cast %60 : vector<1x8x8xf32> to vector<8x8xf32>
    %cst_73 = arith.constant dense<0.000000e+00> : vector<256x8xf32>
    %62 = tpu.matmul %59, %61, %cst_73 {dimension_numbers = #tpu.dot_dimension_numbers<[1], [0], [0], [1], [0, 0, 1, 1], [], []>} : vector<256x8xf32>, vector<8x8xf32>, vector<256x8xf32> -> vector<256x8xf32>
    %63 = arith.addf %57, %62 : vector<256x8xf32>
    %c0_74 = arith.constant 0 : index
    %c0_75 = arith.constant 0 : index
    %64 = vector.load %arg3[%c0_74, %c0_75] : memref<1x8xf32, #tpu.memory_space<vmem>>, vector<1x8xf32>
    %65 = vector.broadcast %64 : vector<1x8xf32> to vector<256x8xf32>
    %66 = arith.addf %63, %65 : vector<256x8xf32>
    %67 = vector.shape_cast %66 : vector<256x8xf32> to vector<1x16x16x8xf32>
    %c0_76 = arith.constant 0 : index
    %c0_77 = arith.constant 0 : index
    %c0_78 = arith.constant 0 : index
    %c0_79 = arith.constant 0 : index
    %68 = vector.load %arg4[%c0_76, %c0_77, %c0_78, %c0_79] : memref<1x16x16x8xf32, #tpu.memory_space<vmem>>, vector<1x16x16x8xf32>
    tpu.vector_store %arg4[%c0_76, %c0_77, %c0_78, %c0_79], %67 {strides = array<i32>} : memref<1x16x16x8xf32, #tpu.memory_space<vmem>>, vector<1x16x16x8xf32>,
    %cst_80 = arith.constant dense<0.000000e+00> : vector<8xf32>
    %69 = vector.multi_reduction <add>, %66, %cst_80 [0] : vector<256x8xf32> to vector<8xf32>
    %70 = vector.shape_cast %69 : vector<8xf32> to vector<1x8xf32>
    %c0_81 = arith.constant 0 : index
    %c0_82 = arith.constant 0 : index
    %c0_83 = arith.constant 0 : index
    %71 = vector.load %arg5[%c0_81, %c0_82, %c0_83] : memref<1x2x8xf32, #tpu.memory_space<vmem>>, vector<1x1x8xf32>
    %72 = vector.shape_cast %71 : vector<1x1x8xf32> to vector<1x8xf32>
    %73 = vector.shape_cast %70 : vector<1x8xf32> to vector<1x1x8xf32>
    tpu.vector_store %arg5[%c0_81, %c0_82, %c0_83], %73 {strides = array<i32>} : memref<1x2x8xf32, #tpu.memory_space<vmem>>, vector<1x1x8xf32>,
    %74 = arith.mulf %66, %66 : vector<256x8xf32>
    %cst_84 = arith.constant dense<0.000000e+00> : vector<8xf32>
    %75 = vector.multi_reduction <add>, %74, %cst_84 [0] : vector<256x8xf32> to vector<8xf32>
    %76 = vector.shape_cast %75 : vector<8xf32> to vector<1x8xf32>
    %c0_85 = arith.constant 0 : index
    %c1_86 = arith.constant 1 : index
    %c0_87 = arith.constant 0 : index
    %77 = vector.load %arg5[%c0_85, %c1_86, %c0_87] : memref<1x2x8xf32, #tpu.memory_space<vmem>>, vector<1x1x8xf32>
    %78 = vector.shape_cast %77 : vector<1x1x8xf32> to vector<1x8xf32>
    %79 = vector.shape_cast %76 : vector<1x8xf32> to vector<1x1x8xf32>
    tpu.vector_store %arg5[%c0_85, %c1_86, %c0_87], %79 {strides = array<i32>} : memref<1x2x8xf32, #tpu.memory_space<vmem>>, vector<1x1x8xf32>,
    return
  }
  func.func @transform_0(%arg0: i32) -> (i32, i32, i32, i32) {
    %c0_i32 = arith.constant 0 : i32
    %c0_i32_0 = arith.constant 0 : i32
    %c0_i32_1 = arith.constant 0 : i32
    %c0_i32_2 = arith.constant 0 : i32
    return %arg0, %c0_i32, %c0_i32_0, %c0_i32_1 : i32, i32, i32, i32
  }
  func.func @transform_1(%arg0: i32) -> (i32, i32, i32) {
    %c0_i32 = arith.constant 0 : i32
    %c0_i32_0 = arith.constant 0 : i32
    %c0_i32_1 = arith.constant 0 : i32
    %c0_i32_2 = arith.constant 0 : i32
    return %c0_i32, %c0_i32_0, %c0_i32_1 : i32, i32, i32
  }
  func.func @transform_2(%arg0: i32) -> (i32, i32) {
    %c0_i32 = arith.constant 0 : i32
    %c0_i32_0 = arith.constant 0 : i32
    %c0_i32_1 = arith.constant 0 : i32
    return %c0_i32, %c0_i32_0 : i32, i32
  }
  func.func @transform_3(%arg0: i32) -> (i32, i32, i32, i32) {
    %c0_i32 = arith.constant 0 : i32
    %c0_i32_0 = arith.constant 0 : i32
    %c0_i32_1 = arith.constant 0 : i32
    %c0_i32_2 = arith.constant 0 : i32
    return %arg0, %c0_i32, %c0_i32_0, %c0_i32_1 : i32, i32, i32, i32
  }
  func.func @transform_4(%arg0: i32) -> (i32, i32, i32) {
    %c0_i32 = arith.constant 0 : i32
    %c0_i32_0 = arith.constant 0 : i32
    %c0_i32_1 = arith.constant 0 : i32
    return %arg0, %c0_i32, %c0_i32_0 : i32, i32, i32
  }
}

</mosaic_0001>

<llo_original>
// kernel: tpu_custom_call.1
$region0: #{tpu_custom_call.1}
  #allocation0 [shape = 'u32[]', space=smem, size = 0x4, offset = 0x4, fixed_abs, tag = 'smem constant byte address 0x4 - core index']
  #allocation1 [shape = 'u32[144,128]{1,0:T(1,128)}', space=vmem, size = 0x12000, scoped, tag = 'internal scratch']
  #allocation2 [shape = 'f32[18,18,8]{2,1,0:T(8,128)}', space=vmem, size = 0x36000, scoped, tag = 'scratch operand']
  %s0 = inlined_call_operand.vmem [shape: f32[2,16,16,8], index: 0, kind: input, shape index: {}]
  %s1 = inlined_call_operand.vmem [shape: f32[9,8,8], index: 1, kind: input, shape index: {}]
  %s2 = inlined_call_operand.vmem [shape: f32[1,8], index: 2, kind: input, shape index: {}]
  %s3 = inlined_call_operand.vmem [shape: f32[2,16,16,8], index: 3, kind: output, shape index: {0}]
  %s4 = inlined_call_operand.hbm [shape: f32[2,2,8], index: 4, kind: output, shape index: {1}]
  %5 = xla_tuple %s3, %s4
  %s6 = sld [smem:[#allocation0]]
  $region53: #{tpu_custom_call.1} parent=0
    _
  %s8 = ssub.s32 1, %s6
  %s9 = scalar_select 0, %s8, %s6
  $region1: #{tpu_custom_call.1} parent=0
    #allocation3 [shape = 'u8[2048]{0}', space=vmem, size = 0x800, scoped, tag = 'output window, operand 1']
    #allocation4 [shape = 's32[2]{0}', space=sflag, size = 0x8, scoped, tag = 'scoped memory for tpu_custom_call.1']
    %10 = vsyncpa [#allocation4], 0
    %s11 = scalar_lea.sflag [#allocation4], 1
    %12 = vsyncpa %s11, 0
    loop: start=0, step=1, limit=4
    $region2: #{tpu_custom_call.1} parent=1 // loop_pre_header
      _
    $region3: #{tpu_custom_call.1} parent=1 // loop_header
      %s14 = sphi 0, %s18
      %p15 = scmp.ge.s32.totalorder %s14, 4
      %s24 = sphi 0, %s26
      %s27 = sphi 0, %s24
      %s28 = sphi 0, %s27
      %s44 = sphi 0, %s28
      %s48 = sphi 0, %s48
      %s50 = sphi 0, %s48
      %s51 = sphi 0, %s50
      %s65 = sphi 0, %s51
      %s69 = sphi 0, %s69
      %s71 = sphi 0, %s69
      %s72 = sphi 0, %s71
      %s86 = sphi 0, %s72
      %s92 = sphi 0, %s94
      %s95 = sphi 0, %s92
      %s96 = sphi 0, %s95
      %s112 = sphi 0, %s96
      %s118 = sphi 0, %s120
      %s121 = sphi 0, %s118
      %s122 = sphi 0, %s121
      %s138 = sphi 0, %s122
    $region4: #{tpu_custom_call.1} parent=1 // loop_header_branch
      %17 = sbr.rel (%p15) target = $region8
    $region5: #{tpu_custom_call.1} parent=1 // loop_body
      %s19 = ssub.s32 %s14, 1
      %s20 = ssub.s32 %s14, 2
      %s21 = sadd.s32 %s14, 1
      %s22 = ssub.s32 %s14, %s21
      %p23 = scmp.eq.s32.totalorder %s22, 0
      %s25 = sadd.s32 %s24, 1
      %s26 = scalar_select %p23, %s24, %s25
      %p29 = pneg %p23
      %p30 = scmp.eq.s32.totalorder %s14, 1
      %p31 = por %p29, %p30
      %p32 = scmp.ne.s32.totalorder %s24, %s27
      %p33 = scmp.eq.s32.totalorder %s14, 0
      %p34 = por %p32, %p33
      %p35 = scmp.ne.s32.totalorder %s24, %s27
      %p36 = scmp.eq.s32.totalorder %s19, 1
      %p37 = por %p35, %p36
      %p38 = scmp.ne.s32.totalorder %s27, %s28
      %p39 = scmp.eq.s32.totalorder %s19, 0
      %p40 = por %p38, %p39
      %p41 = scmp.ne.s32.totalorder %s27, %s28
      %p42 = scmp.eq.s32.totalorder %s20, 1
      %p43 = por %p41, %p42
      %p45 = scmp.ne.s32.totalorder %s28, %s44
      %p46 = scmp.eq.s32.totalorder %s20, 0
      %p47 = por %p45, %p46
      %s49 = sadd.s32 %s48, 1
      %p52 = scmp.eq.s32.totalorder %s14, 1
      %p53 = scmp.ne.s32.totalorder %s48, %s50
      %p54 = scmp.eq.s32.totalorder %s14, 0
      %p55 = por %p53, %p54
      %p56 = scmp.ne.s32.totalorder %s48, %s50
      %p57 = scmp.eq.s32.totalorder %s19, 1
      %p58 = por %p56, %p57
      %p59 = scmp.ne.s32.totalorder %s50, %s51
      %p60 = scmp.eq.s32.totalorder %s19, 0
      %p61 = por %p59, %p60
      %p62 = scmp.ne.s32.totalorder %s50, %s51
      %p63 = scmp.eq.s32.totalorder %s20, 1
      %p64 = por %p62, %p63
      %p66 = scmp.ne.s32.totalorder %s51, %s65
      %p67 = scmp.eq.s32.totalorder %s20, 0
      %p68 = por %p66, %p67
      %s70 = sadd.s32 %s69, 1
      %p73 = scmp.eq.s32.totalorder %s14, 1
      %p74 = scmp.ne.s32.totalorder %s69, %s71
      %p75 = scmp.eq.s32.totalorder %s14, 0
      %p76 = por %p74, %p75
      %p77 = scmp.ne.s32.totalorder %s69, %s71
      %p78 = scmp.eq.s32.totalorder %s19, 1
      %p79 = por %p77, %p78
      %p80 = scmp.ne.s32.totalorder %s71, %s72
      %p81 = scmp.eq.s32.totalorder %s19, 0
      %p82 = por %p80, %p81
      %p83 = scmp.ne.s32.totalorder %s71, %s72
      %p84 = scmp.eq.s32.totalorder %s20, 1
      %p85 = por %p83, %p84
      %p87 = scmp.ne.s32.totalorder %s72, %s86
      %p88 = scmp.eq.s32.totalorder %s20, 0
      %p89 = por %p87, %p88
      %s90 = ssub.s32 %s14, %s21
      %p91 = scmp.eq.s32.totalorder %s90, 0
      %s93 = sadd.s32 %s92, 1
      %s94 = scalar_select %p91, %s92, %s93
      %p97 = pneg %p91
      %p98 = scmp.eq.s32.totalorder %s14, 1
      %p99 = por %p97, %p98
      %p100 = scmp.ne.s32.totalorder %s92, %s95
      %p101 = scmp.eq.s32.totalorder %s14, 0
      %p102 = por %p100, %p101
      %p103 = scmp.ne.s32.totalorder %s92, %s95
      %p104 = scmp.eq.s32.totalorder %s19, 1
      %p105 = por %p103, %p104
      %p106 = scmp.ne.s32.totalorder %s95, %s96
      %p107 = scmp.eq.s32.totalorder %s19, 0
      %p108 = por %p106, %p107
      %p109 = scmp.ne.s32.totalorder %s95, %s96
      %p110 = scmp.eq.s32.totalorder %s20, 1
      %p111 = por %p109, %p110
      %p113 = scmp.ne.s32.totalorder %s96, %s112
      %p114 = scmp.eq.s32.totalorder %s20, 0
      %p115 = por %p113, %p114
      %s116 = ssub.s32 %s14, %s21
      %p117 = scmp.eq.s32.totalorder %s116, 0
      %s119 = sadd.s32 %s118, 1
      %s120 = scalar_select %p117, %s118, %s119
      %p123 = pneg %p117
      %p124 = scmp.eq.s32.totalorder %s14, 1
      %p125 = por %p123, %p124
      %p126 = scmp.ne.s32.totalorder %s118, %s121
      %p127 = scmp.eq.s32.totalorder %s14, 0
      %p128 = por %p126, %p127
      %p129 = scmp.ne.s32.totalorder %s118, %s121
      %p130 = scmp.eq.s32.totalorder %s19, 1
      %p131 = por %p129, %p130
      %p132 = scmp.ne.s32.totalorder %s121, %s122
      %p133 = scmp.eq.s32.totalorder %s19, 0
      %p134 = por %p132, %p133
      %p135 = scmp.ne.s32.totalorder %s121, %s122
      %p136 = scmp.eq.s32.totalorder %s20, 1
      %p137 = por %p135, %p136
      %p139 = scmp.ne.s32.totalorder %s122, %s138
      %p140 = scmp.eq.s32.totalorder %s20, 0
      %p141 = por %p139, %p140
      %p142 = scmp.le.s32.totalorder 1, %s14
      %p143 = scmp.lt.s32.totalorder %s14, 3
      %p144 = pnand %p142, %p143
      %p145 = pneg %p144
      // Predicated region
      $region9: #{tpu_custom_call.1} parent=5 // pred_check
        _
      $region10: #{tpu_custom_call.1} parent=5 // pred_check_branch
        %147 = sbr.rel (%p144) target = $region12
      $region11: #{tpu_custom_call.1} parent=5 // pred_region
        %s148 = ssub.s32 %s14, 1
        // Predicated region
        $region13: #{tpu_custom_call.1} parent=11 // pred_check
          %p149 = pneg %p61
        $region14: #{tpu_custom_call.1} parent=11 // pred_check_branch
          %151 = sbr.rel (%p149) target = $region16
        $region15: #{tpu_custom_call.1} parent=11 // pred_region
          _
        $region16: #{tpu_custom_call.1} parent=11 // pred_fallthru
          _
        // Predicated region
        $region17: #{tpu_custom_call.1} parent=11 // pred_check
          %p152 = pneg %p82
        $region18: #{tpu_custom_call.1} parent=11 // pred_check_branch
          %154 = sbr.rel (%p152) target = $region20
        $region19: #{tpu_custom_call.1} parent=11 // pred_region
          _
        $region20: #{tpu_custom_call.1} parent=11 // pred_fallthru
          _
      $region12: #{tpu_custom_call.1} parent=5 // pred_fallthru
        _
      %p155 = scmp.lt.s32.totalorder %s14, 2
      // Predicated region
      $region21: #{tpu_custom_call.1} parent=5 // pred_check
        %p156 = pneg %p155
      $region22: #{tpu_custom_call.1} parent=5 // pred_check_branch
        %158 = sbr.rel (%p156) target = $region24
      $region23: #{tpu_custom_call.1} parent=5 // pred_region
        // Predicated region
        $region25: #{tpu_custom_call.1} parent=23 // pred_check
          %p159 = pneg %p34
        $region26: #{tpu_custom_call.1} parent=23 // pred_check_branch
          %161 = sbr.rel (%p159) target = $region28
        $region27: #{tpu_custom_call.1} parent=23 // pred_region
          %p162 = scmp.lt.s32.totalorder %s14, 1
          %s163 = scalar_select %p162, %s14, 1
          %s164 = smul.addr %s163, 32
          %s165 = smul.addr %s164, 8
          %s166 = scalar_lea.vmem %s0, %s165
        $region28: #{tpu_custom_call.1} parent=23 // pred_fallthru
          _
      $region24: #{tpu_custom_call.1} parent=5 // pred_fallthru
        _
      %p167 = scmp.le.s32.totalorder 1, %s14
      %p168 = scmp.lt.s32.totalorder %s14, 3
      %p169 = pnand %p167, %p168
      %p170 = pneg %p169
      // Predicated region
      $region29: #{tpu_custom_call.1} parent=5 // pred_check
        _
      $region30: #{tpu_custom_call.1} parent=5 // pred_check_branch
        %172 = sbr.rel (%p169) target = $region32
      $region31: #{tpu_custom_call.1} parent=5 // pred_region
        %s173 = ssub.s32 %s14, 1
        %p174 = scmp.lt.s32.totalorder %s19, 1
        %s175 = scalar_select %p174, %s19, 1
        %s176 = smul.addr %s175, 32
        %s177 = smul.addr %s176, 8
        %s178 = scalar_lea.vmem %s0, %s177
        %p179 = pneg %p40
        %p180 = pneg %p37
        %p181 = pneg %p61
        %p182 = pneg %p58
        %p183 = pneg %p82
        %p184 = pneg %p79
        %p185 = pneg %p108
        %p186 = pneg %p105
        %p187 = scmp.lt.s32.totalorder %s19, 1
        %s188 = scalar_select %p187, %s19, 1
        %s189 = smul.addr %s188, 32
        %s190 = smul.addr %s189, 8
        %s191 = scalar_lea.vmem %s3, %s190
        %p192 = pneg %p134
        %p193 = pneg %p131
        %s194 = sand.u32 %s121, 1
        %s195 = scalar_lea.sflag [#allocation4], %s194
        %s196 = sand.u32 %s121, 1
        %s197 = smul.addr %s196, 2
        %s198 = scalar_lea.vmem [#allocation3], %s197
        %p199 = scmp.lt.s32.totalorder %s19, 1
        %s200 = scalar_select %p199, %s19, 1
        %s201 = smul.addr %s200, 32
        %s202 = smul.addr %s201, 8
        %s203 = scalar_lea.vmem %s0, %s202
        %p204 = scmp.lt.s32.totalorder %s19, 1
        %s205 = scalar_select %p204, %s19, 1
        %s206 = smul.addr %s205, 32
        %s207 = smul.addr %s206, 8
        %s208 = scalar_lea.vmem %s3, %s207
        %v209 = vld [vmem:[%s203] sm:$0xff]
        %v210 = vld [vmem:[%s203 + $0x8] sm:$0xff]
        %v211 = vld [vmem:[%s203 + $0x10] sm:$0xff]
        %v212 = vld [vmem:[%s203 + $0x18] sm:$0xff]
        %v213 = vld [vmem:[%s203 + $0x20] sm:$0xff]
        %v214 = vld [vmem:[%s203 + $0x28] sm:$0xff]
        %v215 = vld [vmem:[%s203 + $0x30] sm:$0xff]
        %v216 = vld [vmem:[%s203 + $0x38] sm:$0xff]
        %v217 = vld [vmem:[%s203 + $0x40] sm:$0xff]
        %v218 = vld [vmem:[%s203 + $0x48] sm:$0xff]
        %v219 = vld [vmem:[%s203 + $0x50] sm:$0xff]
        %v220 = vld [vmem:[%s203 + $0x58] sm:$0xff]
        %v221 = vld [vmem:[%s203 + $0x60] sm:$0xff]
        %v222 = vld [vmem:[%s203 + $0x68] sm:$0xff]
        %v223 = vld [vmem:[%s203 + $0x70] sm:$0xff]
        %v224 = vld [vmem:[%s203 + $0x78] sm:$0xff]
        %v225 = vld [vmem:[%s203 + $0x80] sm:$0xff]
        %v226 = vld [vmem:[%s203 + $0x88] sm:$0xff]
        %v227 = vld [vmem:[%s203 + $0x90] sm:$0xff]
        %v228 = vld [vmem:[%s203 + $0x98] sm:$0xff]
        %v229 = vld [vmem:[%s203 + $0xa0] sm:$0xff]
        %v230 = vld [vmem:[%s203 + $0xa8] sm:$0xff]
        %v231 = vld [vmem:[%s203 + $0xb0] sm:$0xff]
        %v232 = vld [vmem:[%s203 + $0xb8] sm:$0xff]
        %v233 = vld [vmem:[%s203 + $0xc0] sm:$0xff]
        %v234 = vld [vmem:[%s203 + $0xc8] sm:$0xff]
        %v235 = vld [vmem:[%s203 + $0xd0] sm:$0xff]
        %v236 = vld [vmem:[%s203 + $0xd8] sm:$0xff]
        %v237 = vld [vmem:[%s203 + $0xe0] sm:$0xff]
        %v238 = vld [vmem:[%s203 + $0xe8] sm:$0xff]
        %v239 = vld [vmem:[%s203 + $0xf0] sm:$0xff]
        %v240 = vld [vmem:[%s203 + $0xf8] sm:$0xff]
        %vm241 = vcmask 64512
        %242 = vst.msk [vmem:[#allocation2] sm:$0xff] %vm241, 0.0
        %243 = vst.msk [vmem:[#allocation2 + $0x8] sm:$0xff] %vm241, 0.0
        %vm244 = vcmask 58368
        %245 = vst.msk [vmem:[#allocation2 + $0x10] sm:$0x3] %vm244, 0.0
        %s246 = scalar_lea.vmem [#allocation2], 408
        %247 = vst.msk [vmem:[%s246] sm:$0xff] %vm241, 0.0
        %248 = vst.msk [vmem:[%s246 + $0x8] sm:$0xff] %vm241, 0.0
        %249 = vst.msk [vmem:[%s246 + $0x10] sm:$0x3] %vm244, 0.0
        %vm250 = vcmask 57344
        %251 = vst.msk [vmem:[#allocation2] sm:$0x1] %vm250, 0.0
        %252 = vst.msk [vmem:[#allocation2 + $0x18] sm:$0x1] %vm250, 0.0
        %253 = vst.msk [vmem:[#allocation2 + $0x30] sm:$0x1] %vm250, 0.0
        %254 = vst.msk [vmem:[#allocation2 + $0x48] sm:$0x1] %vm250, 0.0
        %255 = vst.msk [vmem:[#allocation2 + $0x60] sm:$0x1] %vm250, 0.0
        %256 = vst.msk [vmem:[#allocation2 + $0x78] sm:$0x1] %vm250, 0.0
        %257 = vst.msk [vmem:[#allocation2 + $0x90] sm:$0x1] %vm250, 0.0
        %258 = vst.msk [vmem:[#allocation2 + $0xa8] sm:$0x1] %vm250, 0.0
        %259 = vst.msk [vmem:[#allocation2 + $0xc0] sm:$0x1] %vm250, 0.0
        %260 = vst.msk [vmem:[#allocation2 + $0xd8] sm:$0x1] %vm250, 0.0
        %261 = vst.msk [vmem:[#allocation2 + $0xf0] sm:$0x1] %vm250, 0.0
        %262 = vst.msk [vmem:[#allocation2 + $0x108] sm:$0x1] %vm250, 0.0
        %263 = vst.msk [vmem:[#allocation2 + $0x120] sm:$0x1] %vm250, 0.0
        %264 = vst.msk [vmem:[#allocation2 + $0x138] sm:$0x1] %vm250, 0.0
        %265 = vst.msk [vmem:[#allocation2 + $0x150] sm:$0x1] %vm250, 0.0
        %266 = vst.msk [vmem:[#allocation2 + $0x168] sm:$0x1] %vm250, 0.0
        %267 = vst.msk [vmem:[#allocation2 + $0x180] sm:$0x1] %vm250, 0.0
        %268 = vst.msk [vmem:[#allocation2 + $0x198] sm:$0x1] %vm250, 0.0
        %269 = vst.msk [vmem:[#allocation2 + $0x11] sm:$0x1] %vm250, 0.0
        %270 = vst.msk [vmem:[#allocation2 + $0x29] sm:$0x1] %vm250, 0.0
        %271 = vst.msk [vmem:[#allocation2 + $0x41] sm:$0x1] %vm250, 0.0
        %272 = vst.msk [vmem:[#allocation2 + $0x59] sm:$0x1] %vm250, 0.0
        %273 = vst.msk [vmem:[#allocation2 + $0x71] sm:$0x1] %vm250, 0.0
        %274 = vst.msk [vmem:[#allocation2 + $0x89] sm:$0x1] %vm250, 0.0
        %275 = vst.msk [vmem:[#allocation2 + $0xa1] sm:$0x1] %vm250, 0.0
        %276 = vst.msk [vmem:[#allocation2 + $0xb9] sm:$0x1] %vm250, 0.0
        %277 = vst.msk [vmem:[#allocation2 + $0xd1] sm:$0x1] %vm250, 0.0
        %278 = vst.msk [vmem:[#allocation2 + $0xe9] sm:$0x1] %vm250, 0.0
        %279 = vst.msk [vmem:[#allocation2 + $0x101] sm:$0x1] %vm250, 0.0
        %280 = vst.msk [vmem:[#allocation2 + $0x119] sm:$0x1] %vm250, 0.0
        %281 = vst.msk [vmem:[#allocation2 + $0x131] sm:$0x1] %vm250, 0.0
        %282 = vst.msk [vmem:[#allocation2 + $0x149] sm:$0x1] %vm250, 0.0
        %283 = vst.msk [vmem:[#allocation2 + $0x161] sm:$0x1] %vm250, 0.0
        %284 = vst.msk [vmem:[#allocation2 + $0x179] sm:$0x1] %vm250, 0.0
        %285 = vst.msk [vmem:[#allocation2 + $0x191] sm:$0x1] %vm250, 0.0
        %286 = vst.msk [vmem:[#allocation2 + $0x1a9] sm:$0x1] %vm250, 0.0
        %s287 = scalar_lea.vmem [#allocation2], 24
        %288 = vst.msk [vmem:[%s287 + $0x1] sm:$0xff] %vm241, %v209
        %289 = vst.msk [vmem:[%s287 + $0x9] sm:$0xff] %vm241, %v210
        %290 = vst.msk [vmem:[%s287 + $0x19] sm:$0xff] %vm241, %v211
        %291 = vst.msk [vmem:[%s287 + $0x21] sm:$0xff] %vm241, %v212
        %292 = vst.msk [vmem:[%s287 + $0x31] sm:$0xff] %vm241, %v213
        %293 = vst.msk [vmem:[%s287 + $0x39] sm:$0xff] %vm241, %v214
        %294 = vst.msk [vmem:[%s287 + $0x49] sm:$0xff] %vm241, %v215
        %295 = vst.msk [vmem:[%s287 + $0x51] sm:$0xff] %vm241, %v216
        %296 = vst.msk [vmem:[%s287 + $0x61] sm:$0xff] %vm241, %v217
        %297 = vst.msk [vmem:[%s287 + $0x69] sm:$0xff] %vm241, %v218
        %298 = vst.msk [vmem:[%s287 + $0x79] sm:$0xff] %vm241, %v219
        %299 = vst.msk [vmem:[%s287 + $0x81] sm:$0xff] %vm241, %v220
        %300 = vst.msk [vmem:[%s287 + $0x91] sm:$0xff] %vm241, %v221
        %301 = vst.msk [vmem:[%s287 + $0x99] sm:$0xff] %vm241, %v222
        %302 = vst.msk [vmem:[%s287 + $0xa9] sm:$0xff] %vm241, %v223
        %303 = vst.msk [vmem:[%s287 + $0xb1] sm:$0xff] %vm241, %v224
        %304 = vst.msk [vmem:[%s287 + $0xc1] sm:$0xff] %vm241, %v225
        %305 = vst.msk [vmem:[%s287 + $0xc9] sm:$0xff] %vm241, %v226
        %306 = vst.msk [vmem:[%s287 + $0xd9] sm:$0xff] %vm241, %v227
        %307 = vst.msk [vmem:[%s287 + $0xe1] sm:$0xff] %vm241, %v228
        %308 = vst.msk [vmem:[%s287 + $0xf1] sm:$0xff] %vm241, %v229
        %309 = vst.msk [vmem:[%s287 + $0xf9] sm:$0xff] %vm241, %v230
        %310 = vst.msk [vmem:[%s287 + $0x109] sm:$0xff] %vm241, %v231
        %311 = vst.msk [vmem:[%s287 + $0x111] sm:$0xff] %vm241, %v232
        %312 = vst.msk [vmem:[%s287 + $0x121] sm:$0xff] %vm241, %v233
        %313 = vst.msk [vmem:[%s287 + $0x129] sm:$0xff] %vm241, %v234
        %314 = vst.msk [vmem:[%s287 + $0x139] sm:$0xff] %vm241, %v235
        %315 = vst.msk [vmem:[%s287 + $0x141] sm:$0xff] %vm241, %v236
        %316 = vst.msk [vmem:[%s287 + $0x151] sm:$0xff] %vm241, %v237
        %317 = vst.msk [vmem:[%s287 + $0x159] sm:$0xff] %vm241, %v238
        %318 = vst.msk [vmem:[%s287 + $0x169] sm:$0xff] %vm241, %v239
        %319 = vst.msk [vmem:[%s287 + $0x171] sm:$0xff] %vm241, %v240
        %v320 = vld [vmem:[#allocation2] sm:$0xff]
        %v321 = vld [vmem:[#allocation2 + $0x8] sm:$0xff]
        %v322 = vld [vmem:[#allocation2 + $0x18] sm:$0xff]
        %v323 = vld [vmem:[#allocation2 + $0x20] sm:$0xff]
        %v324 = vld [vmem:[#allocation2 + $0x30] sm:$0xff]
        %v325 = vld [vmem:[#allocation2 + $0x38] sm:$0xff]
        %v326 = vld [vmem:[#allocation2 + $0x48] sm:$0xff]
        %v327 = vld [vmem:[#allocation2 + $0x50] sm:$0xff]
        %v328 = vld [vmem:[#allocation2 + $0x60] sm:$0xff]
        %v329 = vld [vmem:[#allocation2 + $0x68] sm:$0xff]
        %v330 = vld [vmem:[#allocation2 + $0x78] sm:$0xff]
        %v331 = vld [vmem:[#allocation2 + $0x80] sm:$0xff]
        %v332 = vld [vmem:[#allocation2 + $0x90] sm:$0xff]
        %v333 = vld [vmem:[#allocation2 + $0x98] sm:$0xff]
        %v334 = vld [vmem:[#allocation2 + $0xa8] sm:$0xff]
        %v335 = vld [vmem:[#allocation2 + $0xb0] sm:$0xff]
        %v336 = vld [vmem:[#allocation2 + $0xc0] sm:$0xff]
        %v337 = vld [vmem:[#allocation2 + $0xc8] sm:$0xff]
        %v338 = vld [vmem:[#allocation2 + $0xd8] sm:$0xff]
        %v339 = vld [vmem:[#allocation2 + $0xe0] sm:$0xff]
        %v340 = vld [vmem:[#allocation2 + $0xf0] sm:$0xff]
        %v341 = vld [vmem:[#allocation2 + $0xf8] sm:$0xff]
        %v342 = vld [vmem:[#allocation2 + $0x108] sm:$0xff]
        %v343 = vld [vmem:[#allocation2 + $0x110] sm:$0xff]
        %v344 = vld [vmem:[#allocation2 + $0x120] sm:$0xff]
        %v345 = vld [vmem:[#allocation2 + $0x128] sm:$0xff]
        %v346 = vld [vmem:[#allocation2 + $0x138] sm:$0xff]
        %v347 = vld [vmem:[#allocation2 + $0x140] sm:$0xff]
        %v348 = vld [vmem:[#allocation2 + $0x150] sm:$0xff]
        %v349 = vld [vmem:[#allocation2 + $0x158] sm:$0xff]
        %v350 = vld [vmem:[#allocation2 + $0x168] sm:$0xff]
        %v351 = vld [vmem:[#allocation2 + $0x170] sm:$0xff]
        %v352 = vld [vmem:[%s1] sm:$0xff]
        %v353 = vld [vmem:[#allocation2 + $0x1] sm:$0xff]
        %v354 = vld [vmem:[#allocation2 + $0x9] sm:$0xff]
        %v355 = vld [vmem:[#allocation2 + $0x19] sm:$0xff]
        %v356 = vld [vmem:[#allocation2 + $0x21] sm:$0xff]
        %v357 = vld [vmem:[#allocation2 + $0x31] sm:$0xff]
        %v358 = vld [vmem:[#allocation2 + $0x39] sm:$0xff]
        %v359 = vld [vmem:[#allocation2 + $0x49] sm:$0xff]
        %v360 = vld [vmem:[#allocation2 + $0x51] sm:$0xff]
        %v361 = vld [vmem:[#allocation2 + $0x61] sm:$0xff]
        %v362 = vld [vmem:[#allocation2 + $0x69] sm:$0xff]
        %v363 = vld [vmem:[#allocation2 + $0x79] sm:$0xff]
        %v364 = vld [vmem:[#allocation2 + $0x81] sm:$0xff]
        %v365 = vld [vmem:[#allocation2 + $0x91] sm:$0xff]
        %v366 = vld [vmem:[#allocation2 + $0x99] sm:$0xff]
        %v367 = vld [vmem:[#allocation2 + $0xa9] sm:$0xff]
        %v368 = vld [vmem:[#allocation2 + $0xb1] sm:$0xff]
        %v369 = vld [vmem:[#allocation2 + $0xc1] sm:$0xff]
        %v370 = vld [vmem:[#allocation2 + $0xc9] sm:$0xff]
        %v371 = vld [vmem:[#allocation2 + $0xd9] sm:$0xff]
        %v372 = vld [vmem:[#allocation2 + $0xe1] sm:$0xff]
        %v373 = vld [vmem:[#allocation2 + $0xf1] sm:$0xff]
        %v374 = vld [vmem:[#allocation2 + $0xf9] sm:$0xff]
        %v375 = vld [vmem:[#allocation2 + $0x109] sm:$0xff]
        %v376 = vld [vmem:[#allocation2 + $0x111] sm:$0xff]
        %v377 = vld [vmem:[#allocation2 + $0x121] sm:$0xff]
        %v378 = vld [vmem:[#allocation2 + $0x129] sm:$0xff]
        %v379 = vld [vmem:[#allocation2 + $0x139] sm:$0xff]
        %v380 = vld [vmem:[#allocation2 + $0x141] sm:$0xff]
        %v381 = vld [vmem:[#allocation2 + $0x151] sm:$0xff]
        %v382 = vld [vmem:[#allocation2 + $0x159] sm:$0xff]
        %v383 = vld [vmem:[#allocation2 + $0x169] sm:$0xff]
        %v384 = vld [vmem:[#allocation2 + $0x171] sm:$0xff]
        %s385 = scalar_lea.vmem %s1, 8
        %v386 = vld [vmem:[%s385] sm:$0xff]
        %v388 = vsel %vm241, %v353, 0
        %v391 = vsel %vm241, %v354, 0
        %v394 = vsel %vm241, %v355, 0
        %v397 = vsel %vm241, %v356, 0
        %v400 = vsel %vm241, %v357, 0
        %v403 = vsel %vm241, %v358, 0
        %v406 = vsel %vm241, %v359, 0
        %v409 = vsel %vm241, %v360, 0
        %v412 = vsel %vm241, %v361, 0
        %v415 = vsel %vm241, %v362, 0
        %v418 = vsel %vm241, %v363, 0
        %v421 = vsel %vm241, %v364, 0
        %v424 = vsel %vm241, %v365, 0
        %v427 = vsel %vm241, %v366, 0
        %v430 = vsel %vm241, %v367, 0
        %v433 = vsel %vm241, %v368, 0
        %v436 = vsel %vm241, %v369, 0
        %v439 = vsel %vm241, %v370, 0
        %v442 = vsel %vm241, %v371, 0
        %v445 = vsel %vm241, %v372, 0
        %v448 = vsel %vm241, %v373, 0
        %v451 = vsel %vm241, %v374, 0
        %v454 = vsel %vm241, %v375, 0
        %v457 = vsel %vm241, %v376, 0
        %v460 = vsel %vm241, %v377, 0
        %v463 = vsel %vm241, %v378, 0
        %v466 = vsel %vm241, %v379, 0
        %v469 = vsel %vm241, %v380, 0
        %v472 = vsel %vm241, %v381, 0
        %v475 = vsel %vm241, %v382, 0
        %v478 = vsel %vm241, %v383, 0
        %v481 = vsel %vm241, %v384, 0
        %483 = vmatprep.subr.mxu0 0.0
        %484 = vmatpush1.msra.mxu0 0.0
        %485 = vmatprep.subr.mxu0 0.0
        %486 = vmatpush1.msra.mxu0 0.0
        %487 = vmatprep.subr.mxu0 0.0
        %488 = vmatpush1.msra.mxu0 0.0
        %489 = vmatprep.subr.mxu0 0.0
        %490 = vmatpush1.msra.mxu0 0.0
        %491 = vmatprep.subr.mxu0 0.0
        %492 = vmatpush1.msra.mxu0 0.0
        %493 = vmatprep.subr.mxu0 0.0
        %494 = vmatpush1.msra.mxu0 0.0
        %495 = vmatprep.subr.mxu0 0.0
        %496 = vmatpush1.msra.mxu0 0.0
        %497 = vmatprep.subr.mxu0 0.0
        %498 = vmatpush1.msra.mxu0 0.0
        %499 = vmatprep.subr.mxu0 0.0
        %500 = vmatpush1.msra.mxu0 0.0
        %501 = vmatprep.subr.mxu0 0.0
        %502 = vmatpush1.msra.mxu0 0.0
        %503 = vmatprep.subr.mxu0 0.0
        %504 = vmatpush1.msra.mxu0 0.0
        %505 = vmatprep.subr.mxu0 0.0
        %506 = vmatpush1.msra.mxu0 0.0
        %507 = vmatprep.subr.mxu0 0.0
        %508 = vmatpush1.msra.mxu0 0.0
        %509 = vmatprep.subr.mxu0 0.0
        %510 = vmatpush1.msra.mxu0 0.0
        %511 = vmatprep.subr.mxu0 0.0
        %512 = vmatpush1.msra.mxu0 0.0
        %513 = vmatprep.subr.mxu0 0.0
        %514 = vmatpush1.msra.mxu0 %v386
        %515 = vmatprep.subr.mxu0 0.0
        %516 = vmatpush2.msra.mxu0 0.0
        %517 = vmatprep.subr.mxu0 0.0
        %518 = vmatpush2.msra.mxu0 0.0
        %519 = vmatprep.subr.mxu0 0.0
        %520 = vmatpush2.msra.mxu0 0.0
        %521 = vmatprep.subr.mxu0 0.0
        %522 = vmatpush2.msra.mxu0 0.0
        %523 = vmatprep.subr.mxu0 0.0
        %524 = vmatpush2.msra.mxu0 0.0
        %525 = vmatprep.subr.mxu0 0.0
        %526 = vmatpush2.msra.mxu0 0.0
        %527 = vmatprep.subr.mxu0 0.0
        %528 = vmatpush2.msra.mxu0 0.0
        %529 = vmatprep.subr.mxu0 0.0
        %530 = vmatpush2.msra.mxu0 0.0
        %531 = vmatprep.subr.mxu0 0.0
        %532 = vmatpush2.msra.mxu0 0.0
        %533 = vmatprep.subr.mxu0 0.0
        %534 = vmatpush2.msra.mxu0 0.0
        %535 = vmatprep.subr.mxu0 0.0
        %536 = vmatpush2.msra.mxu0 0.0
        %537 = vmatprep.subr.mxu0 0.0
        %538 = vmatpush2.msra.mxu0 0.0
        %539 = vmatprep.subr.mxu0 0.0
        %540 = vmatpush2.msra.mxu0 0.0
        %541 = vmatprep.subr.mxu0 0.0
        %542 = vmatpush2.msra.mxu0 0.0
        %543 = vmatprep.subr.mxu0 0.0
        %544 = vmatpush2.msra.mxu0 0.0
        %545 = vmatprep.subr.mxu0 0.0
        %546 = vmatpush2.msra.mxu0 0.0
        %547 = vmatprep.mubr.f32.mxu0 0.0
        %548 = vmatmul.mubr.f32.gmra.mxu0 %v388
        %v549 = vpop.f32.mrf.mxu0
        %v550 = vadd.f32 0.0, %v549
        %v551 = vpop.f32.mrf.mxu0
        %552 = vmatprep.mubr.f32.mxu0 0.0
        %553 = vmatmul.mubr.f32.gmra.mxu0 %v391
        %v554 = vpop.f32.mrf.mxu0
        %v555 = vadd.f32 0.0, %v554
        %v556 = vpop.f32.mrf.mxu0
        %557 = vmatprep.mubr.f32.mxu0 0.0
        %558 = vmatmul.mubr.f32.gmra.mxu0 %v394
        %v559 = vpop.f32.mrf.mxu0
        %v560 = vadd.f32 0.0, %v559
        %v561 = vpop.f32.mrf.mxu0
        %562 = vmatprep.mubr.f32.mxu0 0.0
        %563 = vmatmul.mubr.f32.gmra.mxu0 %v397
        %v564 = vpop.f32.mrf.mxu0
        %v565 = vadd.f32 0.0, %v564
        %v566 = vpop.f32.mrf.mxu0
        %567 = vmatprep.mubr.f32.mxu0 0.0
        %568 = vmatmul.mubr.f32.gmra.mxu0 %v400
        %v569 = vpop.f32.mrf.mxu0
        %v570 = vadd.f32 0.0, %v569
        %v571 = vpop.f32.mrf.mxu0
        %572 = vmatprep.mubr.f32.mxu0 0.0
        %573 = vmatmul.mubr.f32.gmra.mxu0 %v403
        %v574 = vpop.f32.mrf.mxu0
        %v575 = vadd.f32 0.0, %v574
        %v576 = vpop.f32.mrf.mxu0
        %577 = vmatprep.mubr.f32.mxu0 0.0
        %578 = vmatmul.mubr.f32.gmra.mxu0 %v406
        %v579 = vpop.f32.mrf.mxu0
        %v580 = vadd.f32 0.0, %v579
        %v581 = vpop.f32.mrf.mxu0
        %582 = vmatprep.mubr.f32.mxu0 0.0
        %583 = vmatmul.mubr.f32.gmra.mxu0 %v409
        %v584 = vpop.f32.mrf.mxu0
        %v585 = vadd.f32 0.0, %v584
        %v586 = vpop.f32.mrf.mxu0
        %587 = vmatprep.mubr.f32.mxu0 0.0
        %588 = vmatmul.mubr.f32.gmra.mxu0 %v412
        %v589 = vpop.f32.mrf.mxu0
        %v590 = vadd.f32 0.0, %v589
        %v591 = vpop.f32.mrf.mxu0
        %592 = vmatprep.mubr.f32.mxu0 0.0
        %593 = vmatmul.mubr.f32.gmra.mxu0 %v415
        %v594 = vpop.f32.mrf.mxu0
        %v595 = vadd.f32 0.0, %v594
        %v596 = vpop.f32.mrf.mxu0
        %597 = vmatprep.mubr.f32.mxu0 0.0
        %598 = vmatmul.mubr.f32.gmra.mxu0 %v418
        %v599 = vpop.f32.mrf.mxu0
        %v600 = vadd.f32 0.0, %v599
        %v601 = vpop.f32.mrf.mxu0
        %602 = vmatprep.mubr.f32.mxu0 0.0
        %603 = vmatmul.mubr.f32.gmra.mxu0 %v421
        %v604 = vpop.f32.mrf.mxu0
        %v605 = vadd.f32 0.0, %v604
        %v606 = vpop.f32.mrf.mxu0
        %607 = vmatprep.mubr.f32.mxu0 0.0
        %608 = vmatmul.mubr.f32.gmra.mxu0 %v424
        %v609 = vpop.f32.mrf.mxu0
        %v610 = vadd.f32 0.0, %v609
        %v611 = vpop.f32.mrf.mxu0
        %612 = vmatprep.mubr.f32.mxu0 0.0
        %613 = vmatmul.mubr.f32.gmra.mxu0 %v427
        %v614 = vpop.f32.mrf.mxu0
        %v615 = vadd.f32 0.0, %v614
        %v616 = vpop.f32.mrf.mxu0
        %617 = vmatprep.mubr.f32.mxu0 0.0
        %618 = vmatmul.mubr.f32.gmra.mxu0 %v430
        %v619 = vpop.f32.mrf.mxu0
        %v620 = vadd.f32 0.0, %v619
        %v621 = vpop.f32.mrf.mxu0
        %622 = vmatprep.mubr.f32.mxu0 0.0
        %623 = vmatmul.mubr.f32.gmra.mxu0 %v433
        %v624 = vpop.f32.mrf.mxu0
        %v625 = vadd.f32 0.0, %v624
        %v626 = vpop.f32.mrf.mxu0
        %627 = vmatprep.mubr.f32.mxu0 0.0
        %628 = vmatmul.mubr.f32.gmra.mxu0 %v436
        %v629 = vpop.f32.mrf.mxu0
        %v630 = vadd.f32 0.0, %v629
        %v631 = vpop.f32.mrf.mxu0
        %632 = vmatprep.mubr.f32.mxu0 0.0
        %633 = vmatmul.mubr.f32.gmra.mxu0 %v439
        %v634 = vpop.f32.mrf.mxu0
        %v635 = vadd.f32 0.0, %v634
        %v636 = vpop.f32.mrf.mxu0
        %637 = vmatprep.mubr.f32.mxu0 0.0
        %638 = vmatmul.mubr.f32.gmra.mxu0 %v442
        %v639 = vpop.f32.mrf.mxu0
        %v640 = vadd.f32 0.0, %v639
        %v641 = vpop.f32.mrf.mxu0
        %642 = vmatprep.mubr.f32.mxu0 0.0
        %643 = vmatmul.mubr.f32.gmra.mxu0 %v445
        %v644 = vpop.f32.mrf.mxu0
        %v645 = vadd.f32 0.0, %v644
        %v646 = vpop.f32.mrf.mxu0
        %647 = vmatprep.mubr.f32.mxu0 0.0
        %648 = vmatmul.mubr.f32.gmra.mxu0 %v448
        %v649 = vpop.f32.mrf.mxu0
        %v650 = vadd.f32 0.0, %v649
        %v651 = vpop.f32.mrf.mxu0
        %652 = vmatprep.mubr.f32.mxu0 0.0
        %653 = vmatmul.mubr.f32.gmra.mxu0 %v451
        %v654 = vpop.f32.mrf.mxu0
        %v655 = vadd.f32 0.0, %v654
        %v656 = vpop.f32.mrf.mxu0
        %657 = vmatprep.mubr.f32.mxu0 0.0
        %658 = vmatmul.mubr.f32.gmra.mxu0 %v454
        %v659 = vpop.f32.mrf.mxu0
        %v660 = vadd.f32 0.0, %v659
        %v661 = vpop.f32.mrf.mxu0
        %662 = vmatprep.mubr.f32.mxu0 0.0
        %663 = vmatmul.mubr.f32.gmra.mxu0 %v457
        %v664 = vpop.f32.mrf.mxu0
        %v665 = vadd.f32 0.0, %v664
        %v666 = vpop.f32.mrf.mxu0
        %667 = vmatprep.mubr.f32.mxu0 0.0
        %668 = vmatmul.mubr.f32.gmra.mxu0 %v460
        %v669 = vpop.f32.mrf.mxu0
        %v670 = vadd.f32 0.0, %v669
        %v671 = vpop.f32.mrf.mxu0
        %672 = vmatprep.mubr.f32.mxu0 0.0
        %673 = vmatmul.mubr.f32.gmra.mxu0 %v463
        %v674 = vpop.f32.mrf.mxu0
        %v675 = vadd.f32 0.0, %v674
        %v676 = vpop.f32.mrf.mxu0
        %677 = vmatprep.mubr.f32.mxu0 0.0
        %678 = vmatmul.mubr.f32.gmra.mxu0 %v466
        %v679 = vpop.f32.mrf.mxu0
        %v680 = vadd.f32 0.0, %v679
        %v681 = vpop.f32.mrf.mxu0
        %682 = vmatprep.mubr.f32.mxu0 0.0
        %683 = vmatmul.mubr.f32.gmra.mxu0 %v469
        %v684 = vpop.f32.mrf.mxu0
        %v685 = vadd.f32 0.0, %v684
        %v686 = vpop.f32.mrf.mxu0
        %687 = vmatprep.mubr.f32.mxu0 0.0
        %688 = vmatmul.mubr.f32.gmra.mxu0 %v472
        %v689 = vpop.f32.mrf.mxu0
        %v690 = vadd.f32 0.0, %v689
        %v691 = vpop.f32.mrf.mxu0
        %692 = vmatprep.mubr.f32.mxu0 0.0
        %693 = vmatmul.mubr.f32.gmra.mxu0 %v475
        %v694 = vpop.f32.mrf.mxu0
        %v695 = vadd.f32 0.0, %v694
        %v696 = vpop.f32.mrf.mxu0
        %697 = vmatprep.mubr.f32.mxu0 0.0
        %698 = vmatmul.mubr.f32.gmra.mxu0 %v478
        %v699 = vpop.f32.mrf.mxu0
        %v700 = vadd.f32 0.0, %v699
        %v701 = vpop.f32.mrf.mxu0
        %702 = vmatprep.mubr.f32.mxu0 0.0
        %703 = vmatmul.mubr.f32.gmra.mxu0 %v481
        %v704 = vpop.f32.mrf.mxu0
        %v705 = vadd.f32 0.0, %v704
        %v706 = vpop.f32.mrf.mxu0
        %707 = vdwg.mxu0
        %v709 = vsel %vm241, %v320, 0
        %v712 = vsel %vm241, %v321, 0
        %v715 = vsel %vm241, %v322, 0
        %v718 = vsel %vm241, %v323, 0
        %v721 = vsel %vm241, %v324, 0
        %v724 = vsel %vm241, %v325, 0
        %v727 = vsel %vm241, %v326, 0
        %v730 = vsel %vm241, %v327, 0
        %v733 = vsel %vm241, %v328, 0
        %v736 = vsel %vm241, %v329, 0
        %v739 = vsel %vm241, %v330, 0
        %v742 = vsel %vm241, %v331, 0
        %v745 = vsel %vm241, %v332, 0
        %v748 = vsel %vm241, %v333, 0
        %v751 = vsel %vm241, %v334, 0
        %v754 = vsel %vm241, %v335, 0
        %v757 = vsel %vm241, %v336, 0
        %v760 = vsel %vm241, %v337, 0
        %v763 = vsel %vm241, %v338, 0
        %v766 = vsel %vm241, %v339, 0
        %v769 = vsel %vm241, %v340, 0
        %v772 = vsel %vm241, %v341, 0
        %v775 = vsel %vm241, %v342, 0
        %v778 = vsel %vm241, %v343, 0
        %v781 = vsel %vm241, %v344, 0
        %v784 = vsel %vm241, %v345, 0
        %v787 = vsel %vm241, %v346, 0
        %v790 = vsel %vm241, %v347, 0
        %v793 = vsel %vm241, %v348, 0
        %v796 = vsel %vm241, %v349, 0
        %v799 = vsel %vm241, %v350, 0
        %v802 = vsel %vm241, %v351, 0
        %804 = vmatprep.subr.mxu0 0.0
        %805 = vmatpush1.msra.mxu0 0.0
        %806 = vmatprep.subr.mxu0 0.0
        %807 = vmatpush1.msra.mxu0 0.0
        %808 = vmatprep.subr.mxu0 0.0
        %809 = vmatpush1.msra.mxu0 0.0
        %810 = vmatprep.subr.mxu0 0.0
        %811 = vmatpush1.msra.mxu0 0.0
        %812 = vmatprep.subr.mxu0 0.0
        %813 = vmatpush1.msra.mxu0 0.0
        %814 = vmatprep.subr.mxu0 0.0
        %815 = vmatpush1.msra.mxu0 0.0
        %816 = vmatprep.subr.mxu0 0.0
        %817 = vmatpush1.msra.mxu0 0.0
        %818 = vmatprep.subr.mxu0 0.0
        %819 = vmatpush1.msra.mxu0 0.0
        %820 = vmatprep.subr.mxu0 0.0
        %821 = vmatpush1.msra.mxu0 0.0
        %822 = vmatprep.subr.mxu0 0.0
        %823 = vmatpush1.msra.mxu0 0.0
        %824 = vmatprep.subr.mxu0 0.0
        %825 = vmatpush1.msra.mxu0 0.0
        %826 = vmatprep.subr.mxu0 0.0
        %827 = vmatpush1.msra.mxu0 0.0
        %828 = vmatprep.subr.mxu0 0.0
        %829 = vmatpush1.msra.mxu0 0.0
        %830 = vmatprep.subr.mxu0 0.0
        %831 = vmatpush1.msra.mxu0 0.0
        %832 = vmatprep.subr.mxu0 0.0
        %833 = vmatpush1.msra.mxu0 0.0
        %834 = vmatprep.subr.mxu0 0.0
        %835 = vmatpush1.msra.mxu0 %v352
        %836 = vmatprep.subr.mxu0 0.0
        %837 = vmatpush2.msra.mxu0 0.0
        %838 = vmatprep.subr.mxu0 0.0
        %839 = vmatpush2.msra.mxu0 0.0
        %840 = vmatprep.subr.mxu0 0.0
        %841 = vmatpush2.msra.mxu0 0.0
        %842 = vmatprep.subr.mxu0 0.0
        %843 = vmatpush2.msra.mxu0 0.0
        %844 = vmatprep.subr.mxu0 0.0
        %845 = vmatpush2.msra.mxu0 0.0
        %846 = vmatprep.subr.mxu0 0.0
        %847 = vmatpush2.msra.mxu0 0.0
        %848 = vmatprep.subr.mxu0 0.0
        %849 = vmatpush2.msra.mxu0 0.0
        %850 = vmatprep.subr.mxu0 0.0
        %851 = vmatpush2.msra.mxu0 0.0
        %852 = vmatprep.subr.mxu0 0.0
        %853 = vmatpush2.msra.mxu0 0.0
        %854 = vmatprep.subr.mxu0 0.0
        %855 = vmatpush2.msra.mxu0 0.0
        %856 = vmatprep.subr.mxu0 0.0
        %857 = vmatpush2.msra.mxu0 0.0
        %858 = vmatprep.subr.mxu0 0.0
        %859 = vmatpush2.msra.mxu0 0.0
        %860 = vmatprep.subr.mxu0 0.0
        %861 = vmatpush2.msra.mxu0 0.0
        %862 = vmatprep.subr.mxu0 0.0
        %863 = vmatpush2.msra.mxu0 0.0
        %864 = vmatprep.subr.mxu0 0.0
        %865 = vmatpush2.msra.mxu0 0.0
        %866 = vmatprep.subr.mxu0 0.0
        %867 = vmatpush2.msra.mxu0 0.0
        %868 = vmatprep.mubr.f32.mxu0 0.0
        %869 = vmatmul.mubr.f32.gmra.mxu0 %v709
        %v870 = vpop.f32.mrf.mxu0
        %v871 = vadd.f32 %v550, %v870
        %v872 = vpop.f32.mrf.mxu0
        %873 = vmatprep.mubr.f32.mxu0 0.0
        %874 = vmatmul.mubr.f32.gmra.mxu0 %v712
        %v875 = vpop.f32.mrf.mxu0
        %v876 = vadd.f32 %v555, %v875
        %v877 = vpop.f32.mrf.mxu0
        %878 = vmatprep.mubr.f32.mxu0 0.0
        %879 = vmatmul.mubr.f32.gmra.mxu0 %v715
        %v880 = vpop.f32.mrf.mxu0
        %v881 = vadd.f32 %v560, %v880
        %v882 = vpop.f32.mrf.mxu0
        %883 = vmatprep.mubr.f32.mxu0 0.0
        %884 = vmatmul.mubr.f32.gmra.mxu0 %v718
        %v885 = vpop.f32.mrf.mxu0
        %v886 = vadd.f32 %v565, %v885
        %v887 = vpop.f32.mrf.mxu0
        %888 = vmatprep.mubr.f32.mxu0 0.0
        %889 = vmatmul.mubr.f32.gmra.mxu0 %v721
        %v890 = vpop.f32.mrf.mxu0
        %v891 = vadd.f32 %v570, %v890
        %v892 = vpop.f32.mrf.mxu0
        %893 = vmatprep.mubr.f32.mxu0 0.0
        %894 = vmatmul.mubr.f32.gmra.mxu0 %v724
        %v895 = vpop.f32.mrf.mxu0
        %v896 = vadd.f32 %v575, %v895
        %v897 = vpop.f32.mrf.mxu0
        %898 = vmatprep.mubr.f32.mxu0 0.0
        %899 = vmatmul.mubr.f32.gmra.mxu0 %v727
        %v900 = vpop.f32.mrf.mxu0
        %v901 = vadd.f32 %v580, %v900
        %v902 = vpop.f32.mrf.mxu0
        %903 = vmatprep.mubr.f32.mxu0 0.0
        %904 = vmatmul.mubr.f32.gmra.mxu0 %v730
        %v905 = vpop.f32.mrf.mxu0
        %v906 = vadd.f32 %v585, %v905
        %v907 = vpop.f32.mrf.mxu0
        %908 = vmatprep.mubr.f32.mxu0 0.0
        %909 = vmatmul.mubr.f32.gmra.mxu0 %v733
        %v910 = vpop.f32.mrf.mxu0
        %v911 = vadd.f32 %v590, %v910
        %v912 = vpop.f32.mrf.mxu0
        %913 = vmatprep.mubr.f32.mxu0 0.0
        %914 = vmatmul.mubr.f32.gmra.mxu0 %v736
        %v915 = vpop.f32.mrf.mxu0
        %v916 = vadd.f32 %v595, %v915
        %v917 = vpop.f32.mrf.mxu0
        %918 = vmatprep.mubr.f32.mxu0 0.0
        %919 = vmatmul.mubr.f32.gmra.mxu0 %v739
        %v920 = vpop.f32.mrf.mxu0
        %v921 = vadd.f32 %v600, %v920
        %v922 = vpop.f32.mrf.mxu0
        %923 = vmatprep.mubr.f32.mxu0 0.0
        %924 = vmatmul.mubr.f32.gmra.mxu0 %v742
        %v925 = vpop.f32.mrf.mxu0
        %v926 = vadd.f32 %v605, %v925
        %v927 = vpop.f32.mrf.mxu0
        %928 = vmatprep.mubr.f32.mxu0 0.0
        %929 = vmatmul.mubr.f32.gmra.mxu0 %v745
        %v930 = vpop.f32.mrf.mxu0
        %v931 = vadd.f32 %v610, %v930
        %v932 = vpop.f32.mrf.mxu0
        %933 = vmatprep.mubr.f32.mxu0 0.0
        %934 = vmatmul.mubr.f32.gmra.mxu0 %v748
        %v935 = vpop.f32.mrf.mxu0
        %v936 = vadd.f32 %v615, %v935
        %v937 = vpop.f32.mrf.mxu0
        %938 = vmatprep.mubr.f32.mxu0 0.0
        %939 = vmatmul.mubr.f32.gmra.mxu0 %v751
        %v940 = vpop.f32.mrf.mxu0
        %v941 = vadd.f32 %v620, %v940
        %v942 = vpop.f32.mrf.mxu0
        %943 = vmatprep.mubr.f32.mxu0 0.0
        %944 = vmatmul.mubr.f32.gmra.mxu0 %v754
        %v945 = vpop.f32.mrf.mxu0
        %v946 = vadd.f32 %v625, %v945
        %v947 = vpop.f32.mrf.mxu0
        %948 = vmatprep.mubr.f32.mxu0 0.0
        %949 = vmatmul.mubr.f32.gmra.mxu0 %v757
        %v950 = vpop.f32.mrf.mxu0
        %v951 = vadd.f32 %v630, %v950
        %v952 = vpop.f32.mrf.mxu0
        %953 = vmatprep.mubr.f32.mxu0 0.0
        %954 = vmatmul.mubr.f32.gmra.mxu0 %v760
        %v955 = vpop.f32.mrf.mxu0
        %v956 = vadd.f32 %v635, %v955
        %v957 = vpop.f32.mrf.mxu0
        %958 = vmatprep.mubr.f32.mxu0 0.0
        %959 = vmatmul.mubr.f32.gmra.mxu0 %v763
        %v960 = vpop.f32.mrf.mxu0
        %v961 = vadd.f32 %v640, %v960
        %v962 = vpop.f32.mrf.mxu0
        %963 = vmatprep.mubr.f32.mxu0 0.0
        %964 = vmatmul.mubr.f32.gmra.mxu0 %v766
        %v965 = vpop.f32.mrf.mxu0
        %v966 = vadd.f32 %v645, %v965
        %v967 = vpop.f32.mrf.mxu0
        %968 = vmatprep.mubr.f32.mxu0 0.0
        %969 = vmatmul.mubr.f32.gmra.mxu0 %v769
        %v970 = vpop.f32.mrf.mxu0
        %v971 = vadd.f32 %v650, %v970
        %v972 = vpop.f32.mrf.mxu0
        %973 = vmatprep.mubr.f32.mxu0 0.0
        %974 = vmatmul.mubr.f32.gmra.mxu0 %v772
        %v975 = vpop.f32.mrf.mxu0
        %v976 = vadd.f32 %v655, %v975
        %v977 = vpop.f32.mrf.mxu0
        %978 = vmatprep.mubr.f32.mxu0 0.0
        %979 = vmatmul.mubr.f32.gmra.mxu0 %v775
        %v980 = vpop.f32.mrf.mxu0
        %v981 = vadd.f32 %v660, %v980
        %v982 = vpop.f32.mrf.mxu0
        %983 = vmatprep.mubr.f32.mxu0 0.0
        %984 = vmatmul.mubr.f32.gmra.mxu0 %v778
        %v985 = vpop.f32.mrf.mxu0
        %v986 = vadd.f32 %v665, %v985
        %v987 = vpop.f32.mrf.mxu0
        %988 = vmatprep.mubr.f32.mxu0 0.0
        %989 = vmatmul.mubr.f32.gmra.mxu0 %v781
        %v990 = vpop.f32.mrf.mxu0
        %v991 = vadd.f32 %v670, %v990
        %v992 = vpop.f32.mrf.mxu0
        %993 = vmatprep.mubr.f32.mxu0 0.0
        %994 = vmatmul.mubr.f32.gmra.mxu0 %v784
        %v995 = vpop.f32.mrf.mxu0
        %v996 = vadd.f32 %v675, %v995
        %v997 = vpop.f32.mrf.mxu0
        %998 = vmatprep.mubr.f32.mxu0 0.0
        %999 = vmatmul.mubr.f32.gmra.mxu0 %v787
        %v1000 = vpop.f32.mrf.mxu0
        %v1001 = vadd.f32 %v680, %v1000
        %v1002 = vpop.f32.mrf.mxu0
        %1003 = vmatprep.mubr.f32.mxu0 0.0
        %1004 = vmatmul.mubr.f32.gmra.mxu0 %v790
        %v1005 = vpop.f32.mrf.mxu0
        %v1006 = vadd.f32 %v685, %v1005
        %v1007 = vpop.f32.mrf.mxu0
        %1008 = vmatprep.mubr.f32.mxu0 0.0
        %1009 = vmatmul.mubr.f32.gmra.mxu0 %v793
        %v1010 = vpop.f32.mrf.mxu0
        %v1011 = vadd.f32 %v690, %v1010
        %v1012 = vpop.f32.mrf.mxu0
        %1013 = vmatprep.mubr.f32.mxu0 0.0
        %1014 = vmatmul.mubr.f32.gmra.mxu0 %v796
        %v1015 = vpop.f32.mrf.mxu0
        %v1016 = vadd.f32 %v695, %v1015
        %v1017 = vpop.f32.mrf.mxu0
        %1018 = vmatprep.mubr.f32.mxu0 0.0
        %1019 = vmatmul.mubr.f32.gmra.mxu0 %v799
        %v1020 = vpop.f32.mrf.mxu0
        %v1021 = vadd.f32 %v700, %v1020
        %v1022 = vpop.f32.mrf.mxu0
        %1023 = vmatprep.mubr.f32.mxu0 0.0
        %1024 = vmatmul.mubr.f32.gmra.mxu0 %v802
        %v1025 = vpop.f32.mrf.mxu0
        %v1026 = vadd.f32 %v705, %v1025
        %v1027 = vpop.f32.mrf.mxu0
        %1028 = vdwg.mxu0
        %v1029 = vld [vmem:[#allocation2 + $0x2] sm:$0xff]
        %v1030 = vld [vmem:[#allocation2 + $0xa] sm:$0xff]
        %v1031 = vld [vmem:[#allocation2 + $0x1a] sm:$0xff]
        %v1032 = vld [vmem:[#allocation2 + $0x22] sm:$0xff]
        %v1033 = vld [vmem:[#allocation2 + $0x32] sm:$0xff]
        %v1034 = vld [vmem:[#allocation2 + $0x3a] sm:$0xff]
        %v1035 = vld [vmem:[#allocation2 + $0x4a] sm:$0xff]
        %v1036 = vld [vmem:[#allocation2 + $0x52] sm:$0xff]
        %v1037 = vld [vmem:[#allocation2 + $0x62] sm:$0xff]
        %v1038 = vld [vmem:[#allocation2 + $0x6a] sm:$0xff]
        %v1039 = vld [vmem:[#allocation2 + $0x7a] sm:$0xff]
        %v1040 = vld [vmem:[#allocation2 + $0x82] sm:$0xff]
        %v1041 = vld [vmem:[#allocation2 + $0x92] sm:$0xff]
        %v1042 = vld [vmem:[#allocation2 + $0x9a] sm:$0xff]
        %v1043 = vld [vmem:[#allocation2 + $0xaa] sm:$0xff]
        %v1044 = vld [vmem:[#allocation2 + $0xb2] sm:$0xff]
        %v1045 = vld [vmem:[#allocation2 + $0xc2] sm:$0xff]
        %v1046 = vld [vmem:[#allocation2 + $0xca] sm:$0xff]
        %v1047 = vld [vmem:[#allocation2 + $0xda] sm:$0xff]
        %v1048 = vld [vmem:[#allocation2 + $0xe2] sm:$0xff]
        %v1049 = vld [vmem:[#allocation2 + $0xf2] sm:$0xff]
        %v1050 = vld [vmem:[#allocation2 + $0xfa] sm:$0xff]
        %v1051 = vld [vmem:[#allocation2 + $0x10a] sm:$0xff]
        %v1052 = vld [vmem:[#allocation2 + $0x112] sm:$0xff]
        %v1053 = vld [vmem:[#allocation2 + $0x122] sm:$0xff]
        %v1054 = vld [vmem:[#allocation2 + $0x12a] sm:$0xff]
        %v1055 = vld [vmem:[#allocation2 + $0x13a] sm:$0xff]
        %v1056 = vld [vmem:[#allocation2 + $0x142] sm:$0xff]
        %v1057 = vld [vmem:[#allocation2 + $0x152] sm:$0xff]
        %v1058 = vld [vmem:[#allocation2 + $0x15a] sm:$0xff]
        %v1059 = vld [vmem:[#allocation2 + $0x16a] sm:$0xff]
        %v1060 = vld [vmem:[#allocation2 + $0x172] sm:$0xff]
        %s1061 = scalar_lea.vmem %s1, 16
        %v1062 = vld [vmem:[%s1061] sm:$0xff]
        %v1064 = vsel %vm241, %v1029, 0
        %v1067 = vsel %vm241, %v1030, 0
        %v1070 = vsel %vm241, %v1031, 0
        %v1073 = vsel %vm241, %v1032, 0
        %v1076 = vsel %vm241, %v1033, 0
        %v1079 = vsel %vm241, %v1034, 0
        %v1082 = vsel %vm241, %v1035, 0
        %v1085 = vsel %vm241, %v1036, 0
        %v1088 = vsel %vm241, %v1037, 0
        %v1091 = vsel %vm241, %v1038, 0
        %v1094 = vsel %vm241, %v1039, 0
        %v1097 = vsel %vm241, %v1040, 0
        %v1100 = vsel %vm241, %v1041, 0
        %v1103 = vsel %vm241, %v1042, 0
        %v1106 = vsel %vm241, %v1043, 0
        %v1109 = vsel %vm241, %v1044, 0
        %v1112 = vsel %vm241, %v1045, 0
        %v1115 = vsel %vm241, %v1046, 0
        %v1118 = vsel %vm241, %v1047, 0
        %v1121 = vsel %vm241, %v1048, 0
        %v1124 = vsel %vm241, %v1049, 0
        %v1127 = vsel %vm241, %v1050, 0
        %v1130 = vsel %vm241, %v1051, 0
        %v1133 = vsel %vm241, %v1052, 0
        %v1136 = vsel %vm241, %v1053, 0
        %v1139 = vsel %vm241, %v1054, 0
        %v1142 = vsel %vm241, %v1055, 0
        %v1145 = vsel %vm241, %v1056, 0
        %v1148 = vsel %vm241, %v1057, 0
        %v1151 = vsel %vm241, %v1058, 0
        %v1154 = vsel %vm241, %v1059, 0
        %v1157 = vsel %vm241, %v1060, 0
        %1159 = vmatprep.subr.mxu0 0.0
        %1160 = vmatpush1.msra.mxu0 0.0
        %1161 = vmatprep.subr.mxu0 0.0
        %1162 = vmatpush1.msra.mxu0 0.0
        %1163 = vmatprep.subr.mxu0 0.0
        %1164 = vmatpush1.msra.mxu0 0.0
        %1165 = vmatprep.subr.mxu0 0.0
        %1166 = vmatpush1.msra.mxu0 0.0
        %1167 = vmatprep.subr.mxu0 0.0
        %1168 = vmatpush1.msra.mxu0 0.0
        %1169 = vmatprep.subr.mxu0 0.0
        %1170 = vmatpush1.msra.mxu0 0.0
        %1171 = vmatprep.subr.mxu0 0.0
        %1172 = vmatpush1.msra.mxu0 0.0
        %1173 = vmatprep.subr.mxu0 0.0
        %1174 = vmatpush1.msra.mxu0 0.0
        %1175 = vmatprep.subr.mxu0 0.0
        %1176 = vmatpush1.msra.mxu0 0.0
        %1177 = vmatprep.subr.mxu0 0.0
        %1178 = vmatpush1.msra.mxu0 0.0
        %1179 = vmatprep.subr.mxu0 0.0
        %1180 = vmatpush1.msra.mxu0 0.0
        %1181 = vmatprep.subr.mxu0 0.0
        %1182 = vmatpush1.msra.mxu0 0.0
        %1183 = vmatprep.subr.mxu0 0.0
        %1184 = vmatpush1.msra.mxu0 0.0
        %1185 = vmatprep.subr.mxu0 0.0
        %1186 = vmatpush1.msra.mxu0 0.0
        %1187 = vmatprep.subr.mxu0 0.0
        %1188 = vmatpush1.msra.mxu0 0.0
        %1189 = vmatprep.subr.mxu0 0.0
        %1190 = vmatpush1.msra.mxu0 %v1062
        %1191 = vmatprep.subr.mxu0 0.0
        %1192 = vmatpush2.msra.mxu0 0.0
        %1193 = vmatprep.subr.mxu0 0.0
        %1194 = vmatpush2.msra.mxu0 0.0
        %1195 = vmatprep.subr.mxu0 0.0
        %1196 = vmatpush2.msra.mxu0 0.0
        %1197 = vmatprep.subr.mxu0 0.0
        %1198 = vmatpush2.msra.mxu0 0.0
        %1199 = vmatprep.subr.mxu0 0.0
        %1200 = vmatpush2.msra.mxu0 0.0
        %1201 = vmatprep.subr.mxu0 0.0
        %1202 = vmatpush2.msra.mxu0 0.0
        %1203 = vmatprep.subr.mxu0 0.0
        %1204 = vmatpush2.msra.mxu0 0.0
        %1205 = vmatprep.subr.mxu0 0.0
        %1206 = vmatpush2.msra.mxu0 0.0
        %1207 = vmatprep.subr.mxu0 0.0
        %1208 = vmatpush2.msra.mxu0 0.0
        %1209 = vmatprep.subr.mxu0 0.0
        %1210 = vmatpush2.msra.mxu0 0.0
        %1211 = vmatprep.subr.mxu0 0.0
        %1212 = vmatpush2.msra.mxu0 0.0
        %1213 = vmatprep.subr.mxu0 0.0
        %1214 = vmatpush2.msra.mxu0 0.0
        %1215 = vmatprep.subr.mxu0 0.0
        %1216 = vmatpush2.msra.mxu0 0.0
        %1217 = vmatprep.subr.mxu0 0.0
        %1218 = vmatpush2.msra.mxu0 0.0
        %1219 = vmatprep.subr.mxu0 0.0
        %1220 = vmatpush2.msra.mxu0 0.0
        %1221 = vmatprep.subr.mxu0 0.0
        %1222 = vmatpush2.msra.mxu0 0.0
        %1223 = vmatprep.mubr.f32.mxu0 0.0
        %1224 = vmatmul.mubr.f32.gmra.mxu0 %v1064
        %v1225 = vpop.f32.mrf.mxu0
        %v1226 = vadd.f32 0.0, %v1225
        %v1227 = vpop.f32.mrf.mxu0
        %1228 = vmatprep.mubr.f32.mxu0 0.0
        %1229 = vmatmul.mubr.f32.gmra.mxu0 %v1067
        %v1230 = vpop.f32.mrf.mxu0
        %v1231 = vadd.f32 0.0, %v1230
        %v1232 = vpop.f32.mrf.mxu0
        %1233 = vmatprep.mubr.f32.mxu0 0.0
        %1234 = vmatmul.mubr.f32.gmra.mxu0 %v1070
        %v1235 = vpop.f32.mrf.mxu0
        %v1236 = vadd.f32 0.0, %v1235
        %v1237 = vpop.f32.mrf.mxu0
        %1238 = vmatprep.mubr.f32.mxu0 0.0
        %1239 = vmatmul.mubr.f32.gmra.mxu0 %v1073
        %v1240 = vpop.f32.mrf.mxu0
        %v1241 = vadd.f32 0.0, %v1240
        %v1242 = vpop.f32.mrf.mxu0
        %1243 = vmatprep.mubr.f32.mxu0 0.0
        %1244 = vmatmul.mubr.f32.gmra.mxu0 %v1076
        %v1245 = vpop.f32.mrf.mxu0
        %v1246 = vadd.f32 0.0, %v1245
        %v1247 = vpop.f32.mrf.mxu0
        %1248 = vmatprep.mubr.f32.mxu0 0.0
        %1249 = vmatmul.mubr.f32.gmra.mxu0 %v1079
        %v1250 = vpop.f32.mrf.mxu0
        %v1251 = vadd.f32 0.0, %v1250
        %v1252 = vpop.f32.mrf.mxu0
        %1253 = vmatprep.mubr.f32.mxu0 0.0
        %1254 = vmatmul.mubr.f32.gmra.mxu0 %v1082
        %v1255 = vpop.f32.mrf.mxu0
        %v1256 = vadd.f32 0.0, %v1255
        %v1257 = vpop.f32.mrf.mxu0
        %1258 = vmatprep.mubr.f32.mxu0 0.0
        %1259 = vmatmul.mubr.f32.gmra.mxu0 %v1085
        %v1260 = vpop.f32.mrf.mxu0
        %v1261 = vadd.f32 0.0, %v1260
        %v1262 = vpop.f32.mrf.mxu0
        %1263 = vmatprep.mubr.f32.mxu0 0.0
        %1264 = vmatmul.mubr.f32.gmra.mxu0 %v1088
        %v1265 = vpop.f32.mrf.mxu0
        %v1266 = vadd.f32 0.0, %v1265
        %v1267 = vpop.f32.mrf.mxu0
        %1268 = vmatprep.mubr.f32.mxu0 0.0
        %1269 = vmatmul.mubr.f32.gmra.mxu0 %v1091
        %v1270 = vpop.f32.mrf.mxu0
        %v1271 = vadd.f32 0.0, %v1270
        %v1272 = vpop.f32.mrf.mxu0
        %1273 = vmatprep.mubr.f32.mxu0 0.0
        %1274 = vmatmul.mubr.f32.gmra.mxu0 %v1094
        %v1275 = vpop.f32.mrf.mxu0
        %v1276 = vadd.f32 0.0, %v1275
        %v1277 = vpop.f32.mrf.mxu0
        %1278 = vmatprep.mubr.f32.mxu0 0.0
        %1279 = vmatmul.mubr.f32.gmra.mxu0 %v1097
        %v1280 = vpop.f32.mrf.mxu0
        %v1281 = vadd.f32 0.0, %v1280
        %v1282 = vpop.f32.mrf.mxu0
        %1283 = vmatprep.mubr.f32.mxu0 0.0
        %1284 = vmatmul.mubr.f32.gmra.mxu0 %v1100
        %v1285 = vpop.f32.mrf.mxu0
        %v1286 = vadd.f32 0.0, %v1285
        %v1287 = vpop.f32.mrf.mxu0
        %1288 = vmatprep.mubr.f32.mxu0 0.0
        %1289 = vmatmul.mubr.f32.gmra.mxu0 %v1103
        %v1290 = vpop.f32.mrf.mxu0
        %v1291 = vadd.f32 0.0, %v1290
        %v1292 = vpop.f32.mrf.mxu0
        %1293 = vmatprep.mubr.f32.mxu0 0.0
        %1294 = vmatmul.mubr.f32.gmra.mxu0 %v1106
        %v1295 = vpop.f32.mrf.mxu0
        %v1296 = vadd.f32 0.0, %v1295
        %v1297 = vpop.f32.mrf.mxu0
        %1298 = vmatprep.mubr.f32.mxu0 0.0
        %1299 = vmatmul.mubr.f32.gmra.mxu0 %v1109
        %v1300 = vpop.f32.mrf.mxu0
        %v1301 = vadd.f32 0.0, %v1300
        %v1302 = vpop.f32.mrf.mxu0
        %1303 = vmatprep.mubr.f32.mxu0 0.0
        %1304 = vmatmul.mubr.f32.gmra.mxu0 %v1112
        %v1305 = vpop.f32.mrf.mxu0
        %v1306 = vadd.f32 0.0, %v1305
        %v1307 = vpop.f32.mrf.mxu0
        %1308 = vmatprep.mubr.f32.mxu0 0.0
        %1309 = vmatmul.mubr.f32.gmra.mxu0 %v1115
        %v1310 = vpop.f32.mrf.mxu0
        %v1311 = vadd.f32 0.0, %v1310
        %v1312 = vpop.f32.mrf.mxu0
        %1313 = vmatprep.mubr.f32.mxu0 0.0
        %1314 = vmatmul.mubr.f32.gmra.mxu0 %v1118
        %v1315 = vpop.f32.mrf.mxu0
        %v1316 = vadd.f32 0.0, %v1315
        %v1317 = vpop.f32.mrf.mxu0
        %1318 = vmatprep.mubr.f32.mxu0 0.0
        %1319 = vmatmul.mubr.f32.gmra.mxu0 %v1121
        %v1320 = vpop.f32.mrf.mxu0
        %v1321 = vadd.f32 0.0, %v1320
        %v1322 = vpop.f32.mrf.mxu0
        %1323 = vmatprep.mubr.f32.mxu0 0.0
        %1324 = vmatmul.mubr.f32.gmra.mxu0 %v1124
        %v1325 = vpop.f32.mrf.mxu0
        %v1326 = vadd.f32 0.0, %v1325
        %v1327 = vpop.f32.mrf.mxu0
        %1328 = vmatprep.mubr.f32.mxu0 0.0
        %1329 = vmatmul.mubr.f32.gmra.mxu0 %v1127
        %v1330 = vpop.f32.mrf.mxu0
        %v1331 = vadd.f32 0.0, %v1330
        %v1332 = vpop.f32.mrf.mxu0
        %1333 = vmatprep.mubr.f32.mxu0 0.0
        %1334 = vmatmul.mubr.f32.gmra.mxu0 %v1130
        %v1335 = vpop.f32.mrf.mxu0
        %v1336 = vadd.f32 0.0, %v1335
        %v1337 = vpop.f32.mrf.mxu0
        %1338 = vmatprep.mubr.f32.mxu0 0.0
        %1339 = vmatmul.mubr.f32.gmra.mxu0 %v1133
        %v1340 = vpop.f32.mrf.mxu0
        %v1341 = vadd.f32 0.0, %v1340
        %v1342 = vpop.f32.mrf.mxu0
        %1343 = vmatprep.mubr.f32.mxu0 0.0
        %1344 = vmatmul.mubr.f32.gmra.mxu0 %v1136
        %v1345 = vpop.f32.mrf.mxu0
        %v1346 = vadd.f32 0.0, %v1345
        %v1347 = vpop.f32.mrf.mxu0
        %1348 = vmatprep.mubr.f32.mxu0 0.0
        %1349 = vmatmul.mubr.f32.gmra.mxu0 %v1139
        %v1350 = vpop.f32.mrf.mxu0
        %v1351 = vadd.f32 0.0, %v1350
        %v1352 = vpop.f32.mrf.mxu0
        %1353 = vmatprep.mubr.f32.mxu0 0.0
        %1354 = vmatmul.mubr.f32.gmra.mxu0 %v1142
        %v1355 = vpop.f32.mrf.mxu0
        %v1356 = vadd.f32 0.0, %v1355
        %v1357 = vpop.f32.mrf.mxu0
        %1358 = vmatprep.mubr.f32.mxu0 0.0
        %1359 = vmatmul.mubr.f32.gmra.mxu0 %v1145
        %v1360 = vpop.f32.mrf.mxu0
        %v1361 = vadd.f32 0.0, %v1360
        %v1362 = vpop.f32.mrf.mxu0
        %1363 = vmatprep.mubr.f32.mxu0 0.0
        %1364 = vmatmul.mubr.f32.gmra.mxu0 %v1148
        %v1365 = vpop.f32.mrf.mxu0
        %v1366 = vadd.f32 0.0, %v1365
        %v1367 = vpop.f32.mrf.mxu0
        %1368 = vmatprep.mubr.f32.mxu0 0.0
        %1369 = vmatmul.mubr.f32.gmra.mxu0 %v1151
        %v1370 = vpop.f32.mrf.mxu0
        %v1371 = vadd.f32 0.0, %v1370
        %v1372 = vpop.f32.mrf.mxu0
        %1373 = vmatprep.mubr.f32.mxu0 0.0
        %1374 = vmatmul.mubr.f32.gmra.mxu0 %v1154
        %v1375 = vpop.f32.mrf.mxu0
        %v1376 = vadd.f32 0.0, %v1375
        %v1377 = vpop.f32.mrf.mxu0
        %1378 = vmatprep.mubr.f32.mxu0 0.0
        %1379 = vmatmul.mubr.f32.gmra.mxu0 %v1157
        %v1380 = vpop.f32.mrf.mxu0
        %v1381 = vadd.f32 0.0, %v1380
        %v1382 = vpop.f32.mrf.mxu0
        %1383 = vdwg.mxu0
        %v1384 = vadd.f32 %v871, %v1226
        %v1385 = vadd.f32 %v876, %v1231
        %v1386 = vadd.f32 %v881, %v1236
        %v1387 = vadd.f32 %v886, %v1241
        %v1388 = vadd.f32 %v891, %v1246
        %v1389 = vadd.f32 %v896, %v1251
        %v1390 = vadd.f32 %v901, %v1256
        %v1391 = vadd.f32 %v906, %v1261
        %v1392 = vadd.f32 %v911, %v1266
        %v1393 = vadd.f32 %v916, %v1271
        %v1394 = vadd.f32 %v921, %v1276
        %v1395 = vadd.f32 %v926, %v1281
        %v1396 = vadd.f32 %v931, %v1286
        %v1397 = vadd.f32 %v936, %v1291
        %v1398 = vadd.f32 %v941, %v1296
        %v1399 = vadd.f32 %v946, %v1301
        %v1400 = vadd.f32 %v951, %v1306
        %v1401 = vadd.f32 %v956, %v1311
        %v1402 = vadd.f32 %v961, %v1316
        %v1403 = vadd.f32 %v966, %v1321
        %v1404 = vadd.f32 %v971, %v1326
        %v1405 = vadd.f32 %v976, %v1331
        %v1406 = vadd.f32 %v981, %v1336
        %v1407 = vadd.f32 %v986, %v1341
        %v1408 = vadd.f32 %v991, %v1346
        %v1409 = vadd.f32 %v996, %v1351
        %v1410 = vadd.f32 %v1001, %v1356
        %v1411 = vadd.f32 %v1006, %v1361
        %v1412 = vadd.f32 %v1011, %v1366
        %v1413 = vadd.f32 %v1016, %v1371
        %v1414 = vadd.f32 %v1021, %v1376
        %v1415 = vadd.f32 %v1026, %v1381
        %v1416 = vld [vmem:[%s287] sm:$0xff]
        %v1417 = vld [vmem:[%s287 + $0x8] sm:$0xff]
        %v1418 = vld [vmem:[%s287 + $0x18] sm:$0xff]
        %v1419 = vld [vmem:[%s287 + $0x20] sm:$0xff]
        %v1420 = vld [vmem:[%s287 + $0x30] sm:$0xff]
        %v1421 = vld [vmem:[%s287 + $0x38] sm:$0xff]
        %v1422 = vld [vmem:[%s287 + $0x48] sm:$0xff]
        %v1423 = vld [vmem:[%s287 + $0x50] sm:$0xff]
        %v1424 = vld [vmem:[%s287 + $0x60] sm:$0xff]
        %v1425 = vld [vmem:[%s287 + $0x68] sm:$0xff]
        %v1426 = vld [vmem:[%s287 + $0x78] sm:$0xff]
        %v1427 = vld [vmem:[%s287 + $0x80] sm:$0xff]
        %v1428 = vld [vmem:[%s287 + $0x90] sm:$0xff]
        %v1429 = vld [vmem:[%s287 + $0x98] sm:$0xff]
        %v1430 = vld [vmem:[%s287 + $0xa8] sm:$0xff]
        %v1431 = vld [vmem:[%s287 + $0xb0] sm:$0xff]
        %v1432 = vld [vmem:[%s287 + $0xc0] sm:$0xff]
        %v1433 = vld [vmem:[%s287 + $0xc8] sm:$0xff]
        %v1434 = vld [vmem:[%s287 + $0xd8] sm:$0xff]
        %v1435 = vld [vmem:[%s287 + $0xe0] sm:$0xff]
        %v1436 = vld [vmem:[%s287 + $0xf0] sm:$0xff]
        %v1437 = vld [vmem:[%s287 + $0xf8] sm:$0xff]
        %v1438 = vld [vmem:[%s287 + $0x108] sm:$0xff]
        %v1439 = vld [vmem:[%s287 + $0x110] sm:$0xff]
        %v1440 = vld [vmem:[%s287 + $0x120] sm:$0xff]
        %v1441 = vld [vmem:[%s287 + $0x128] sm:$0xff]
        %v1442 = vld [vmem:[%s287 + $0x138] sm:$0xff]
        %v1443 = vld [vmem:[%s287 + $0x140] sm:$0xff]
        %v1444 = vld [vmem:[%s287 + $0x150] sm:$0xff]
        %v1445 = vld [vmem:[%s287 + $0x158] sm:$0xff]
        %v1446 = vld [vmem:[%s287 + $0x168] sm:$0xff]
        %v1447 = vld [vmem:[%s287 + $0x170] sm:$0xff]
        %s1448 = scalar_lea.vmem %s1, 24
        %v1449 = vld [vmem:[%s1448] sm:$0xff]
        %v1451 = vsel %vm241, %v1416, 0
        %v1454 = vsel %vm241, %v1417, 0
        %v1457 = vsel %vm241, %v1418, 0
        %v1460 = vsel %vm241, %v1419, 0
        %v1463 = vsel %vm241, %v1420, 0
        %v1466 = vsel %vm241, %v1421, 0
        %v1469 = vsel %vm241, %v1422, 0
        %v1472 = vsel %vm241, %v1423, 0
        %v1475 = vsel %vm241, %v1424, 0
        %v1478 = vsel %vm241, %v1425, 0
        %v1481 = vsel %vm241, %v1426, 0
        %v1484 = vsel %vm241, %v1427, 0
        %v1487 = vsel %vm241, %v1428, 0
        %v1490 = vsel %vm241, %v1429, 0
        %v1493 = vsel %vm241, %v1430, 0
        %v1496 = vsel %vm241, %v1431, 0
        %v1499 = vsel %vm241, %v1432, 0
        %v1502 = vsel %vm241, %v1433, 0
        %v1505 = vsel %vm241, %v1434, 0
        %v1508 = vsel %vm241, %v1435, 0
        %v1511 = vsel %vm241, %v1436, 0
        %v1514 = vsel %vm241, %v1437, 0
        %v1517 = vsel %vm241, %v1438, 0
        %v1520 = vsel %vm241, %v1439, 0
        %v1523 = vsel %vm241, %v1440, 0
        %v1526 = vsel %vm241, %v1441, 0
        %v1529 = vsel %vm241, %v1442, 0
        %v1532 = vsel %vm241, %v1443, 0
        %v1535 = vsel %vm241, %v1444, 0
        %v1538 = vsel %vm241, %v1445, 0
        %v1541 = vsel %vm241, %v1446, 0
        %v1544 = vsel %vm241, %v1447, 0
        %1546 = vmatprep.subr.mxu0 0.0
        %1547 = vmatpush1.msra.mxu0 0.0
        %1548 = vmatprep.subr.mxu0 0.0
        %1549 = vmatpush1.msra.mxu0 0.0
        %1550 = vmatprep.subr.mxu0 0.0
        %1551 = vmatpush1.msra.mxu0 0.0
        %1552 = vmatprep.subr.mxu0 0.0
        %1553 = vmatpush1.msra.mxu0 0.0
        %1554 = vmatprep.subr.mxu0 0.0
        %1555 = vmatpush1.msra.mxu0 0.0
        %1556 = vmatprep.subr.mxu0 0.0
        %1557 = vmatpush1.msra.mxu0 0.0
        %1558 = vmatprep.subr.mxu0 0.0
        %1559 = vmatpush1.msra.mxu0 0.0
        %1560 = vmatprep.subr.mxu0 0.0
        %1561 = vmatpush1.msra.mxu0 0.0
        %1562 = vmatprep.subr.mxu0 0.0
        %1563 = vmatpush1.msra.mxu0 0.0
        %1564 = vmatprep.subr.mxu0 0.0
        %1565 = vmatpush1.msra.mxu0 0.0
        %1566 = vmatprep.subr.mxu0 0.0
        %1567 = vmatpush1.msra.mxu0 0.0
        %1568 = vmatprep.subr.mxu0 0.0
        %1569 = vmatpush1.msra.mxu0 0.0
        %1570 = vmatprep.subr.mxu0 0.0
        %1571 = vmatpush1.msra.mxu0 0.0
        %1572 = vmatprep.subr.mxu0 0.0
        %1573 = vmatpush1.msra.mxu0 0.0
        %1574 = vmatprep.subr.mxu0 0.0
        %1575 = vmatpush1.msra.mxu0 0.0
        %1576 = vmatprep.subr.mxu0 0.0
        %1577 = vmatpush1.msra.mxu0 %v1449
        %1578 = vmatprep.subr.mxu0 0.0
        %1579 = vmatpush2.msra.mxu0 0.0
        %1580 = vmatprep.subr.mxu0 0.0
        %1581 = vmatpush2.msra.mxu0 0.0
        %1582 = vmatprep.subr.mxu0 0.0
        %1583 = vmatpush2.msra.mxu0 0.0
        %1584 = vmatprep.subr.mxu0 0.0
        %1585 = vmatpush2.msra.mxu0 0.0
        %1586 = vmatprep.subr.mxu0 0.0
        %1587 = vmatpush2.msra.mxu0 0.0
        %1588 = vmatprep.subr.mxu0 0.0
        %1589 = vmatpush2.msra.mxu0 0.0
        %1590 = vmatprep.subr.mxu0 0.0
        %1591 = vmatpush2.msra.mxu0 0.0
        %1592 = vmatprep.subr.mxu0 0.0
        %1593 = vmatpush2.msra.mxu0 0.0
        %1594 = vmatprep.subr.mxu0 0.0
        %1595 = vmatpush2.msra.mxu0 0.0
        %1596 = vmatprep.subr.mxu0 0.0
        %1597 = vmatpush2.msra.mxu0 0.0
        %1598 = vmatprep.subr.mxu0 0.0
        %1599 = vmatpush2.msra.mxu0 0.0
        %1600 = vmatprep.subr.mxu0 0.0
        %1601 = vmatpush2.msra.mxu0 0.0
        %1602 = vmatprep.subr.mxu0 0.0
        %1603 = vmatpush2.msra.mxu0 0.0
        %1604 = vmatprep.subr.mxu0 0.0
        %1605 = vmatpush2.msra.mxu0 0.0
        %1606 = vmatprep.subr.mxu0 0.0
        %1607 = vmatpush2.msra.mxu0 0.0
        %1608 = vmatprep.subr.mxu0 0.0
        %1609 = vmatpush2.msra.mxu0 0.0
        %1610 = vmatprep.mubr.f32.mxu0 0.0
        %1611 = vmatmul.mubr.f32.gmra.mxu0 %v1451
        %v1612 = vpop.f32.mrf.mxu0
        %v1613 = vadd.f32 0.0, %v1612
        %v1614 = vpop.f32.mrf.mxu0
        %1615 = vmatprep.mubr.f32.mxu0 0.0
        %1616 = vmatmul.mubr.f32.gmra.mxu0 %v1454
        %v1617 = vpop.f32.mrf.mxu0
        %v1618 = vadd.f32 0.0, %v1617
        %v1619 = vpop.f32.mrf.mxu0
        %1620 = vmatprep.mubr.f32.mxu0 0.0
        %1621 = vmatmul.mubr.f32.gmra.mxu0 %v1457
        %v1622 = vpop.f32.mrf.mxu0
        %v1623 = vadd.f32 0.0, %v1622
        %v1624 = vpop.f32.mrf.mxu0
        %1625 = vmatprep.mubr.f32.mxu0 0.0
        %1626 = vmatmul.mubr.f32.gmra.mxu0 %v1460
        %v1627 = vpop.f32.mrf.mxu0
        %v1628 = vadd.f32 0.0, %v1627
        %v1629 = vpop.f32.mrf.mxu0
        %1630 = vmatprep.mubr.f32.mxu0 0.0
        %1631 = vmatmul.mubr.f32.gmra.mxu0 %v1463
        %v1632 = vpop.f32.mrf.mxu0
        %v1633 = vadd.f32 0.0, %v1632
        %v1634 = vpop.f32.mrf.mxu0
        %1635 = vmatprep.mubr.f32.mxu0 0.0
        %1636 = vmatmul.mubr.f32.gmra.mxu0 %v1466
        %v1637 = vpop.f32.mrf.mxu0
        %v1638 = vadd.f32 0.0, %v1637
        %v1639 = vpop.f32.mrf.mxu0
        %1640 = vmatprep.mubr.f32.mxu0 0.0
        %1641 = vmatmul.mubr.f32.gmra.mxu0 %v1469
        %v1642 = vpop.f32.mrf.mxu0
        %v1643 = vadd.f32 0.0, %v1642
        %v1644 = vpop.f32.mrf.mxu0
        %1645 = vmatprep.mubr.f32.mxu0 0.0
        %1646 = vmatmul.mubr.f32.gmra.mxu0 %v1472
        %v1647 = vpop.f32.mrf.mxu0
        %v1648 = vadd.f32 0.0, %v1647
        %v1649 = vpop.f32.mrf.mxu0
        %1650 = vmatprep.mubr.f32.mxu0 0.0
        %1651 = vmatmul.mubr.f32.gmra.mxu0 %v1475
        %v1652 = vpop.f32.mrf.mxu0
        %v1653 = vadd.f32 0.0, %v1652
        %v1654 = vpop.f32.mrf.mxu0
        %1655 = vmatprep.mubr.f32.mxu0 0.0
        %1656 = vmatmul.mubr.f32.gmra.mxu0 %v1478
        %v1657 = vpop.f32.mrf.mxu0
        %v1658 = vadd.f32 0.0, %v1657
        %v1659 = vpop.f32.mrf.mxu0
        %1660 = vmatprep.mubr.f32.mxu0 0.0
        %1661 = vmatmul.mubr.f32.gmra.mxu0 %v1481
        %v1662 = vpop.f32.mrf.mxu0
        %v1663 = vadd.f32 0.0, %v1662
        %v1664 = vpop.f32.mrf.mxu0
        %1665 = vmatprep.mubr.f32.mxu0 0.0
        %1666 = vmatmul.mubr.f32.gmra.mxu0 %v1484
        %v1667 = vpop.f32.mrf.mxu0
        %v1668 = vadd.f32 0.0, %v1667
        %v1669 = vpop.f32.mrf.mxu0
        %1670 = vmatprep.mubr.f32.mxu0 0.0
        %1671 = vmatmul.mubr.f32.gmra.mxu0 %v1487
        %v1672 = vpop.f32.mrf.mxu0
        %v1673 = vadd.f32 0.0, %v1672
        %v1674 = vpop.f32.mrf.mxu0
        %1675 = vmatprep.mubr.f32.mxu0 0.0
        %1676 = vmatmul.mubr.f32.gmra.mxu0 %v1490
        %v1677 = vpop.f32.mrf.mxu0
        %v1678 = vadd.f32 0.0, %v1677
        %v1679 = vpop.f32.mrf.mxu0
        %1680 = vmatprep.mubr.f32.mxu0 0.0
        %1681 = vmatmul.mubr.f32.gmra.mxu0 %v1493
        %v1682 = vpop.f32.mrf.mxu0
        %v1683 = vadd.f32 0.0, %v1682
        %v1684 = vpop.f32.mrf.mxu0
        %1685 = vmatprep.mubr.f32.mxu0 0.0
        %1686 = vmatmul.mubr.f32.gmra.mxu0 %v1496
        %v1687 = vpop.f32.mrf.mxu0
        %v1688 = vadd.f32 0.0, %v1687
        %v1689 = vpop.f32.mrf.mxu0
        %1690 = vmatprep.mubr.f32.mxu0 0.0
        %1691 = vmatmul.mubr.f32.gmra.mxu0 %v1499
        %v1692 = vpop.f32.mrf.mxu0
        %v1693 = vadd.f32 0.0, %v1692
        %v1694 = vpop.f32.mrf.mxu0
        %1695 = vmatprep.mubr.f32.mxu0 0.0
        %1696 = vmatmul.mubr.f32.gmra.mxu0 %v1502
        %v1697 = vpop.f32.mrf.mxu0
        %v1698 = vadd.f32 0.0, %v1697
        %v1699 = vpop.f32.mrf.mxu0
        %1700 = vmatprep.mubr.f32.mxu0 0.0
        %1701 = vmatmul.mubr.f32.gmra.mxu0 %v1505
        %v1702 = vpop.f32.mrf.mxu0
        %v1703 = vadd.f32 0.0, %v1702
        %v1704 = vpop.f32.mrf.mxu0
        %1705 = vmatprep.mubr.f32.mxu0 0.0
        %1706 = vmatmul.mubr.f32.gmra.mxu0 %v1508
        %v1707 = vpop.f32.mrf.mxu0
        %v1708 = vadd.f32 0.0, %v1707
        %v1709 = vpop.f32.mrf.mxu0
        %1710 = vmatprep.mubr.f32.mxu0 0.0
        %1711 = vmatmul.mubr.f32.gmra.mxu0 %v1511
        %v1712 = vpop.f32.mrf.mxu0
        %v1713 = vadd.f32 0.0, %v1712
        %v1714 = vpop.f32.mrf.mxu0
        %1715 = vmatprep.mubr.f32.mxu0 0.0
        %1716 = vmatmul.mubr.f32.gmra.mxu0 %v1514
        %v1717 = vpop.f32.mrf.mxu0
        %v1718 = vadd.f32 0.0, %v1717
        %v1719 = vpop.f32.mrf.mxu0
        %1720 = vmatprep.mubr.f32.mxu0 0.0
        %1721 = vmatmul.mubr.f32.gmra.mxu0 %v1517
        %v1722 = vpop.f32.mrf.mxu0
        %v1723 = vadd.f32 0.0, %v1722
        %v1724 = vpop.f32.mrf.mxu0
        %1725 = vmatprep.mubr.f32.mxu0 0.0
        %1726 = vmatmul.mubr.f32.gmra.mxu0 %v1520
        %v1727 = vpop.f32.mrf.mxu0
        %v1728 = vadd.f32 0.0, %v1727
        %v1729 = vpop.f32.mrf.mxu0
        %1730 = vmatprep.mubr.f32.mxu0 0.0
        %1731 = vmatmul.mubr.f32.gmra.mxu0 %v1523
        %v1732 = vpop.f32.mrf.mxu0
        %v1733 = vadd.f32 0.0, %v1732
        %v1734 = vpop.f32.mrf.mxu0
        %1735 = vmatprep.mubr.f32.mxu0 0.0
        %1736 = vmatmul.mubr.f32.gmra.mxu0 %v1526
        %v1737 = vpop.f32.mrf.mxu0
        %v1738 = vadd.f32 0.0, %v1737
        %v1739 = vpop.f32.mrf.mxu0
        %1740 = vmatprep.mubr.f32.mxu0 0.0
        %1741 = vmatmul.mubr.f32.gmra.mxu0 %v1529
        %v1742 = vpop.f32.mrf.mxu0
        %v1743 = vadd.f32 0.0, %v1742
        %v1744 = vpop.f32.mrf.mxu0
        %1745 = vmatprep.mubr.f32.mxu0 0.0
        %1746 = vmatmul.mubr.f32.gmra.mxu0 %v1532
        %v1747 = vpop.f32.mrf.mxu0
        %v1748 = vadd.f32 0.0, %v1747
        %v1749 = vpop.f32.mrf.mxu0
        %1750 = vmatprep.mubr.f32.mxu0 0.0
        %1751 = vmatmul.mubr.f32.gmra.mxu0 %v1535
        %v1752 = vpop.f32.mrf.mxu0
        %v1753 = vadd.f32 0.0, %v1752
        %v1754 = vpop.f32.mrf.mxu0
        %1755 = vmatprep.mubr.f32.mxu0 0.0
        %1756 = vmatmul.mubr.f32.gmra.mxu0 %v1538
        %v1757 = vpop.f32.mrf.mxu0
        %v1758 = vadd.f32 0.0, %v1757
        %v1759 = vpop.f32.mrf.mxu0
        %1760 = vmatprep.mubr.f32.mxu0 0.0
        %1761 = vmatmul.mubr.f32.gmra.mxu0 %v1541
        %v1762 = vpop.f32.mrf.mxu0
        %v1763 = vadd.f32 0.0, %v1762
        %v1764 = vpop.f32.mrf.mxu0
        %1765 = vmatprep.mubr.f32.mxu0 0.0
        %1766 = vmatmul.mubr.f32.gmra.mxu0 %v1544
        %v1767 = vpop.f32.mrf.mxu0
        %v1768 = vadd.f32 0.0, %v1767
        %v1769 = vpop.f32.mrf.mxu0
        %1770 = vdwg.mxu0
        %v1771 = vadd.f32 %v1384, %v1613
        %v1772 = vadd.f32 %v1385, %v1618
        %v1773 = vadd.f32 %v1386, %v1623
        %v1774 = vadd.f32 %v1387, %v1628
        %v1775 = vadd.f32 %v1388, %v1633
        %v1776 = vadd.f32 %v1389, %v1638
        %v1777 = vadd.f32 %v1390, %v1643
        %v1778 = vadd.f32 %v1391, %v1648
        %v1779 = vadd.f32 %v1392, %v1653
        %v1780 = vadd.f32 %v1393, %v1658
        %v1781 = vadd.f32 %v1394, %v1663
        %v1782 = vadd.f32 %v1395, %v1668
        %v1783 = vadd.f32 %v1396, %v1673
        %v1784 = vadd.f32 %v1397, %v1678
        %v1785 = vadd.f32 %v1398, %v1683
        %v1786 = vadd.f32 %v1399, %v1688
        %v1787 = vadd.f32 %v1400, %v1693
        %v1788 = vadd.f32 %v1401, %v1698
        %v1789 = vadd.f32 %v1402, %v1703
        %v1790 = vadd.f32 %v1403, %v1708
        %v1791 = vadd.f32 %v1404, %v1713
        %v1792 = vadd.f32 %v1405, %v1718
        %v1793 = vadd.f32 %v1406, %v1723
        %v1794 = vadd.f32 %v1407, %v1728
        %v1795 = vadd.f32 %v1408, %v1733
        %v1796 = vadd.f32 %v1409, %v1738
        %v1797 = vadd.f32 %v1410, %v1743
        %v1798 = vadd.f32 %v1411, %v1748
        %v1799 = vadd.f32 %v1412, %v1753
        %v1800 = vadd.f32 %v1413, %v1758
        %v1801 = vadd.f32 %v1414, %v1763
        %v1802 = vadd.f32 %v1415, %v1768
        %v1803 = vld [vmem:[%s287 + $0x1] sm:$0xff]
        %v1804 = vld [vmem:[%s287 + $0x9] sm:$0xff]
        %v1805 = vld [vmem:[%s287 + $0x19] sm:$0xff]
        %v1806 = vld [vmem:[%s287 + $0x21] sm:$0xff]
        %v1807 = vld [vmem:[%s287 + $0x31] sm:$0xff]
        %v1808 = vld [vmem:[%s287 + $0x39] sm:$0xff]
        %v1809 = vld [vmem:[%s287 + $0x49] sm:$0xff]
        %v1810 = vld [vmem:[%s287 + $0x51] sm:$0xff]
        %v1811 = vld [vmem:[%s287 + $0x61] sm:$0xff]
        %v1812 = vld [vmem:[%s287 + $0x69] sm:$0xff]
        %v1813 = vld [vmem:[%s287 + $0x79] sm:$0xff]
        %v1814 = vld [vmem:[%s287 + $0x81] sm:$0xff]
        %v1815 = vld [vmem:[%s287 + $0x91] sm:$0xff]
        %v1816 = vld [vmem:[%s287 + $0x99] sm:$0xff]
        %v1817 = vld [vmem:[%s287 + $0xa9] sm:$0xff]
        %v1818 = vld [vmem:[%s287 + $0xb1] sm:$0xff]
        %v1819 = vld [vmem:[%s287 + $0xc1] sm:$0xff]
        %v1820 = vld [vmem:[%s287 + $0xc9] sm:$0xff]
        %v1821 = vld [vmem:[%s287 + $0xd9] sm:$0xff]
        %v1822 = vld [vmem:[%s287 + $0xe1] sm:$0xff]
        %v1823 = vld [vmem:[%s287 + $0xf1] sm:$0xff]
        %v1824 = vld [vmem:[%s287 + $0xf9] sm:$0xff]
        %v1825 = vld [vmem:[%s287 + $0x109] sm:$0xff]
        %v1826 = vld [vmem:[%s287 + $0x111] sm:$0xff]
        %v1827 = vld [vmem:[%s287 + $0x121] sm:$0xff]
        %v1828 = vld [vmem:[%s287 + $0x129] sm:$0xff]
        %v1829 = vld [vmem:[%s287 + $0x139] sm:$0xff]
        %v1830 = vld [vmem:[%s287 + $0x141] sm:$0xff]
        %v1831 = vld [vmem:[%s287 + $0x151] sm:$0xff]
        %v1832 = vld [vmem:[%s287 + $0x159] sm:$0xff]
        %v1833 = vld [vmem:[%s287 + $0x169] sm:$0xff]
        %v1834 = vld [vmem:[%s287 + $0x171] sm:$0xff]
        %s1835 = scalar_lea.vmem %s1, 32
        %v1836 = vld [vmem:[%s1835] sm:$0xff]
        %v1838 = vsel %vm241, %v1803, 0
        %v1841 = vsel %vm241, %v1804, 0
        %v1844 = vsel %vm241, %v1805, 0
        %v1847 = vsel %vm241, %v1806, 0
        %v1850 = vsel %vm241, %v1807, 0
        %v1853 = vsel %vm241, %v1808, 0
        %v1856 = vsel %vm241, %v1809, 0
        %v1859 = vsel %vm241, %v1810, 0
        %v1862 = vsel %vm241, %v1811, 0
        %v1865 = vsel %vm241, %v1812, 0
        %v1868 = vsel %vm241, %v1813, 0
        %v1871 = vsel %vm241, %v1814, 0
        %v1874 = vsel %vm241, %v1815, 0
        %v1877 = vsel %vm241, %v1816, 0
        %v1880 = vsel %vm241, %v1817, 0
        %v1883 = vsel %vm241, %v1818, 0
        %v1886 = vsel %vm241, %v1819, 0
        %v1889 = vsel %vm241, %v1820, 0
        %v1892 = vsel %vm241, %v1821, 0
        %v1895 = vsel %vm241, %v1822, 0
        %v1898 = vsel %vm241, %v1823, 0
        %v1901 = vsel %vm241, %v1824, 0
        %v1904 = vsel %vm241, %v1825, 0
        %v1907 = vsel %vm241, %v1826, 0
        %v1910 = vsel %vm241, %v1827, 0
        %v1913 = vsel %vm241, %v1828, 0
        %v1916 = vsel %vm241, %v1829, 0
        %v1919 = vsel %vm241, %v1830, 0
        %v1922 = vsel %vm241, %v1831, 0
        %v1925 = vsel %vm241, %v1832, 0
        %v1928 = vsel %vm241, %v1833, 0
        %v1931 = vsel %vm241, %v1834, 0
        %1933 = vmatprep.subr.mxu0 0.0
        %1934 = vmatpush1.msra.mxu0 0.0
        %1935 = vmatprep.subr.mxu0 0.0
        %1936 = vmatpush1.msra.mxu0 0.0
        %1937 = vmatprep.subr.mxu0 0.0
        %1938 = vmatpush1.msra.mxu0 0.0
        %1939 = vmatprep.subr.mxu0 0.0
        %1940 = vmatpush1.msra.mxu0 0.0
        %1941 = vmatprep.subr.mxu0 0.0
        %1942 = vmatpush1.msra.mxu0 0.0
        %1943 = vmatprep.subr.mxu0 0.0
        %1944 = vmatpush1.msra.mxu0 0.0
        %1945 = vmatprep.subr.mxu0 0.0
        %1946 = vmatpush1.msra.mxu0 0.0
        %1947 = vmatprep.subr.mxu0 0.0
        %1948 = vmatpush1.msra.mxu0 0.0
        %1949 = vmatprep.subr.mxu0 0.0
        %1950 = vmatpush1.msra.mxu0 0.0
        %1951 = vmatprep.subr.mxu0 0.0
        %1952 = vmatpush1.msra.mxu0 0.0
        %1953 = vmatprep.subr.mxu0 0.0
        %1954 = vmatpush1.msra.mxu0 0.0
        %1955 = vmatprep.subr.mxu0 0.0
        %1956 = vmatpush1.msra.mxu0 0.0
        %1957 = vmatprep.subr.mxu0 0.0
        %1958 = vmatpush1.msra.mxu0 0.0
        %1959 = vmatprep.subr.mxu0 0.0
        %1960 = vmatpush1.msra.mxu0 0.0
        %1961 = vmatprep.subr.mxu0 0.0
        %1962 = vmatpush1.msra.mxu0 0.0
        %1963 = vmatprep.subr.mxu0 0.0
        %1964 = vmatpush1.msra.mxu0 %v1836
        %1965 = vmatprep.subr.mxu0 0.0
        %1966 = vmatpush2.msra.mxu0 0.0
        %1967 = vmatprep.subr.mxu0 0.0
        %1968 = vmatpush2.msra.mxu0 0.0
        %1969 = vmatprep.subr.mxu0 0.0
        %1970 = vmatpush2.msra.mxu0 0.0
        %1971 = vmatprep.subr.mxu0 0.0
        %1972 = vmatpush2.msra.mxu0 0.0
        %1973 = vmatprep.subr.mxu0 0.0
        %1974 = vmatpush2.msra.mxu0 0.0
        %1975 = vmatprep.subr.mxu0 0.0
        %1976 = vmatpush2.msra.mxu0 0.0
        %1977 = vmatprep.subr.mxu0 0.0
        %1978 = vmatpush2.msra.mxu0 0.0
        %1979 = vmatprep.subr.mxu0 0.0
        %1980 = vmatpush2.msra.mxu0 0.0
        %1981 = vmatprep.subr.mxu0 0.0
        %1982 = vmatpush2.msra.mxu0 0.0
        %1983 = vmatprep.subr.mxu0 0.0
        %1984 = vmatpush2.msra.mxu0 0.0
        %1985 = vmatprep.subr.mxu0 0.0
        %1986 = vmatpush2.msra.mxu0 0.0
        %1987 = vmatprep.subr.mxu0 0.0
        %1988 = vmatpush2.msra.mxu0 0.0
        %1989 = vmatprep.subr.mxu0 0.0
        %1990 = vmatpush2.msra.mxu0 0.0
        %1991 = vmatprep.subr.mxu0 0.0
        %1992 = vmatpush2.msra.mxu0 0.0
        %1993 = vmatprep.subr.mxu0 0.0
        %1994 = vmatpush2.msra.mxu0 0.0
        %1995 = vmatprep.subr.mxu0 0.0
        %1996 = vmatpush2.msra.mxu0 0.0
        %1997 = vmatprep.mubr.f32.mxu0 0.0
        %1998 = vmatmul.mubr.f32.gmra.mxu0 %v1838
        %v1999 = vpop.f32.mrf.mxu0
        %v2000 = vadd.f32 0.0, %v1999
        %v2001 = vpop.f32.mrf.mxu0
        %2002 = vmatprep.mubr.f32.mxu0 0.0
        %2003 = vmatmul.mubr.f32.gmra.mxu0 %v1841
        %v2004 = vpop.f32.mrf.mxu0
        %v2005 = vadd.f32 0.0, %v2004
        %v2006 = vpop.f32.mrf.mxu0
        %2007 = vmatprep.mubr.f32.mxu0 0.0
        %2008 = vmatmul.mubr.f32.gmra.mxu0 %v1844
        %v2009 = vpop.f32.mrf.mxu0
        %v2010 = vadd.f32 0.0, %v2009
        %v2011 = vpop.f32.mrf.mxu0
        %2012 = vmatprep.mubr.f32.mxu0 0.0
        %2013 = vmatmul.mubr.f32.gmra.mxu0 %v1847
        %v2014 = vpop.f32.mrf.mxu0
        %v2015 = vadd.f32 0.0, %v2014
        %v2016 = vpop.f32.mrf.mxu0
        %2017 = vmatprep.mubr.f32.mxu0 0.0
        %2018 = vmatmul.mubr.f32.gmra.mxu0 %v1850
        %v2019 = vpop.f32.mrf.mxu0
        %v2020 = vadd.f32 0.0, %v2019
        %v2021 = vpop.f32.mrf.mxu0
        %2022 = vmatprep.mubr.f32.mxu0 0.0
        %2023 = vmatmul.mubr.f32.gmra.mxu0 %v1853
        %v2024 = vpop.f32.mrf.mxu0
        %v2025 = vadd.f32 0.0, %v2024
        %v2026 = vpop.f32.mrf.mxu0
        %2027 = vmatprep.mubr.f32.mxu0 0.0
        %2028 = vmatmul.mubr.f32.gmra.mxu0 %v1856
        %v2029 = vpop.f32.mrf.mxu0
        %v2030 = vadd.f32 0.0, %v2029
        %v2031 = vpop.f32.mrf.mxu0
        %2032 = vmatprep.mubr.f32.mxu0 0.0
        %2033 = vmatmul.mubr.f32.gmra.mxu0 %v1859
        %v2034 = vpop.f32.mrf.mxu0
        %v2035 = vadd.f32 0.0, %v2034
        %v2036 = vpop.f32.mrf.mxu0
        %2037 = vmatprep.mubr.f32.mxu0 0.0
        %2038 = vmatmul.mubr.f32.gmra.mxu0 %v1862
        %v2039 = vpop.f32.mrf.mxu0
        %v2040 = vadd.f32 0.0, %v2039
        %v2041 = vpop.f32.mrf.mxu0
        %2042 = vmatprep.mubr.f32.mxu0 0.0
        %2043 = vmatmul.mubr.f32.gmra.mxu0 %v1865
        %v2044 = vpop.f32.mrf.mxu0
        %v2045 = vadd.f32 0.0, %v2044
        %v2046 = vpop.f32.mrf.mxu0
        %2047 = vmatprep.mubr.f32.mxu0 0.0
        %2048 = vmatmul.mubr.f32.gmra.mxu0 %v1868
        %v2049 = vpop.f32.mrf.mxu0
        %v2050 = vadd.f32 0.0, %v2049
        %v2051 = vpop.f32.mrf.mxu0
        %2052 = vmatprep.mubr.f32.mxu0 0.0
        %2053 = vmatmul.mubr.f32.gmra.mxu0 %v1871
        %v2054 = vpop.f32.mrf.mxu0
        %v2055 = vadd.f32 0.0, %v2054
        %v2056 = vpop.f32.mrf.mxu0
        %2057 = vmatprep.mubr.f32.mxu0 0.0
        %2058 = vmatmul.mubr.f32.gmra.mxu0 %v1874
        %v2059 = vpop.f32.mrf.mxu0
        %v2060 = vadd.f32 0.0, %v2059
        %v2061 = vpop.f32.mrf.mxu0
        %2062 = vmatprep.mubr.f32.mxu0 0.0
        %2063 = vmatmul.mubr.f32.gmra.mxu0 %v1877
        %v2064 = vpop.f32.mrf.mxu0
        %v2065 = vadd.f32 0.0, %v2064
        %v2066 = vpop.f32.mrf.mxu0
        %2067 = vmatprep.mubr.f32.mxu0 0.0
        %2068 = vmatmul.mubr.f32.gmra.mxu0 %v1880
        %v2069 = vpop.f32.mrf.mxu0
        %v2070 = vadd.f32 0.0, %v2069
        %v2071 = vpop.f32.mrf.mxu0
        %2072 = vmatprep.mubr.f32.mxu0 0.0
        %2073 = vmatmul.mubr.f32.gmra.mxu0 %v1883
        %v2074 = vpop.f32.mrf.mxu0
        %v2075 = vadd.f32 0.0, %v2074
        %v2076 = vpop.f32.mrf.mxu0
        %2077 = vmatprep.mubr.f32.mxu0 0.0
        %2078 = vmatmul.mubr.f32.gmra.mxu0 %v1886
        %v2079 = vpop.f32.mrf.mxu0
        %v2080 = vadd.f32 0.0, %v2079
        %v2081 = vpop.f32.mrf.mxu0
        %2082 = vmatprep.mubr.f32.mxu0 0.0
        %2083 = vmatmul.mubr.f32.gmra.mxu0 %v1889
        %v2084 = vpop.f32.mrf.mxu0
        %v2085 = vadd.f32 0.0, %v2084
        %v2086 = vpop.f32.mrf.mxu0
        %2087 = vmatprep.mubr.f32.mxu0 0.0
        %2088 = vmatmul.mubr.f32.gmra.mxu0 %v1892
        %v2089 = vpop.f32.mrf.mxu0
        %v2090 = vadd.f32 0.0, %v2089
        %v2091 = vpop.f32.mrf.mxu0
        %2092 = vmatprep.mubr.f32.mxu0 0.0
        %2093 = vmatmul.mubr.f32.gmra.mxu0 %v1895
        %v2094 = vpop.f32.mrf.mxu0
        %v2095 = vadd.f32 0.0, %v2094
        %v2096 = vpop.f32.mrf.mxu0
        %2097 = vmatprep.mubr.f32.mxu0 0.0
        %2098 = vmatmul.mubr.f32.gmra.mxu0 %v1898
        %v2099 = vpop.f32.mrf.mxu0
        %v2100 = vadd.f32 0.0, %v2099
        %v2101 = vpop.f32.mrf.mxu0
        %2102 = vmatprep.mubr.f32.mxu0 0.0
        %2103 = vmatmul.mubr.f32.gmra.mxu0 %v1901
        %v2104 = vpop.f32.mrf.mxu0
        %v2105 = vadd.f32 0.0, %v2104
        %v2106 = vpop.f32.mrf.mxu0
        %2107 = vmatprep.mubr.f32.mxu0 0.0
        %2108 = vmatmul.mubr.f32.gmra.mxu0 %v1904
        %v2109 = vpop.f32.mrf.mxu0
        %v2110 = vadd.f32 0.0, %v2109
        %v2111 = vpop.f32.mrf.mxu0
        %2112 = vmatprep.mubr.f32.mxu0 0.0
        %2113 = vmatmul.mubr.f32.gmra.mxu0 %v1907
        %v2114 = vpop.f32.mrf.mxu0
        %v2115 = vadd.f32 0.0, %v2114
        %v2116 = vpop.f32.mrf.mxu0
        %2117 = vmatprep.mubr.f32.mxu0 0.0
        %2118 = vmatmul.mubr.f32.gmra.mxu0 %v1910
        %v2119 = vpop.f32.mrf.mxu0
        %v2120 = vadd.f32 0.0, %v2119
        %v2121 = vpop.f32.mrf.mxu0
        %2122 = vmatprep.mubr.f32.mxu0 0.0
        %2123 = vmatmul.mubr.f32.gmra.mxu0 %v1913
        %v2124 = vpop.f32.mrf.mxu0
        %v2125 = vadd.f32 0.0, %v2124
        %v2126 = vpop.f32.mrf.mxu0
        %2127 = vmatprep.mubr.f32.mxu0 0.0
        %2128 = vmatmul.mubr.f32.gmra.mxu0 %v1916
        %v2129 = vpop.f32.mrf.mxu0
        %v2130 = vadd.f32 0.0, %v2129
        %v2131 = vpop.f32.mrf.mxu0
        %2132 = vmatprep.mubr.f32.mxu0 0.0
        %2133 = vmatmul.mubr.f32.gmra.mxu0 %v1919
        %v2134 = vpop.f32.mrf.mxu0
        %v2135 = vadd.f32 0.0, %v2134
        %v2136 = vpop.f32.mrf.mxu0
        %2137 = vmatprep.mubr.f32.mxu0 0.0
        %2138 = vmatmul.mubr.f32.gmra.mxu0 %v1922
        %v2139 = vpop.f32.mrf.mxu0
        %v2140 = vadd.f32 0.0, %v2139
        %v2141 = vpop.f32.mrf.mxu0
        %2142 = vmatprep.mubr.f32.mxu0 0.0
        %2143 = vmatmul.mubr.f32.gmra.mxu0 %v1925
        %v2144 = vpop.f32.mrf.mxu0
        %v2145 = vadd.f32 0.0, %v2144
        %v2146 = vpop.f32.mrf.mxu0
        %2147 = vmatprep.mubr.f32.mxu0 0.0
        %2148 = vmatmul.mubr.f32.gmra.mxu0 %v1928
        %v2149 = vpop.f32.mrf.mxu0
        %v2150 = vadd.f32 0.0, %v2149
        %v2151 = vpop.f32.mrf.mxu0
        %2152 = vmatprep.mubr.f32.mxu0 0.0
        %2153 = vmatmul.mubr.f32.gmra.mxu0 %v1931
        %v2154 = vpop.f32.mrf.mxu0
        %v2155 = vadd.f32 0.0, %v2154
        %v2156 = vpop.f32.mrf.mxu0
        %2157 = vdwg.mxu0
        %v2158 = vadd.f32 %v1771, %v2000
        %v2159 = vadd.f32 %v1772, %v2005
        %v2160 = vadd.f32 %v1773, %v2010
        %v2161 = vadd.f32 %v1774, %v2015
        %v2162 = vadd.f32 %v1775, %v2020
        %v2163 = vadd.f32 %v1776, %v2025
        %v2164 = vadd.f32 %v1777, %v2030
        %v2165 = vadd.f32 %v1778, %v2035
        %v2166 = vadd.f32 %v1779, %v2040
        %v2167 = vadd.f32 %v1780, %v2045
        %v2168 = vadd.f32 %v1781, %v2050
        %v2169 = vadd.f32 %v1782, %v2055
        %v2170 = vadd.f32 %v1783, %v2060
        %v2171 = vadd.f32 %v1784, %v2065
        %v2172 = vadd.f32 %v1785, %v2070
        %v2173 = vadd.f32 %v1786, %v2075
        %v2174 = vadd.f32 %v1787, %v2080
        %v2175 = vadd.f32 %v1788, %v2085
        %v2176 = vadd.f32 %v1789, %v2090
        %v2177 = vadd.f32 %v1790, %v2095
        %v2178 = vadd.f32 %v1791, %v2100
        %v2179 = vadd.f32 %v1792, %v2105
        %v2180 = vadd.f32 %v1793, %v2110
        %v2181 = vadd.f32 %v1794, %v2115
        %v2182 = vadd.f32 %v1795, %v2120
        %v2183 = vadd.f32 %v1796, %v2125
        %v2184 = vadd.f32 %v1797, %v2130
        %v2185 = vadd.f32 %v1798, %v2135
        %v2186 = vadd.f32 %v1799, %v2140
        %v2187 = vadd.f32 %v1800, %v2145
        %v2188 = vadd.f32 %v1801, %v2150
        %v2189 = vadd.f32 %v1802, %v2155
        %v2190 = vld [vmem:[%s287 + $0x2] sm:$0xff]
        %v2191 = vld [vmem:[%s287 + $0xa] sm:$0xff]
        %v2192 = vld [vmem:[%s287 + $0x1a] sm:$0xff]
        %v2193 = vld [vmem:[%s287 + $0x22] sm:$0xff]
        %v2194 = vld [vmem:[%s287 + $0x32] sm:$0xff]
        %v2195 = vld [vmem:[%s287 + $0x3a] sm:$0xff]
        %v2196 = vld [vmem:[%s287 + $0x4a] sm:$0xff]
        %v2197 = vld [vmem:[%s287 + $0x52] sm:$0xff]
        %v2198 = vld [vmem:[%s287 + $0x62] sm:$0xff]
        %v2199 = vld [vmem:[%s287 + $0x6a] sm:$0xff]
        %v2200 = vld [vmem:[%s287 + $0x7a] sm:$0xff]
        %v2201 = vld [vmem:[%s287 + $0x82] sm:$0xff]
        %v2202 = vld [vmem:[%s287 + $0x92] sm:$0xff]
        %v2203 = vld [vmem:[%s287 + $0x9a] sm:$0xff]
        %v2204 = vld [vmem:[%s287 + $0xaa] sm:$0xff]
        %v2205 = vld [vmem:[%s287 + $0xb2] sm:$0xff]
        %v2206 = vld [vmem:[%s287 + $0xc2] sm:$0xff]
        %v2207 = vld [vmem:[%s287 + $0xca] sm:$0xff]
        %v2208 = vld [vmem:[%s287 + $0xda] sm:$0xff]
        %v2209 = vld [vmem:[%s287 + $0xe2] sm:$0xff]
        %v2210 = vld [vmem:[%s287 + $0xf2] sm:$0xff]
        %v2211 = vld [vmem:[%s287 + $0xfa] sm:$0xff]
        %v2212 = vld [vmem:[%s287 + $0x10a] sm:$0xff]
        %v2213 = vld [vmem:[%s287 + $0x112] sm:$0xff]
        %v2214 = vld [vmem:[%s287 + $0x122] sm:$0xff]
        %v2215 = vld [vmem:[%s287 + $0x12a] sm:$0xff]
        %v2216 = vld [vmem:[%s287 + $0x13a] sm:$0xff]
        %v2217 = vld [vmem:[%s287 + $0x142] sm:$0xff]
        %v2218 = vld [vmem:[%s287 + $0x152] sm:$0xff]
        %v2219 = vld [vmem:[%s287 + $0x15a] sm:$0xff]
        %v2220 = vld [vmem:[%s287 + $0x16a] sm:$0xff]
        %v2221 = vld [vmem:[%s287 + $0x172] sm:$0xff]
        %s2222 = scalar_lea.vmem %s1, 40
        %v2223 = vld [vmem:[%s2222] sm:$0xff]
        %v2225 = vsel %vm241, %v2190, 0
        %v2228 = vsel %vm241, %v2191, 0
        %v2231 = vsel %vm241, %v2192, 0
        %v2234 = vsel %vm241, %v2193, 0
        %v2237 = vsel %vm241, %v2194, 0
        %v2240 = vsel %vm241, %v2195, 0
        %v2243 = vsel %vm241, %v2196, 0
        %v2246 = vsel %vm241, %v2197, 0
        %v2249 = vsel %vm241, %v2198, 0
        %v2252 = vsel %vm241, %v2199, 0
        %v2255 = vsel %vm241, %v2200, 0
        %v2258 = vsel %vm241, %v2201, 0
        %v2261 = vsel %vm241, %v2202, 0
        %v2264 = vsel %vm241, %v2203, 0
        %v2267 = vsel %vm241, %v2204, 0
        %v2270 = vsel %vm241, %v2205, 0
        %v2273 = vsel %vm241, %v2206, 0
        %v2276 = vsel %vm241, %v2207, 0
        %v2279 = vsel %vm241, %v2208, 0
        %v2282 = vsel %vm241, %v2209, 0
        %v2285 = vsel %vm241, %v2210, 0
        %v2288 = vsel %vm241, %v2211, 0
        %v2291 = vsel %vm241, %v2212, 0
        %v2294 = vsel %vm241, %v2213, 0
        %v2297 = vsel %vm241, %v2214, 0
        %v2300 = vsel %vm241, %v2215, 0
        %v2303 = vsel %vm241, %v2216, 0
        %v2306 = vsel %vm241, %v2217, 0
        %v2309 = vsel %vm241, %v2218, 0
        %v2312 = vsel %vm241, %v2219, 0
        %v2315 = vsel %vm241, %v2220, 0
        %v2318 = vsel %vm241, %v2221, 0
        %2320 = vmatprep.subr.mxu0 0.0
        %2321 = vmatpush1.msra.mxu0 0.0
        %2322 = vmatprep.subr.mxu0 0.0
        %2323 = vmatpush1.msra.mxu0 0.0
        %2324 = vmatprep.subr.mxu0 0.0
        %2325 = vmatpush1.msra.mxu0 0.0
        %2326 = vmatprep.subr.mxu0 0.0
        %2327 = vmatpush1.msra.mxu0 0.0
        %2328 = vmatprep.subr.mxu0 0.0
        %2329 = vmatpush1.msra.mxu0 0.0
        %2330 = vmatprep.subr.mxu0 0.0
        %2331 = vmatpush1.msra.mxu0 0.0
        %2332 = vmatprep.subr.mxu0 0.0
        %2333 = vmatpush1.msra.mxu0 0.0
        %2334 = vmatprep.subr.mxu0 0.0
        %2335 = vmatpush1.msra.mxu0 0.0
        %2336 = vmatprep.subr.mxu0 0.0
        %2337 = vmatpush1.msra.mxu0 0.0
        %2338 = vmatprep.subr.mxu0 0.0
        %2339 = vmatpush1.msra.mxu0 0.0
        %2340 = vmatprep.subr.mxu0 0.0
        %2341 = vmatpush1.msra.mxu0 0.0
        %2342 = vmatprep.subr.mxu0 0.0
        %2343 = vmatpush1.msra.mxu0 0.0
        %2344 = vmatprep.subr.mxu0 0.0
        %2345 = vmatpush1.msra.mxu0 0.0
        %2346 = vmatprep.subr.mxu0 0.0
        %2347 = vmatpush1.msra.mxu0 0.0
        %2348 = vmatprep.subr.mxu0 0.0
        %2349 = vmatpush1.msra.mxu0 0.0
        %2350 = vmatprep.subr.mxu0 0.0
        %2351 = vmatpush1.msra.mxu0 %v2223
        %2352 = vmatprep.subr.mxu0 0.0
        %2353 = vmatpush2.msra.mxu0 0.0
        %2354 = vmatprep.subr.mxu0 0.0
        %2355 = vmatpush2.msra.mxu0 0.0
        %2356 = vmatprep.subr.mxu0 0.0
        %2357 = vmatpush2.msra.mxu0 0.0
        %2358 = vmatprep.subr.mxu0 0.0
        %2359 = vmatpush2.msra.mxu0 0.0
        %2360 = vmatprep.subr.mxu0 0.0
        %2361 = vmatpush2.msra.mxu0 0.0
        %2362 = vmatprep.subr.mxu0 0.0
        %2363 = vmatpush2.msra.mxu0 0.0
        %2364 = vmatprep.subr.mxu0 0.0
        %2365 = vmatpush2.msra.mxu0 0.0
        %2366 = vmatprep.subr.mxu0 0.0
        %2367 = vmatpush2.msra.mxu0 0.0
        %2368 = vmatprep.subr.mxu0 0.0
        %2369 = vmatpush2.msra.mxu0 0.0
        %2370 = vmatprep.subr.mxu0 0.0
        %2371 = vmatpush2.msra.mxu0 0.0
        %2372 = vmatprep.subr.mxu0 0.0
        %2373 = vmatpush2.msra.mxu0 0.0
        %2374 = vmatprep.subr.mxu0 0.0
        %2375 = vmatpush2.msra.mxu0 0.0
        %2376 = vmatprep.subr.mxu0 0.0
        %2377 = vmatpush2.msra.mxu0 0.0
        %2378 = vmatprep.subr.mxu0 0.0
        %2379 = vmatpush2.msra.mxu0 0.0
        %2380 = vmatprep.subr.mxu0 0.0
        %2381 = vmatpush2.msra.mxu0 0.0
        %2382 = vmatprep.subr.mxu0 0.0
        %2383 = vmatpush2.msra.mxu0 0.0
        %2384 = vmatprep.mubr.f32.mxu0 0.0
        %2385 = vmatmul.mubr.f32.gmra.mxu0 %v2225
        %v2386 = vpop.f32.mrf.mxu0
        %v2387 = vadd.f32 0.0, %v2386
        %v2388 = vpop.f32.mrf.mxu0
        %2389 = vmatprep.mubr.f32.mxu0 0.0
        %2390 = vmatmul.mubr.f32.gmra.mxu0 %v2228
        %v2391 = vpop.f32.mrf.mxu0
        %v2392 = vadd.f32 0.0, %v2391
        %v2393 = vpop.f32.mrf.mxu0
        %2394 = vmatprep.mubr.f32.mxu0 0.0
        %2395 = vmatmul.mubr.f32.gmra.mxu0 %v2231
        %v2396 = vpop.f32.mrf.mxu0
        %v2397 = vadd.f32 0.0, %v2396
        %v2398 = vpop.f32.mrf.mxu0
        %2399 = vmatprep.mubr.f32.mxu0 0.0
        %2400 = vmatmul.mubr.f32.gmra.mxu0 %v2234
        %v2401 = vpop.f32.mrf.mxu0
        %v2402 = vadd.f32 0.0, %v2401
        %v2403 = vpop.f32.mrf.mxu0
        %2404 = vmatprep.mubr.f32.mxu0 0.0
        %2405 = vmatmul.mubr.f32.gmra.mxu0 %v2237
        %v2406 = vpop.f32.mrf.mxu0
        %v2407 = vadd.f32 0.0, %v2406
        %v2408 = vpop.f32.mrf.mxu0
        %2409 = vmatprep.mubr.f32.mxu0 0.0
        %2410 = vmatmul.mubr.f32.gmra.mxu0 %v2240
        %v2411 = vpop.f32.mrf.mxu0
        %v2412 = vadd.f32 0.0, %v2411
        %v2413 = vpop.f32.mrf.mxu0
        %2414 = vmatprep.mubr.f32.mxu0 0.0
        %2415 = vmatmul.mubr.f32.gmra.mxu0 %v2243
        %v2416 = vpop.f32.mrf.mxu0
        %v2417 = vadd.f32 0.0, %v2416
        %v2418 = vpop.f32.mrf.mxu0
        %2419 = vmatprep.mubr.f32.mxu0 0.0
        %2420 = vmatmul.mubr.f32.gmra.mxu0 %v2246
        %v2421 = vpop.f32.mrf.mxu0
        %v2422 = vadd.f32 0.0, %v2421
        %v2423 = vpop.f32.mrf.mxu0
        %2424 = vmatprep.mubr.f32.mxu0 0.0
        %2425 = vmatmul.mubr.f32.gmra.mxu0 %v2249
        %v2426 = vpop.f32.mrf.mxu0
        %v2427 = vadd.f32 0.0, %v2426
        %v2428 = vpop.f32.mrf.mxu0
        %2429 = vmatprep.mubr.f32.mxu0 0.0
        %2430 = vmatmul.mubr.f32.gmra.mxu0 %v2252
        %v2431 = vpop.f32.mrf.mxu0
        %v2432 = vadd.f32 0.0, %v2431
        %v2433 = vpop.f32.mrf.mxu0
        %2434 = vmatprep.mubr.f32.mxu0 0.0
        %2435 = vmatmul.mubr.f32.gmra.mxu0 %v2255
        %v2436 = vpop.f32.mrf.mxu0
        %v2437 = vadd.f32 0.0, %v2436
        %v2438 = vpop.f32.mrf.mxu0
        %2439 = vmatprep.mubr.f32.mxu0 0.0
        %2440 = vmatmul.mubr.f32.gmra.mxu0 %v2258
        %v2441 = vpop.f32.mrf.mxu0
        %v2442 = vadd.f32 0.0, %v2441
        %v2443 = vpop.f32.mrf.mxu0
        %2444 = vmatprep.mubr.f32.mxu0 0.0
        %2445 = vmatmul.mubr.f32.gmra.mxu0 %v2261
        %v2446 = vpop.f32.mrf.mxu0
        %v2447 = vadd.f32 0.0, %v2446
        %v2448 = vpop.f32.mrf.mxu0
        %2449 = vmatprep.mubr.f32.mxu0 0.0
        %2450 = vmatmul.mubr.f32.gmra.mxu0 %v2264
        %v2451 = vpop.f32.mrf.mxu0
        %v2452 = vadd.f32 0.0, %v2451
        %v2453 = vpop.f32.mrf.mxu0
        %2454 = vmatprep.mubr.f32.mxu0 0.0
        %2455 = vmatmul.mubr.f32.gmra.mxu0 %v2267
        %v2456 = vpop.f32.mrf.mxu0
        %v2457 = vadd.f32 0.0, %v2456
        %v2458 = vpop.f32.mrf.mxu0
        %2459 = vmatprep.mubr.f32.mxu0 0.0
        %2460 = vmatmul.mubr.f32.gmra.mxu0 %v2270
        %v2461 = vpop.f32.mrf.mxu0
        %v2462 = vadd.f32 0.0, %v2461
        %v2463 = vpop.f32.mrf.mxu0
        %2464 = vmatprep.mubr.f32.mxu0 0.0
        %2465 = vmatmul.mubr.f32.gmra.mxu0 %v2273
        %v2466 = vpop.f32.mrf.mxu0
        %v2467 = vadd.f32 0.0, %v2466
        %v2468 = vpop.f32.mrf.mxu0
        %2469 = vmatprep.mubr.f32.mxu0 0.0
        %2470 = vmatmul.mubr.f32.gmra.mxu0 %v2276
        %v2471 = vpop.f32.mrf.mxu0
        %v2472 = vadd.f32 0.0, %v2471
        %v2473 = vpop.f32.mrf.mxu0
        %2474 = vmatprep.mubr.f32.mxu0 0.0
        %2475 = vmatmul.mubr.f32.gmra.mxu0 %v2279
        %v2476 = vpop.f32.mrf.mxu0
        %v2477 = vadd.f32 0.0, %v2476
        %v2478 = vpop.f32.mrf.mxu0
        %2479 = vmatprep.mubr.f32.mxu0 0.0
        %2480 = vmatmul.mubr.f32.gmra.mxu0 %v2282
        %v2481 = vpop.f32.mrf.mxu0
        %v2482 = vadd.f32 0.0, %v2481
        %v2483 = vpop.f32.mrf.mxu0
        %2484 = vmatprep.mubr.f32.mxu0 0.0
        %2485 = vmatmul.mubr.f32.gmra.mxu0 %v2285
        %v2486 = vpop.f32.mrf.mxu0
        %v2487 = vadd.f32 0.0, %v2486
        %v2488 = vpop.f32.mrf.mxu0
        %2489 = vmatprep.mubr.f32.mxu0 0.0
        %2490 = vmatmul.mubr.f32.gmra.mxu0 %v2288
        %v2491 = vpop.f32.mrf.mxu0
        %v2492 = vadd.f32 0.0, %v2491
        %v2493 = vpop.f32.mrf.mxu0
        %2494 = vmatprep.mubr.f32.mxu0 0.0
        %2495 = vmatmul.mubr.f32.gmra.mxu0 %v2291
        %v2496 = vpop.f32.mrf.mxu0
        %v2497 = vadd.f32 0.0, %v2496
        %v2498 = vpop.f32.mrf.mxu0
        %2499 = vmatprep.mubr.f32.mxu0 0.0
        %2500 = vmatmul.mubr.f32.gmra.mxu0 %v2294
        %v2501 = vpop.f32.mrf.mxu0
        %v2502 = vadd.f32 0.0, %v2501
        %v2503 = vpop.f32.mrf.mxu0
        %2504 = vmatprep.mubr.f32.mxu0 0.0
        %2505 = vmatmul.mubr.f32.gmra.mxu0 %v2297
        %v2506 = vpop.f32.mrf.mxu0
        %v2507 = vadd.f32 0.0, %v2506
        %v2508 = vpop.f32.mrf.mxu0
        %2509 = vmatprep.mubr.f32.mxu0 0.0
        %2510 = vmatmul.mubr.f32.gmra.mxu0 %v2300
        %v2511 = vpop.f32.mrf.mxu0
        %v2512 = vadd.f32 0.0, %v2511
        %v2513 = vpop.f32.mrf.mxu0
        %2514 = vmatprep.mubr.f32.mxu0 0.0
        %2515 = vmatmul.mubr.f32.gmra.mxu0 %v2303
        %v2516 = vpop.f32.mrf.mxu0
        %v2517 = vadd.f32 0.0, %v2516
        %v2518 = vpop.f32.mrf.mxu0
        %2519 = vmatprep.mubr.f32.mxu0 0.0
        %2520 = vmatmul.mubr.f32.gmra.mxu0 %v2306
        %v2521 = vpop.f32.mrf.mxu0
        %v2522 = vadd.f32 0.0, %v2521
        %v2523 = vpop.f32.mrf.mxu0
        %2524 = vmatprep.mubr.f32.mxu0 0.0
        %2525 = vmatmul.mubr.f32.gmra.mxu0 %v2309
        %v2526 = vpop.f32.mrf.mxu0
        %v2527 = vadd.f32 0.0, %v2526
        %v2528 = vpop.f32.mrf.mxu0
        %2529 = vmatprep.mubr.f32.mxu0 0.0
        %2530 = vmatmul.mubr.f32.gmra.mxu0 %v2312
        %v2531 = vpop.f32.mrf.mxu0
        %v2532 = vadd.f32 0.0, %v2531
        %v2533 = vpop.f32.mrf.mxu0
        %2534 = vmatprep.mubr.f32.mxu0 0.0
        %2535 = vmatmul.mubr.f32.gmra.mxu0 %v2315
        %v2536 = vpop.f32.mrf.mxu0
        %v2537 = vadd.f32 0.0, %v2536
        %v2538 = vpop.f32.mrf.mxu0
        %2539 = vmatprep.mubr.f32.mxu0 0.0
        %2540 = vmatmul.mubr.f32.gmra.mxu0 %v2318
        %v2541 = vpop.f32.mrf.mxu0
        %v2542 = vadd.f32 0.0, %v2541
        %v2543 = vpop.f32.mrf.mxu0
        %2544 = vdwg.mxu0
        %v2545 = vadd.f32 %v2158, %v2387
        %v2546 = vadd.f32 %v2159, %v2392
        %v2547 = vadd.f32 %v2160, %v2397
        %v2548 = vadd.f32 %v2161, %v2402
        %v2549 = vadd.f32 %v2162, %v2407
        %v2550 = vadd.f32 %v2163, %v2412
        %v2551 = vadd.f32 %v2164, %v2417
        %v2552 = vadd.f32 %v2165, %v2422
        %v2553 = vadd.f32 %v2166, %v2427
        %v2554 = vadd.f32 %v2167, %v2432
        %v2555 = vadd.f32 %v2168, %v2437
        %v2556 = vadd.f32 %v2169, %v2442
        %v2557 = vadd.f32 %v2170, %v2447
        %v2558 = vadd.f32 %v2171, %v2452
        %v2559 = vadd.f32 %v2172, %v2457
        %v2560 = vadd.f32 %v2173, %v2462
        %v2561 = vadd.f32 %v2174, %v2467
        %v2562 = vadd.f32 %v2175, %v2472
        %v2563 = vadd.f32 %v2176, %v2477
        %v2564 = vadd.f32 %v2177, %v2482
        %v2565 = vadd.f32 %v2178, %v2487
        %v2566 = vadd.f32 %v2179, %v2492
        %v2567 = vadd.f32 %v2180, %v2497
        %v2568 = vadd.f32 %v2181, %v2502
        %v2569 = vadd.f32 %v2182, %v2507
        %v2570 = vadd.f32 %v2183, %v2512
        %v2571 = vadd.f32 %v2184, %v2517
        %v2572 = vadd.f32 %v2185, %v2522
        %v2573 = vadd.f32 %v2186, %v2527
        %v2574 = vadd.f32 %v2187, %v2532
        %v2575 = vadd.f32 %v2188, %v2537
        %v2576 = vadd.f32 %v2189, %v2542
        %s2577 = scalar_lea.vmem [#allocation2], 48
        %v2578 = vld [vmem:[%s2577] sm:$0xff]
        %v2579 = vld [vmem:[%s2577 + $0x8] sm:$0xff]
        %v2580 = vld [vmem:[%s2577 + $0x18] sm:$0xff]
        %v2581 = vld [vmem:[%s2577 + $0x20] sm:$0xff]
        %v2582 = vld [vmem:[%s2577 + $0x30] sm:$0xff]
        %v2583 = vld [vmem:[%s2577 + $0x38] sm:$0xff]
        %v2584 = vld [vmem:[%s2577 + $0x48] sm:$0xff]
        %v2585 = vld [vmem:[%s2577 + $0x50] sm:$0xff]
        %v2586 = vld [vmem:[%s2577 + $0x60] sm:$0xff]
        %v2587 = vld [vmem:[%s2577 + $0x68] sm:$0xff]
        %v2588 = vld [vmem:[%s2577 + $0x78] sm:$0xff]
        %v2589 = vld [vmem:[%s2577 + $0x80] sm:$0xff]
        %v2590 = vld [vmem:[%s2577 + $0x90] sm:$0xff]
        %v2591 = vld [vmem:[%s2577 + $0x98] sm:$0xff]
        %v2592 = vld [vmem:[%s2577 + $0xa8] sm:$0xff]
        %v2593 = vld [vmem:[%s2577 + $0xb0] sm:$0xff]
        %v2594 = vld [vmem:[%s2577 + $0xc0] sm:$0xff]
        %v2595 = vld [vmem:[%s2577 + $0xc8] sm:$0xff]
        %v2596 = vld [vmem:[%s2577 + $0xd8] sm:$0xff]
        %v2597 = vld [vmem:[%s2577 + $0xe0] sm:$0xff]
        %v2598 = vld [vmem:[%s2577 + $0xf0] sm:$0xff]
        %v2599 = vld [vmem:[%s2577 + $0xf8] sm:$0xff]
        %v2600 = vld [vmem:[%s2577 + $0x108] sm:$0xff]
        %v2601 = vld [vmem:[%s2577 + $0x110] sm:$0xff]
        %v2602 = vld [vmem:[%s2577 + $0x120] sm:$0xff]
        %v2603 = vld [vmem:[%s2577 + $0x128] sm:$0xff]
        %v2604 = vld [vmem:[%s2577 + $0x138] sm:$0xff]
        %v2605 = vld [vmem:[%s2577 + $0x140] sm:$0xff]
        %v2606 = vld [vmem:[%s2577 + $0x150] sm:$0xff]
        %v2607 = vld [vmem:[%s2577 + $0x158] sm:$0xff]
        %v2608 = vld [vmem:[%s2577 + $0x168] sm:$0xff]
        %v2609 = vld [vmem:[%s2577 + $0x170] sm:$0xff]
        %s2610 = scalar_lea.vmem %s1, 48
        %v2611 = vld [vmem:[%s2610] sm:$0xff]
        %v2613 = vsel %vm241, %v2578, 0
        %v2616 = vsel %vm241, %v2579, 0
        %v2619 = vsel %vm241, %v2580, 0
        %v2622 = vsel %vm241, %v2581, 0
        %v2625 = vsel %vm241, %v2582, 0
        %v2628 = vsel %vm241, %v2583, 0
        %v2631 = vsel %vm241, %v2584, 0
        %v2634 = vsel %vm241, %v2585, 0
        %v2637 = vsel %vm241, %v2586, 0
        %v2640 = vsel %vm241, %v2587, 0
        %v2643 = vsel %vm241, %v2588, 0
        %v2646 = vsel %vm241, %v2589, 0
        %v2649 = vsel %vm241, %v2590, 0
        %v2652 = vsel %vm241, %v2591, 0
        %v2655 = vsel %vm241, %v2592, 0
        %v2658 = vsel %vm241, %v2593, 0
        %v2661 = vsel %vm241, %v2594, 0
        %v2664 = vsel %vm241, %v2595, 0
        %v2667 = vsel %vm241, %v2596, 0
        %v2670 = vsel %vm241, %v2597, 0
        %v2673 = vsel %vm241, %v2598, 0
        %v2676 = vsel %vm241, %v2599, 0
        %v2679 = vsel %vm241, %v2600, 0
        %v2682 = vsel %vm241, %v2601, 0
        %v2685 = vsel %vm241, %v2602, 0
        %v2688 = vsel %vm241, %v2603, 0
        %v2691 = vsel %vm241, %v2604, 0
        %v2694 = vsel %vm241, %v2605, 0
        %v2697 = vsel %vm241, %v2606, 0
        %v2700 = vsel %vm241, %v2607, 0
        %v2703 = vsel %vm241, %v2608, 0
        %v2706 = vsel %vm241, %v2609, 0
        %2708 = vmatprep.subr.mxu0 0.0
        %2709 = vmatpush1.msra.mxu0 0.0
        %2710 = vmatprep.subr.mxu0 0.0
        %2711 = vmatpush1.msra.mxu0 0.0
        %2712 = vmatprep.subr.mxu0 0.0
        %2713 = vmatpush1.msra.mxu0 0.0
        %2714 = vmatprep.subr.mxu0 0.0
        %2715 = vmatpush1.msra.mxu0 0.0
        %2716 = vmatprep.subr.mxu0 0.0
        %2717 = vmatpush1.msra.mxu0 0.0
        %2718 = vmatprep.subr.mxu0 0.0
        %2719 = vmatpush1.msra.mxu0 0.0
        %2720 = vmatprep.subr.mxu0 0.0
        %2721 = vmatpush1.msra.mxu0 0.0
        %2722 = vmatprep.subr.mxu0 0.0
        %2723 = vmatpush1.msra.mxu0 0.0
        %2724 = vmatprep.subr.mxu0 0.0
        %2725 = vmatpush1.msra.mxu0 0.0
        %2726 = vmatprep.subr.mxu0 0.0
        %2727 = vmatpush1.msra.mxu0 0.0
        %2728 = vmatprep.subr.mxu0 0.0
        %2729 = vmatpush1.msra.mxu0 0.0
        %2730 = vmatprep.subr.mxu0 0.0
        %2731 = vmatpush1.msra.mxu0 0.0
        %2732 = vmatprep.subr.mxu0 0.0
        %2733 = vmatpush1.msra.mxu0 0.0
        %2734 = vmatprep.subr.mxu0 0.0
        %2735 = vmatpush1.msra.mxu0 0.0
        %2736 = vmatprep.subr.mxu0 0.0
        %2737 = vmatpush1.msra.mxu0 0.0
        %2738 = vmatprep.subr.mxu0 0.0
        %2739 = vmatpush1.msra.mxu0 %v2611
        %2740 = vmatprep.subr.mxu0 0.0
        %2741 = vmatpush2.msra.mxu0 0.0
        %2742 = vmatprep.subr.mxu0 0.0
        %2743 = vmatpush2.msra.mxu0 0.0
        %2744 = vmatprep.subr.mxu0 0.0
        %2745 = vmatpush2.msra.mxu0 0.0
        %2746 = vmatprep.subr.mxu0 0.0
        %2747 = vmatpush2.msra.mxu0 0.0
        %2748 = vmatprep.subr.mxu0 0.0
        %2749 = vmatpush2.msra.mxu0 0.0
        %2750 = vmatprep.subr.mxu0 0.0
        %2751 = vmatpush2.msra.mxu0 0.0
        %2752 = vmatprep.subr.mxu0 0.0
        %2753 = vmatpush2.msra.mxu0 0.0
        %2754 = vmatprep.subr.mxu0 0.0
        %2755 = vmatpush2.msra.mxu0 0.0
        %2756 = vmatprep.subr.mxu0 0.0
        %2757 = vmatpush2.msra.mxu0 0.0
        %2758 = vmatprep.subr.mxu0 0.0
        %2759 = vmatpush2.msra.mxu0 0.0
        %2760 = vmatprep.subr.mxu0 0.0
        %2761 = vmatpush2.msra.mxu0 0.0
        %2762 = vmatprep.subr.mxu0 0.0
        %2763 = vmatpush2.msra.mxu0 0.0
        %2764 = vmatprep.subr.mxu0 0.0
        %2765 = vmatpush2.msra.mxu0 0.0
        %2766 = vmatprep.subr.mxu0 0.0
        %2767 = vmatpush2.msra.mxu0 0.0
        %2768 = vmatprep.subr.mxu0 0.0
        %2769 = vmatpush2.msra.mxu0 0.0
        %2770 = vmatprep.subr.mxu0 0.0
        %2771 = vmatpush2.msra.mxu0 0.0
        %2772 = vmatprep.mubr.f32.mxu0 0.0
        %2773 = vmatmul.mubr.f32.gmra.mxu0 %v2613
        %v2774 = vpop.f32.mrf.mxu0
        %v2775 = vadd.f32 0.0, %v2774
        %v2776 = vpop.f32.mrf.mxu0
        %2777 = vmatprep.mubr.f32.mxu0 0.0
        %2778 = vmatmul.mubr.f32.gmra.mxu0 %v2616
        %v2779 = vpop.f32.mrf.mxu0
        %v2780 = vadd.f32 0.0, %v2779
        %v2781 = vpop.f32.mrf.mxu0
        %2782 = vmatprep.mubr.f32.mxu0 0.0
        %2783 = vmatmul.mubr.f32.gmra.mxu0 %v2619
        %v2784 = vpop.f32.mrf.mxu0
        %v2785 = vadd.f32 0.0, %v2784
        %v2786 = vpop.f32.mrf.mxu0
        %2787 = vmatprep.mubr.f32.mxu0 0.0
        %2788 = vmatmul.mubr.f32.gmra.mxu0 %v2622
        %v2789 = vpop.f32.mrf.mxu0
        %v2790 = vadd.f32 0.0, %v2789
        %v2791 = vpop.f32.mrf.mxu0
        %2792 = vmatprep.mubr.f32.mxu0 0.0
        %2793 = vmatmul.mubr.f32.gmra.mxu0 %v2625
        %v2794 = vpop.f32.mrf.mxu0
        %v2795 = vadd.f32 0.0, %v2794
        %v2796 = vpop.f32.mrf.mxu0
        %2797 = vmatprep.mubr.f32.mxu0 0.0
        %2798 = vmatmul.mubr.f32.gmra.mxu0 %v2628
        %v2799 = vpop.f32.mrf.mxu0
        %v2800 = vadd.f32 0.0, %v2799
        %v2801 = vpop.f32.mrf.mxu0
        %2802 = vmatprep.mubr.f32.mxu0 0.0
        %2803 = vmatmul.mubr.f32.gmra.mxu0 %v2631
        %v2804 = vpop.f32.mrf.mxu0
        %v2805 = vadd.f32 0.0, %v2804
        %v2806 = vpop.f32.mrf.mxu0
        %2807 = vmatprep.mubr.f32.mxu0 0.0
        %2808 = vmatmul.mubr.f32.gmra.mxu0 %v2634
        %v2809 = vpop.f32.mrf.mxu0
        %v2810 = vadd.f32 0.0, %v2809
        %v2811 = vpop.f32.mrf.mxu0
        %2812 = vmatprep.mubr.f32.mxu0 0.0
        %2813 = vmatmul.mubr.f32.gmra.mxu0 %v2637
        %v2814 = vpop.f32.mrf.mxu0
        %v2815 = vadd.f32 0.0, %v2814
        %v2816 = vpop.f32.mrf.mxu0
        %2817 = vmatprep.mubr.f32.mxu0 0.0
        %2818 = vmatmul.mubr.f32.gmra.mxu0 %v2640
        %v2819 = vpop.f32.mrf.mxu0
        %v2820 = vadd.f32 0.0, %v2819
        %v2821 = vpop.f32.mrf.mxu0
        %2822 = vmatprep.mubr.f32.mxu0 0.0
        %2823 = vmatmul.mubr.f32.gmra.mxu0 %v2643
        %v2824 = vpop.f32.mrf.mxu0
        %v2825 = vadd.f32 0.0, %v2824
        %v2826 = vpop.f32.mrf.mxu0
        %2827 = vmatprep.mubr.f32.mxu0 0.0
        %2828 = vmatmul.mubr.f32.gmra.mxu0 %v2646
        %v2829 = vpop.f32.mrf.mxu0
        %v2830 = vadd.f32 0.0, %v2829
        %v2831 = vpop.f32.mrf.mxu0
        %2832 = vmatprep.mubr.f32.mxu0 0.0
        %2833 = vmatmul.mubr.f32.gmra.mxu0 %v2649
        %v2834 = vpop.f32.mrf.mxu0
        %v2835 = vadd.f32 0.0, %v2834
        %v2836 = vpop.f32.mrf.mxu0
        %2837 = vmatprep.mubr.f32.mxu0 0.0
        %2838 = vmatmul.mubr.f32.gmra.mxu0 %v2652
        %v2839 = vpop.f32.mrf.mxu0
        %v2840 = vadd.f32 0.0, %v2839
        %v2841 = vpop.f32.mrf.mxu0
        %2842 = vmatprep.mubr.f32.mxu0 0.0
        %2843 = vmatmul.mubr.f32.gmra.mxu0 %v2655
        %v2844 = vpop.f32.mrf.mxu0
        %v2845 = vadd.f32 0.0, %v2844
        %v2846 = vpop.f32.mrf.mxu0
        %2847 = vmatprep.mubr.f32.mxu0 0.0
        %2848 = vmatmul.mubr.f32.gmra.mxu0 %v2658
        %v2849 = vpop.f32.mrf.mxu0
        %v2850 = vadd.f32 0.0, %v2849
        %v2851 = vpop.f32.mrf.mxu0
        %2852 = vmatprep.mubr.f32.mxu0 0.0
        %2853 = vmatmul.mubr.f32.gmra.mxu0 %v2661
        %v2854 = vpop.f32.mrf.mxu0
        %v2855 = vadd.f32 0.0, %v2854
        %v2856 = vpop.f32.mrf.mxu0
        %2857 = vmatprep.mubr.f32.mxu0 0.0
        %2858 = vmatmul.mubr.f32.gmra.mxu0 %v2664
        %v2859 = vpop.f32.mrf.mxu0
        %v2860 = vadd.f32 0.0, %v2859
        %v2861 = vpop.f32.mrf.mxu0
        %2862 = vmatprep.mubr.f32.mxu0 0.0
        %2863 = vmatmul.mubr.f32.gmra.mxu0 %v2667
        %v2864 = vpop.f32.mrf.mxu0
        %v2865 = vadd.f32 0.0, %v2864
        %v2866 = vpop.f32.mrf.mxu0
        %2867 = vmatprep.mubr.f32.mxu0 0.0
        %2868 = vmatmul.mubr.f32.gmra.mxu0 %v2670
        %v2869 = vpop.f32.mrf.mxu0
        %v2870 = vadd.f32 0.0, %v2869
        %v2871 = vpop.f32.mrf.mxu0
        %2872 = vmatprep.mubr.f32.mxu0 0.0
        %2873 = vmatmul.mubr.f32.gmra.mxu0 %v2673
        %v2874 = vpop.f32.mrf.mxu0
        %v2875 = vadd.f32 0.0, %v2874
        %v2876 = vpop.f32.mrf.mxu0
        %2877 = vmatprep.mubr.f32.mxu0 0.0
        %2878 = vmatmul.mubr.f32.gmra.mxu0 %v2676
        %v2879 = vpop.f32.mrf.mxu0
        %v2880 = vadd.f32 0.0, %v2879
        %v2881 = vpop.f32.mrf.mxu0
        %2882 = vmatprep.mubr.f32.mxu0 0.0
        %2883 = vmatmul.mubr.f32.gmra.mxu0 %v2679
        %v2884 = vpop.f32.mrf.mxu0
        %v2885 = vadd.f32 0.0, %v2884
        %v2886 = vpop.f32.mrf.mxu0
        %2887 = vmatprep.mubr.f32.mxu0 0.0
        %2888 = vmatmul.mubr.f32.gmra.mxu0 %v2682
        %v2889 = vpop.f32.mrf.mxu0
        %v2890 = vadd.f32 0.0, %v2889
        %v2891 = vpop.f32.mrf.mxu0
        %2892 = vmatprep.mubr.f32.mxu0 0.0
        %2893 = vmatmul.mubr.f32.gmra.mxu0 %v2685
        %v2894 = vpop.f32.mrf.mxu0
        %v2895 = vadd.f32 0.0, %v2894
        %v2896 = vpop.f32.mrf.mxu0
        %2897 = vmatprep.mubr.f32.mxu0 0.0
        %2898 = vmatmul.mubr.f32.gmra.mxu0 %v2688
        %v2899 = vpop.f32.mrf.mxu0
        %v2900 = vadd.f32 0.0, %v2899
        %v2901 = vpop.f32.mrf.mxu0
        %2902 = vmatprep.mubr.f32.mxu0 0.0
        %2903 = vmatmul.mubr.f32.gmra.mxu0 %v2691
        %v2904 = vpop.f32.mrf.mxu0
        %v2905 = vadd.f32 0.0, %v2904
        %v2906 = vpop.f32.mrf.mxu0
        %2907 = vmatprep.mubr.f32.mxu0 0.0
        %2908 = vmatmul.mubr.f32.gmra.mxu0 %v2694
        %v2909 = vpop.f32.mrf.mxu0
        %v2910 = vadd.f32 0.0, %v2909
        %v2911 = vpop.f32.mrf.mxu0
        %2912 = vmatprep.mubr.f32.mxu0 0.0
        %2913 = vmatmul.mubr.f32.gmra.mxu0 %v2697
        %v2914 = vpop.f32.mrf.mxu0
        %v2915 = vadd.f32 0.0, %v2914
        %v2916 = vpop.f32.mrf.mxu0
        %2917 = vmatprep.mubr.f32.mxu0 0.0
        %2918 = vmatmul.mubr.f32.gmra.mxu0 %v2700
        %v2919 = vpop.f32.mrf.mxu0
        %v2920 = vadd.f32 0.0, %v2919
        %v2921 = vpop.f32.mrf.mxu0
        %2922 = vmatprep.mubr.f32.mxu0 0.0
        %2923 = vmatmul.mubr.f32.gmra.mxu0 %v2703
        %v2924 = vpop.f32.mrf.mxu0
        %v2925 = vadd.f32 0.0, %v2924
        %v2926 = vpop.f32.mrf.mxu0
        %2927 = vmatprep.mubr.f32.mxu0 0.0
        %2928 = vmatmul.mubr.f32.gmra.mxu0 %v2706
        %v2929 = vpop.f32.mrf.mxu0
        %v2930 = vadd.f32 0.0, %v2929
        %v2931 = vpop.f32.mrf.mxu0
        %2932 = vdwg.mxu0
        %v2933 = vadd.f32 %v2545, %v2775
        %v2934 = vadd.f32 %v2546, %v2780
        %v2935 = vadd.f32 %v2547, %v2785
        %v2936 = vadd.f32 %v2548, %v2790
        %v2937 = vadd.f32 %v2549, %v2795
        %v2938 = vadd.f32 %v2550, %v2800
        %v2939 = vadd.f32 %v2551, %v2805
        %v2940 = vadd.f32 %v2552, %v2810
        %v2941 = vadd.f32 %v2553, %v2815
        %v2942 = vadd.f32 %v2554, %v2820
        %v2943 = vadd.f32 %v2555, %v2825
        %v2944 = vadd.f32 %v2556, %v2830
        %v2945 = vadd.f32 %v2557, %v2835
        %v2946 = vadd.f32 %v2558, %v2840
        %v2947 = vadd.f32 %v2559, %v2845
        %v2948 = vadd.f32 %v2560, %v2850
        %v2949 = vadd.f32 %v2561, %v2855
        %v2950 = vadd.f32 %v2562, %v2860
        %v2951 = vadd.f32 %v2563, %v2865
        %v2952 = vadd.f32 %v2564, %v2870
        %v2953 = vadd.f32 %v2565, %v2875
        %v2954 = vadd.f32 %v2566, %v2880
        %v2955 = vadd.f32 %v2567, %v2885
        %v2956 = vadd.f32 %v2568, %v2890
        %v2957 = vadd.f32 %v2569, %v2895
        %v2958 = vadd.f32 %v2570, %v2900
        %v2959 = vadd.f32 %v2571, %v2905
        %v2960 = vadd.f32 %v2572, %v2910
        %v2961 = vadd.f32 %v2573, %v2915
        %v2962 = vadd.f32 %v2574, %v2920
        %v2963 = vadd.f32 %v2575, %v2925
        %v2964 = vadd.f32 %v2576, %v2930
        %v2965 = vld [vmem:[%s2577 + $0x1] sm:$0xff]
        %v2966 = vld [vmem:[%s2577 + $0x9] sm:$0xff]
        %v2967 = vld [vmem:[%s2577 + $0x19] sm:$0xff]
        %v2968 = vld [vmem:[%s2577 + $0x21] sm:$0xff]
        %v2969 = vld [vmem:[%s2577 + $0x31] sm:$0xff]
        %v2970 = vld [vmem:[%s2577 + $0x39] sm:$0xff]
        %v2971 = vld [vmem:[%s2577 + $0x49] sm:$0xff]
        %v2972 = vld [vmem:[%s2577 + $0x51] sm:$0xff]
        %v2973 = vld [vmem:[%s2577 + $0x61] sm:$0xff]
        %v2974 = vld [vmem:[%s2577 + $0x69] sm:$0xff]
        %v2975 = vld [vmem:[%s2577 + $0x79] sm:$0xff]
        %v2976 = vld [vmem:[%s2577 + $0x81] sm:$0xff]
        %v2977 = vld [vmem:[%s2577 + $0x91] sm:$0xff]
        %v2978 = vld [vmem:[%s2577 + $0x99] sm:$0xff]
        %v2979 = vld [vmem:[%s2577 + $0xa9] sm:$0xff]
        %v2980 = vld [vmem:[%s2577 + $0xb1] sm:$0xff]
        %v2981 = vld [vmem:[%s2577 + $0xc1] sm:$0xff]
        %v2982 = vld [vmem:[%s2577 + $0xc9] sm:$0xff]
        %v2983 = vld [vmem:[%s2577 + $0xd9] sm:$0xff]
        %v2984 = vld [vmem:[%s2577 + $0xe1] sm:$0xff]
        %v2985 = vld [vmem:[%s2577 + $0xf1] sm:$0xff]
        %v2986 = vld [vmem:[%s2577 + $0xf9] sm:$0xff]
        %v2987 = vld [vmem:[%s2577 + $0x109] sm:$0xff]
        %v2988 = vld [vmem:[%s2577 + $0x111] sm:$0xff]
        %v2989 = vld [vmem:[%s2577 + $0x121] sm:$0xff]
        %v2990 = vld [vmem:[%s2577 + $0x129] sm:$0xff]
        %v2991 = vld [vmem:[%s2577 + $0x139] sm:$0xff]
        %v2992 = vld [vmem:[%s2577 + $0x141] sm:$0xff]
        %v2993 = vld [vmem:[%s2577 + $0x151] sm:$0xff]
        %v2994 = vld [vmem:[%s2577 + $0x159] sm:$0xff]
        %v2995 = vld [vmem:[%s2577 + $0x169] sm:$0xff]
        %v2996 = vld [vmem:[%s2577 + $0x171] sm:$0xff]
        %s2997 = scalar_lea.vmem %s1, 56
        %v2998 = vld [vmem:[%s2997] sm:$0xff]
        %v3000 = vsel %vm241, %v2965, 0
        %v3003 = vsel %vm241, %v2966, 0
        %v3006 = vsel %vm241, %v2967, 0
        %v3009 = vsel %vm241, %v2968, 0
        %v3012 = vsel %vm241, %v2969, 0
        %v3015 = vsel %vm241, %v2970, 0
        %v3018 = vsel %vm241, %v2971, 0
        %v3021 = vsel %vm241, %v2972, 0
        %v3024 = vsel %vm241, %v2973, 0
        %v3027 = vsel %vm241, %v2974, 0
        %v3030 = vsel %vm241, %v2975, 0
        %v3033 = vsel %vm241, %v2976, 0
        %v3036 = vsel %vm241, %v2977, 0
        %v3039 = vsel %vm241, %v2978, 0
        %v3042 = vsel %vm241, %v2979, 0
        %v3045 = vsel %vm241, %v2980, 0
        %v3048 = vsel %vm241, %v2981, 0
        %v3051 = vsel %vm241, %v2982, 0
        %v3054 = vsel %vm241, %v2983, 0
        %v3057 = vsel %vm241, %v2984, 0
        %v3060 = vsel %vm241, %v2985, 0
        %v3063 = vsel %vm241, %v2986, 0
        %v3066 = vsel %vm241, %v2987, 0
        %v3069 = vsel %vm241, %v2988, 0
        %v3072 = vsel %vm241, %v2989, 0
        %v3075 = vsel %vm241, %v2990, 0
        %v3078 = vsel %vm241, %v2991, 0
        %v3081 = vsel %vm241, %v2992, 0
        %v3084 = vsel %vm241, %v2993, 0
        %v3087 = vsel %vm241, %v2994, 0
        %v3090 = vsel %vm241, %v2995, 0
        %v3093 = vsel %vm241, %v2996, 0
        %3095 = vmatprep.subr.mxu0 0.0
        %3096 = vmatpush1.msra.mxu0 0.0
        %3097 = vmatprep.subr.mxu0 0.0
        %3098 = vmatpush1.msra.mxu0 0.0
        %3099 = vmatprep.subr.mxu0 0.0
        %3100 = vmatpush1.msra.mxu0 0.0
        %3101 = vmatprep.subr.mxu0 0.0
        %3102 = vmatpush1.msra.mxu0 0.0
        %3103 = vmatprep.subr.mxu0 0.0
        %3104 = vmatpush1.msra.mxu0 0.0
        %3105 = vmatprep.subr.mxu0 0.0
        %3106 = vmatpush1.msra.mxu0 0.0
        %3107 = vmatprep.subr.mxu0 0.0
        %3108 = vmatpush1.msra.mxu0 0.0
        %3109 = vmatprep.subr.mxu0 0.0
        %3110 = vmatpush1.msra.mxu0 0.0
        %3111 = vmatprep.subr.mxu0 0.0
        %3112 = vmatpush1.msra.mxu0 0.0
        %3113 = vmatprep.subr.mxu0 0.0
        %3114 = vmatpush1.msra.mxu0 0.0
        %3115 = vmatprep.subr.mxu0 0.0
        %3116 = vmatpush1.msra.mxu0 0.0
        %3117 = vmatprep.subr.mxu0 0.0
        %3118 = vmatpush1.msra.mxu0 0.0
        %3119 = vmatprep.subr.mxu0 0.0
        %3120 = vmatpush1.msra.mxu0 0.0
        %3121 = vmatprep.subr.mxu0 0.0
        %3122 = vmatpush1.msra.mxu0 0.0
        %3123 = vmatprep.subr.mxu0 0.0
        %3124 = vmatpush1.msra.mxu0 0.0
        %3125 = vmatprep.subr.mxu0 0.0
        %3126 = vmatpush1.msra.mxu0 %v2998
        %3127 = vmatprep.subr.mxu0 0.0
        %3128 = vmatpush2.msra.mxu0 0.0
        %3129 = vmatprep.subr.mxu0 0.0
        %3130 = vmatpush2.msra.mxu0 0.0
        %3131 = vmatprep.subr.mxu0 0.0
        %3132 = vmatpush2.msra.mxu0 0.0
        %3133 = vmatprep.subr.mxu0 0.0
        %3134 = vmatpush2.msra.mxu0 0.0
        %3135 = vmatprep.subr.mxu0 0.0
        %3136 = vmatpush2.msra.mxu0 0.0
        %3137 = vmatprep.subr.mxu0 0.0
        %3138 = vmatpush2.msra.mxu0 0.0
        %3139 = vmatprep.subr.mxu0 0.0
        %3140 = vmatpush2.msra.mxu0 0.0
        %3141 = vmatprep.subr.mxu0 0.0
        %3142 = vmatpush2.msra.mxu0 0.0
        %3143 = vmatprep.subr.mxu0 0.0
        %3144 = vmatpush2.msra.mxu0 0.0
        %3145 = vmatprep.subr.mxu0 0.0
        %3146 = vmatpush2.msra.mxu0 0.0
        %3147 = vmatprep.subr.mxu0 0.0
        %3148 = vmatpush2.msra.mxu0 0.0
        %3149 = vmatprep.subr.mxu0 0.0
        %3150 = vmatpush2.msra.mxu0 0.0
        %3151 = vmatprep.subr.mxu0 0.0
        %3152 = vmatpush2.msra.mxu0 0.0
        %3153 = vmatprep.subr.mxu0 0.0
        %3154 = vmatpush2.msra.mxu0 0.0
        %3155 = vmatprep.subr.mxu0 0.0
        %3156 = vmatpush2.msra.mxu0 0.0
        %3157 = vmatprep.subr.mxu0 0.0
        %3158 = vmatpush2.msra.mxu0 0.0
        %3159 = vmatprep.mubr.f32.mxu0 0.0
        %3160 = vmatmul.mubr.f32.gmra.mxu0 %v3000
        %v3161 = vpop.f32.mrf.mxu0
        %v3162 = vadd.f32 0.0, %v3161
        %v3163 = vpop.f32.mrf.mxu0
        %3164 = vmatprep.mubr.f32.mxu0 0.0
        %3165 = vmatmul.mubr.f32.gmra.mxu0 %v3003
        %v3166 = vpop.f32.mrf.mxu0
        %v3167 = vadd.f32 0.0, %v3166
        %v3168 = vpop.f32.mrf.mxu0
        %3169 = vmatprep.mubr.f32.mxu0 0.0
        %3170 = vmatmul.mubr.f32.gmra.mxu0 %v3006
        %v3171 = vpop.f32.mrf.mxu0
        %v3172 = vadd.f32 0.0, %v3171
        %v3173 = vpop.f32.mrf.mxu0
        %3174 = vmatprep.mubr.f32.mxu0 0.0
        %3175 = vmatmul.mubr.f32.gmra.mxu0 %v3009
        %v3176 = vpop.f32.mrf.mxu0
        %v3177 = vadd.f32 0.0, %v3176
        %v3178 = vpop.f32.mrf.mxu0
        %3179 = vmatprep.mubr.f32.mxu0 0.0
        %3180 = vmatmul.mubr.f32.gmra.mxu0 %v3012
        %v3181 = vpop.f32.mrf.mxu0
        %v3182 = vadd.f32 0.0, %v3181
        %v3183 = vpop.f32.mrf.mxu0
        %3184 = vmatprep.mubr.f32.mxu0 0.0
        %3185 = vmatmul.mubr.f32.gmra.mxu0 %v3015
        %v3186 = vpop.f32.mrf.mxu0
        %v3187 = vadd.f32 0.0, %v3186
        %v3188 = vpop.f32.mrf.mxu0
        %3189 = vmatprep.mubr.f32.mxu0 0.0
        %3190 = vmatmul.mubr.f32.gmra.mxu0 %v3018
        %v3191 = vpop.f32.mrf.mxu0
        %v3192 = vadd.f32 0.0, %v3191
        %v3193 = vpop.f32.mrf.mxu0
        %3194 = vmatprep.mubr.f32.mxu0 0.0
        %3195 = vmatmul.mubr.f32.gmra.mxu0 %v3021
        %v3196 = vpop.f32.mrf.mxu0
        %v3197 = vadd.f32 0.0, %v3196
        %v3198 = vpop.f32.mrf.mxu0
        %3199 = vmatprep.mubr.f32.mxu0 0.0
        %3200 = vmatmul.mubr.f32.gmra.mxu0 %v3024
        %v3201 = vpop.f32.mrf.mxu0
        %v3202 = vadd.f32 0.0, %v3201
        %v3203 = vpop.f32.mrf.mxu0
        %3204 = vmatprep.mubr.f32.mxu0 0.0
        %3205 = vmatmul.mubr.f32.gmra.mxu0 %v3027
        %v3206 = vpop.f32.mrf.mxu0
        %v3207 = vadd.f32 0.0, %v3206
        %v3208 = vpop.f32.mrf.mxu0
        %3209 = vmatprep.mubr.f32.mxu0 0.0
        %3210 = vmatmul.mubr.f32.gmra.mxu0 %v3030
        %v3211 = vpop.f32.mrf.mxu0
        %v3212 = vadd.f32 0.0, %v3211
        %v3213 = vpop.f32.mrf.mxu0
        %3214 = vmatprep.mubr.f32.mxu0 0.0
        %3215 = vmatmul.mubr.f32.gmra.mxu0 %v3033
        %v3216 = vpop.f32.mrf.mxu0
        %v3217 = vadd.f32 0.0, %v3216
        %v3218 = vpop.f32.mrf.mxu0
        %3219 = vmatprep.mubr.f32.mxu0 0.0
        %3220 = vmatmul.mubr.f32.gmra.mxu0 %v3036
        %v3221 = vpop.f32.mrf.mxu0
        %v3222 = vadd.f32 0.0, %v3221
        %v3223 = vpop.f32.mrf.mxu0
        %3224 = vmatprep.mubr.f32.mxu0 0.0
        %3225 = vmatmul.mubr.f32.gmra.mxu0 %v3039
        %v3226 = vpop.f32.mrf.mxu0
        %v3227 = vadd.f32 0.0, %v3226
        %v3228 = vpop.f32.mrf.mxu0
        %3229 = vmatprep.mubr.f32.mxu0 0.0
        %3230 = vmatmul.mubr.f32.gmra.mxu0 %v3042
        %v3231 = vpop.f32.mrf.mxu0
        %v3232 = vadd.f32 0.0, %v3231
        %v3233 = vpop.f32.mrf.mxu0
        %3234 = vmatprep.mubr.f32.mxu0 0.0
        %3235 = vmatmul.mubr.f32.gmra.mxu0 %v3045
        %v3236 = vpop.f32.mrf.mxu0
        %v3237 = vadd.f32 0.0, %v3236
        %v3238 = vpop.f32.mrf.mxu0
        %3239 = vmatprep.mubr.f32.mxu0 0.0
        %3240 = vmatmul.mubr.f32.gmra.mxu0 %v3048
        %v3241 = vpop.f32.mrf.mxu0
        %v3242 = vadd.f32 0.0, %v3241
        %v3243 = vpop.f32.mrf.mxu0
        %3244 = vmatprep.mubr.f32.mxu0 0.0
        %3245 = vmatmul.mubr.f32.gmra.mxu0 %v3051
        %v3246 = vpop.f32.mrf.mxu0
        %v3247 = vadd.f32 0.0, %v3246
        %v3248 = vpop.f32.mrf.mxu0
        %3249 = vmatprep.mubr.f32.mxu0 0.0
        %3250 = vmatmul.mubr.f32.gmra.mxu0 %v3054
        %v3251 = vpop.f32.mrf.mxu0
        %v3252 = vadd.f32 0.0, %v3251
        %v3253 = vpop.f32.mrf.mxu0
        %3254 = vmatprep.mubr.f32.mxu0 0.0
        %3255 = vmatmul.mubr.f32.gmra.mxu0 %v3057
        %v3256 = vpop.f32.mrf.mxu0
        %v3257 = vadd.f32 0.0, %v3256
        %v3258 = vpop.f32.mrf.mxu0
        %3259 = vmatprep.mubr.f32.mxu0 0.0
        %3260 = vmatmul.mubr.f32.gmra.mxu0 %v3060
        %v3261 = vpop.f32.mrf.mxu0
        %v3262 = vadd.f32 0.0, %v3261
        %v3263 = vpop.f32.mrf.mxu0
        %3264 = vmatprep.mubr.f32.mxu0 0.0
        %3265 = vmatmul.mubr.f32.gmra.mxu0 %v3063
        %v3266 = vpop.f32.mrf.mxu0
        %v3267 = vadd.f32 0.0, %v3266
        %v3268 = vpop.f32.mrf.mxu0
        %3269 = vmatprep.mubr.f32.mxu0 0.0
        %3270 = vmatmul.mubr.f32.gmra.mxu0 %v3066
        %v3271 = vpop.f32.mrf.mxu0
        %v3272 = vadd.f32 0.0, %v3271
        %v3273 = vpop.f32.mrf.mxu0
        %3274 = vmatprep.mubr.f32.mxu0 0.0
        %3275 = vmatmul.mubr.f32.gmra.mxu0 %v3069
        %v3276 = vpop.f32.mrf.mxu0
        %v3277 = vadd.f32 0.0, %v3276
        %v3278 = vpop.f32.mrf.mxu0
        %3279 = vmatprep.mubr.f32.mxu0 0.0
        %3280 = vmatmul.mubr.f32.gmra.mxu0 %v3072
        %v3281 = vpop.f32.mrf.mxu0
        %v3282 = vadd.f32 0.0, %v3281
        %v3283 = vpop.f32.mrf.mxu0
        %3284 = vmatprep.mubr.f32.mxu0 0.0
        %3285 = vmatmul.mubr.f32.gmra.mxu0 %v3075
        %v3286 = vpop.f32.mrf.mxu0
        %v3287 = vadd.f32 0.0, %v3286
        %v3288 = vpop.f32.mrf.mxu0
        %3289 = vmatprep.mubr.f32.mxu0 0.0
        %3290 = vmatmul.mubr.f32.gmra.mxu0 %v3078
        %v3291 = vpop.f32.mrf.mxu0
        %v3292 = vadd.f32 0.0, %v3291
        %v3293 = vpop.f32.mrf.mxu0
        %3294 = vmatprep.mubr.f32.mxu0 0.0
        %3295 = vmatmul.mubr.f32.gmra.mxu0 %v3081
        %v3296 = vpop.f32.mrf.mxu0
        %v3297 = vadd.f32 0.0, %v3296
        %v3298 = vpop.f32.mrf.mxu0
        %3299 = vmatprep.mubr.f32.mxu0 0.0
        %3300 = vmatmul.mubr.f32.gmra.mxu0 %v3084
        %v3301 = vpop.f32.mrf.mxu0
        %v3302 = vadd.f32 0.0, %v3301
        %v3303 = vpop.f32.mrf.mxu0
        %3304 = vmatprep.mubr.f32.mxu0 0.0
        %3305 = vmatmul.mubr.f32.gmra.mxu0 %v3087
        %v3306 = vpop.f32.mrf.mxu0
        %v3307 = vadd.f32 0.0, %v3306
        %v3308 = vpop.f32.mrf.mxu0
        %3309 = vmatprep.mubr.f32.mxu0 0.0
        %3310 = vmatmul.mubr.f32.gmra.mxu0 %v3090
        %v3311 = vpop.f32.mrf.mxu0
        %v3312 = vadd.f32 0.0, %v3311
        %v3313 = vpop.f32.mrf.mxu0
        %3314 = vmatprep.mubr.f32.mxu0 0.0
        %3315 = vmatmul.mubr.f32.gmra.mxu0 %v3093
        %v3316 = vpop.f32.mrf.mxu0
        %v3317 = vadd.f32 0.0, %v3316
        %v3318 = vpop.f32.mrf.mxu0
        %3319 = vdwg.mxu0
        %v3320 = vadd.f32 %v2933, %v3162
        %v3321 = vadd.f32 %v2934, %v3167
        %v3322 = vadd.f32 %v2935, %v3172
        %v3323 = vadd.f32 %v2936, %v3177
        %v3324 = vadd.f32 %v2937, %v3182
        %v3325 = vadd.f32 %v2938, %v3187
        %v3326 = vadd.f32 %v2939, %v3192
        %v3327 = vadd.f32 %v2940, %v3197
        %v3328 = vadd.f32 %v2941, %v3202
        %v3329 = vadd.f32 %v2942, %v3207
        %v3330 = vadd.f32 %v2943, %v3212
        %v3331 = vadd.f32 %v2944, %v3217
        %v3332 = vadd.f32 %v2945, %v3222
        %v3333 = vadd.f32 %v2946, %v3227
        %v3334 = vadd.f32 %v2947, %v3232
        %v3335 = vadd.f32 %v2948, %v3237
        %v3336 = vadd.f32 %v2949, %v3242
        %v3337 = vadd.f32 %v2950, %v3247
        %v3338 = vadd.f32 %v2951, %v3252
        %v3339 = vadd.f32 %v2952, %v3257
        %v3340 = vadd.f32 %v2953, %v3262
        %v3341 = vadd.f32 %v2954, %v3267
        %v3342 = vadd.f32 %v2955, %v3272
        %v3343 = vadd.f32 %v2956, %v3277
        %v3344 = vadd.f32 %v2957, %v3282
        %v3345 = vadd.f32 %v2958, %v3287
        %v3346 = vadd.f32 %v2959, %v3292
        %v3347 = vadd.f32 %v2960, %v3297
        %v3348 = vadd.f32 %v2961, %v3302
        %v3349 = vadd.f32 %v2962, %v3307
        %v3350 = vadd.f32 %v2963, %v3312
        %v3351 = vadd.f32 %v2964, %v3317
        %v3352 = vld [vmem:[%s2577 + $0x2] sm:$0xff]
        %v3353 = vld [vmem:[%s2577 + $0xa] sm:$0xff]
        %v3354 = vld [vmem:[%s2577 + $0x1a] sm:$0xff]
        %v3355 = vld [vmem:[%s2577 + $0x22] sm:$0xff]
        %v3356 = vld [vmem:[%s2577 + $0x32] sm:$0xff]
        %v3357 = vld [vmem:[%s2577 + $0x3a] sm:$0xff]
        %v3358 = vld [vmem:[%s2577 + $0x4a] sm:$0xff]
        %v3359 = vld [vmem:[%s2577 + $0x52] sm:$0xff]
        %v3360 = vld [vmem:[%s2577 + $0x62] sm:$0xff]
        %v3361 = vld [vmem:[%s2577 + $0x6a] sm:$0xff]
        %v3362 = vld [vmem:[%s2577 + $0x7a] sm:$0xff]
        %v3363 = vld [vmem:[%s2577 + $0x82] sm:$0xff]
        %v3364 = vld [vmem:[%s2577 + $0x92] sm:$0xff]
        %v3365 = vld [vmem:[%s2577 + $0x9a] sm:$0xff]
        %v3366 = vld [vmem:[%s2577 + $0xaa] sm:$0xff]
        %v3367 = vld [vmem:[%s2577 + $0xb2] sm:$0xff]
        %v3368 = vld [vmem:[%s2577 + $0xc2] sm:$0xff]
        %v3369 = vld [vmem:[%s2577 + $0xca] sm:$0xff]
        %v3370 = vld [vmem:[%s2577 + $0xda] sm:$0xff]
        %v3371 = vld [vmem:[%s2577 + $0xe2] sm:$0xff]
        %v3372 = vld [vmem:[%s2577 + $0xf2] sm:$0xff]
        %v3373 = vld [vmem:[%s2577 + $0xfa] sm:$0xff]
        %v3374 = vld [vmem:[%s2577 + $0x10a] sm:$0xff]
        %v3375 = vld [vmem:[%s2577 + $0x112] sm:$0xff]
        %v3376 = vld [vmem:[%s2577 + $0x122] sm:$0xff]
        %v3377 = vld [vmem:[%s2577 + $0x12a] sm:$0xff]
        %v3378 = vld [vmem:[%s2577 + $0x13a] sm:$0xff]
        %v3379 = vld [vmem:[%s2577 + $0x142] sm:$0xff]
        %v3380 = vld [vmem:[%s2577 + $0x152] sm:$0xff]
        %v3381 = vld [vmem:[%s2577 + $0x15a] sm:$0xff]
        %v3382 = vld [vmem:[%s2577 + $0x16a] sm:$0xff]
        %v3383 = vld [vmem:[%s2577 + $0x172] sm:$0xff]
        %s3384 = scalar_lea.vmem %s1, 64
        %v3385 = vld [vmem:[%s3384] sm:$0xff]
        %v3387 = vsel %vm241, %v3352, 0
        %v3390 = vsel %vm241, %v3353, 0
        %v3393 = vsel %vm241, %v3354, 0
        %v3396 = vsel %vm241, %v3355, 0
        %v3399 = vsel %vm241, %v3356, 0
        %v3402 = vsel %vm241, %v3357, 0
        %v3405 = vsel %vm241, %v3358, 0
        %v3408 = vsel %vm241, %v3359, 0
        %v3411 = vsel %vm241, %v3360, 0
        %v3414 = vsel %vm241, %v3361, 0
        %v3417 = vsel %vm241, %v3362, 0
        %v3420 = vsel %vm241, %v3363, 0
        %v3423 = vsel %vm241, %v3364, 0
        %v3426 = vsel %vm241, %v3365, 0
        %v3429 = vsel %vm241, %v3366, 0
        %v3432 = vsel %vm241, %v3367, 0
        %v3435 = vsel %vm241, %v3368, 0
        %v3438 = vsel %vm241, %v3369, 0
        %v3441 = vsel %vm241, %v3370, 0
        %v3444 = vsel %vm241, %v3371, 0
        %v3447 = vsel %vm241, %v3372, 0
        %v3450 = vsel %vm241, %v3373, 0
        %v3453 = vsel %vm241, %v3374, 0
        %v3456 = vsel %vm241, %v3375, 0
        %v3459 = vsel %vm241, %v3376, 0
        %v3462 = vsel %vm241, %v3377, 0
        %v3465 = vsel %vm241, %v3378, 0
        %v3468 = vsel %vm241, %v3379, 0
        %v3471 = vsel %vm241, %v3380, 0
        %v3474 = vsel %vm241, %v3381, 0
        %v3477 = vsel %vm241, %v3382, 0
        %v3480 = vsel %vm241, %v3383, 0
        %3482 = vmatprep.subr.mxu0 0.0
        %3483 = vmatpush1.msra.mxu0 0.0
        %3484 = vmatprep.subr.mxu0 0.0
        %3485 = vmatpush1.msra.mxu0 0.0
        %3486 = vmatprep.subr.mxu0 0.0
        %3487 = vmatpush1.msra.mxu0 0.0
        %3488 = vmatprep.subr.mxu0 0.0
        %3489 = vmatpush1.msra.mxu0 0.0
        %3490 = vmatprep.subr.mxu0 0.0
        %3491 = vmatpush1.msra.mxu0 0.0
        %3492 = vmatprep.subr.mxu0 0.0
        %3493 = vmatpush1.msra.mxu0 0.0
        %3494 = vmatprep.subr.mxu0 0.0
        %3495 = vmatpush1.msra.mxu0 0.0
        %3496 = vmatprep.subr.mxu0 0.0
        %3497 = vmatpush1.msra.mxu0 0.0
        %3498 = vmatprep.subr.mxu0 0.0
        %3499 = vmatpush1.msra.mxu0 0.0
        %3500 = vmatprep.subr.mxu0 0.0
        %3501 = vmatpush1.msra.mxu0 0.0
        %3502 = vmatprep.subr.mxu0 0.0
        %3503 = vmatpush1.msra.mxu0 0.0
        %3504 = vmatprep.subr.mxu0 0.0
        %3505 = vmatpush1.msra.mxu0 0.0
        %3506 = vmatprep.subr.mxu0 0.0
        %3507 = vmatpush1.msra.mxu0 0.0
        %3508 = vmatprep.subr.mxu0 0.0
        %3509 = vmatpush1.msra.mxu0 0.0
        %3510 = vmatprep.subr.mxu0 0.0
        %3511 = vmatpush1.msra.mxu0 0.0
        %3512 = vmatprep.subr.mxu0 0.0
        %3513 = vmatpush1.msra.mxu0 %v3385
        %3514 = vmatprep.subr.mxu0 0.0
        %3515 = vmatpush2.msra.mxu0 0.0
        %3516 = vmatprep.subr.mxu0 0.0
        %3517 = vmatpush2.msra.mxu0 0.0
        %3518 = vmatprep.subr.mxu0 0.0
        %3519 = vmatpush2.msra.mxu0 0.0
        %3520 = vmatprep.subr.mxu0 0.0
        %3521 = vmatpush2.msra.mxu0 0.0
        %3522 = vmatprep.subr.mxu0 0.0
        %3523 = vmatpush2.msra.mxu0 0.0
        %3524 = vmatprep.subr.mxu0 0.0
        %3525 = vmatpush2.msra.mxu0 0.0
        %3526 = vmatprep.subr.mxu0 0.0
        %3527 = vmatpush2.msra.mxu0 0.0
        %3528 = vmatprep.subr.mxu0 0.0
        %3529 = vmatpush2.msra.mxu0 0.0
        %3530 = vmatprep.subr.mxu0 0.0
        %3531 = vmatpush2.msra.mxu0 0.0
        %3532 = vmatprep.subr.mxu0 0.0
        %3533 = vmatpush2.msra.mxu0 0.0
        %3534 = vmatprep.subr.mxu0 0.0
        %3535 = vmatpush2.msra.mxu0 0.0
        %3536 = vmatprep.subr.mxu0 0.0
        %3537 = vmatpush2.msra.mxu0 0.0
        %3538 = vmatprep.subr.mxu0 0.0
        %3539 = vmatpush2.msra.mxu0 0.0
        %3540 = vmatprep.subr.mxu0 0.0
        %3541 = vmatpush2.msra.mxu0 0.0
        %3542 = vmatprep.subr.mxu0 0.0
        %3543 = vmatpush2.msra.mxu0 0.0
        %3544 = vmatprep.subr.mxu0 0.0
        %3545 = vmatpush2.msra.mxu0 0.0
        %3546 = vmatprep.mubr.f32.mxu0 0.0
        %3547 = vmatmul.mubr.f32.gmra.mxu0 %v3387
        %v3548 = vpop.f32.mrf.mxu0
        %v3549 = vadd.f32 0.0, %v3548
        %v3550 = vpop.f32.mrf.mxu0
        %3551 = vmatprep.mubr.f32.mxu0 0.0
        %3552 = vmatmul.mubr.f32.gmra.mxu0 %v3390
        %v3553 = vpop.f32.mrf.mxu0
        %v3554 = vadd.f32 0.0, %v3553
        %v3555 = vpop.f32.mrf.mxu0
        %3556 = vmatprep.mubr.f32.mxu0 0.0
        %3557 = vmatmul.mubr.f32.gmra.mxu0 %v3393
        %v3558 = vpop.f32.mrf.mxu0
        %v3559 = vadd.f32 0.0, %v3558
        %v3560 = vpop.f32.mrf.mxu0
        %3561 = vmatprep.mubr.f32.mxu0 0.0
        %3562 = vmatmul.mubr.f32.gmra.mxu0 %v3396
        %v3563 = vpop.f32.mrf.mxu0
        %v3564 = vadd.f32 0.0, %v3563
        %v3565 = vpop.f32.mrf.mxu0
        %3566 = vmatprep.mubr.f32.mxu0 0.0
        %3567 = vmatmul.mubr.f32.gmra.mxu0 %v3399
        %v3568 = vpop.f32.mrf.mxu0
        %v3569 = vadd.f32 0.0, %v3568
        %v3570 = vpop.f32.mrf.mxu0
        %3571 = vmatprep.mubr.f32.mxu0 0.0
        %3572 = vmatmul.mubr.f32.gmra.mxu0 %v3402
        %v3573 = vpop.f32.mrf.mxu0
        %v3574 = vadd.f32 0.0, %v3573
        %v3575 = vpop.f32.mrf.mxu0
        %3576 = vmatprep.mubr.f32.mxu0 0.0
        %3577 = vmatmul.mubr.f32.gmra.mxu0 %v3405
        %v3578 = vpop.f32.mrf.mxu0
        %v3579 = vadd.f32 0.0, %v3578
        %v3580 = vpop.f32.mrf.mxu0
        %3581 = vmatprep.mubr.f32.mxu0 0.0
        %3582 = vmatmul.mubr.f32.gmra.mxu0 %v3408
        %v3583 = vpop.f32.mrf.mxu0
        %v3584 = vadd.f32 0.0, %v3583
        %v3585 = vpop.f32.mrf.mxu0
        %3586 = vmatprep.mubr.f32.mxu0 0.0
        %3587 = vmatmul.mubr.f32.gmra.mxu0 %v3411
        %v3588 = vpop.f32.mrf.mxu0
        %v3589 = vadd.f32 0.0, %v3588
        %v3590 = vpop.f32.mrf.mxu0
        %3591 = vmatprep.mubr.f32.mxu0 0.0
        %3592 = vmatmul.mubr.f32.gmra.mxu0 %v3414
        %v3593 = vpop.f32.mrf.mxu0
        %v3594 = vadd.f32 0.0, %v3593
        %v3595 = vpop.f32.mrf.mxu0
        %3596 = vmatprep.mubr.f32.mxu0 0.0
        %3597 = vmatmul.mubr.f32.gmra.mxu0 %v3417
        %v3598 = vpop.f32.mrf.mxu0
        %v3599 = vadd.f32 0.0, %v3598
        %v3600 = vpop.f32.mrf.mxu0
        %3601 = vmatprep.mubr.f32.mxu0 0.0
        %3602 = vmatmul.mubr.f32.gmra.mxu0 %v3420
        %v3603 = vpop.f32.mrf.mxu0
        %v3604 = vadd.f32 0.0, %v3603
        %v3605 = vpop.f32.mrf.mxu0
        %3606 = vmatprep.mubr.f32.mxu0 0.0
        %3607 = vmatmul.mubr.f32.gmra.mxu0 %v3423
        %v3608 = vpop.f32.mrf.mxu0
        %v3609 = vadd.f32 0.0, %v3608
        %v3610 = vpop.f32.mrf.mxu0
        %3611 = vmatprep.mubr.f32.mxu0 0.0
        %3612 = vmatmul.mubr.f32.gmra.mxu0 %v3426
        %v3613 = vpop.f32.mrf.mxu0
        %v3614 = vadd.f32 0.0, %v3613
        %v3615 = vpop.f32.mrf.mxu0
        %3616 = vmatprep.mubr.f32.mxu0 0.0
        %3617 = vmatmul.mubr.f32.gmra.mxu0 %v3429
        %v3618 = vpop.f32.mrf.mxu0
        %v3619 = vadd.f32 0.0, %v3618
        %v3620 = vpop.f32.mrf.mxu0
        %3621 = vmatprep.mubr.f32.mxu0 0.0
        %3622 = vmatmul.mubr.f32.gmra.mxu0 %v3432
        %v3623 = vpop.f32.mrf.mxu0
        %v3624 = vadd.f32 0.0, %v3623
        %v3625 = vpop.f32.mrf.mxu0
        %3626 = vmatprep.mubr.f32.mxu0 0.0
        %3627 = vmatmul.mubr.f32.gmra.mxu0 %v3435
        %v3628 = vpop.f32.mrf.mxu0
        %v3629 = vadd.f32 0.0, %v3628
        %v3630 = vpop.f32.mrf.mxu0
        %3631 = vmatprep.mubr.f32.mxu0 0.0
        %3632 = vmatmul.mubr.f32.gmra.mxu0 %v3438
        %v3633 = vpop.f32.mrf.mxu0
        %v3634 = vadd.f32 0.0, %v3633
        %v3635 = vpop.f32.mrf.mxu0
        %3636 = vmatprep.mubr.f32.mxu0 0.0
        %3637 = vmatmul.mubr.f32.gmra.mxu0 %v3441
        %v3638 = vpop.f32.mrf.mxu0
        %v3639 = vadd.f32 0.0, %v3638
        %v3640 = vpop.f32.mrf.mxu0
        %3641 = vmatprep.mubr.f32.mxu0 0.0
        %3642 = vmatmul.mubr.f32.gmra.mxu0 %v3444
        %v3643 = vpop.f32.mrf.mxu0
        %v3644 = vadd.f32 0.0, %v3643
        %v3645 = vpop.f32.mrf.mxu0
        %3646 = vmatprep.mubr.f32.mxu0 0.0
        %3647 = vmatmul.mubr.f32.gmra.mxu0 %v3447
        %v3648 = vpop.f32.mrf.mxu0
        %v3649 = vadd.f32 0.0, %v3648
        %v3650 = vpop.f32.mrf.mxu0
        %3651 = vmatprep.mubr.f32.mxu0 0.0
        %3652 = vmatmul.mubr.f32.gmra.mxu0 %v3450
        %v3653 = vpop.f32.mrf.mxu0
        %v3654 = vadd.f32 0.0, %v3653
        %v3655 = vpop.f32.mrf.mxu0
        %3656 = vmatprep.mubr.f32.mxu0 0.0
        %3657 = vmatmul.mubr.f32.gmra.mxu0 %v3453
        %v3658 = vpop.f32.mrf.mxu0
        %v3659 = vadd.f32 0.0, %v3658
        %v3660 = vpop.f32.mrf.mxu0
        %3661 = vmatprep.mubr.f32.mxu0 0.0
        %3662 = vmatmul.mubr.f32.gmra.mxu0 %v3456
        %v3663 = vpop.f32.mrf.mxu0
        %v3664 = vadd.f32 0.0, %v3663
        %v3665 = vpop.f32.mrf.mxu0
        %3666 = vmatprep.mubr.f32.mxu0 0.0
        %3667 = vmatmul.mubr.f32.gmra.mxu0 %v3459
        %v3668 = vpop.f32.mrf.mxu0
        %v3669 = vadd.f32 0.0, %v3668
        %v3670 = vpop.f32.mrf.mxu0
        %3671 = vmatprep.mubr.f32.mxu0 0.0
        %3672 = vmatmul.mubr.f32.gmra.mxu0 %v3462
        %v3673 = vpop.f32.mrf.mxu0
        %v3674 = vadd.f32 0.0, %v3673
        %v3675 = vpop.f32.mrf.mxu0
        %3676 = vmatprep.mubr.f32.mxu0 0.0
        %3677 = vmatmul.mubr.f32.gmra.mxu0 %v3465
        %v3678 = vpop.f32.mrf.mxu0
        %v3679 = vadd.f32 0.0, %v3678
        %v3680 = vpop.f32.mrf.mxu0
        %3681 = vmatprep.mubr.f32.mxu0 0.0
        %3682 = vmatmul.mubr.f32.gmra.mxu0 %v3468
        %v3683 = vpop.f32.mrf.mxu0
        %v3684 = vadd.f32 0.0, %v3683
        %v3685 = vpop.f32.mrf.mxu0
        %3686 = vmatprep.mubr.f32.mxu0 0.0
        %3687 = vmatmul.mubr.f32.gmra.mxu0 %v3471
        %v3688 = vpop.f32.mrf.mxu0
        %v3689 = vadd.f32 0.0, %v3688
        %v3690 = vpop.f32.mrf.mxu0
        %3691 = vmatprep.mubr.f32.mxu0 0.0
        %3692 = vmatmul.mubr.f32.gmra.mxu0 %v3474
        %v3693 = vpop.f32.mrf.mxu0
        %v3694 = vadd.f32 0.0, %v3693
        %v3695 = vpop.f32.mrf.mxu0
        %3696 = vmatprep.mubr.f32.mxu0 0.0
        %3697 = vmatmul.mubr.f32.gmra.mxu0 %v3477
        %v3698 = vpop.f32.mrf.mxu0
        %v3699 = vadd.f32 0.0, %v3698
        %v3700 = vpop.f32.mrf.mxu0
        %3701 = vmatprep.mubr.f32.mxu0 0.0
        %3702 = vmatmul.mubr.f32.gmra.mxu0 %v3480
        %v3703 = vpop.f32.mrf.mxu0
        %v3704 = vadd.f32 0.0, %v3703
        %v3705 = vpop.f32.mrf.mxu0
        %3706 = vdwg.mxu0
        %v3707 = vadd.f32 %v3320, %v3549
        %v3708 = vadd.f32 %v3321, %v3554
        %v3709 = vadd.f32 %v3322, %v3559
        %v3710 = vadd.f32 %v3323, %v3564
        %v3711 = vadd.f32 %v3324, %v3569
        %v3712 = vadd.f32 %v3325, %v3574
        %v3713 = vadd.f32 %v3326, %v3579
        %v3714 = vadd.f32 %v3327, %v3584
        %v3715 = vadd.f32 %v3328, %v3589
        %v3716 = vadd.f32 %v3329, %v3594
        %v3717 = vadd.f32 %v3330, %v3599
        %v3718 = vadd.f32 %v3331, %v3604
        %v3719 = vadd.f32 %v3332, %v3609
        %v3720 = vadd.f32 %v3333, %v3614
        %v3721 = vadd.f32 %v3334, %v3619
        %v3722 = vadd.f32 %v3335, %v3624
        %v3723 = vadd.f32 %v3336, %v3629
        %v3724 = vadd.f32 %v3337, %v3634
        %v3725 = vadd.f32 %v3338, %v3639
        %v3726 = vadd.f32 %v3339, %v3644
        %v3727 = vadd.f32 %v3340, %v3649
        %v3728 = vadd.f32 %v3341, %v3654
        %v3729 = vadd.f32 %v3342, %v3659
        %v3730 = vadd.f32 %v3343, %v3664
        %v3731 = vadd.f32 %v3344, %v3669
        %v3732 = vadd.f32 %v3345, %v3674
        %v3733 = vadd.f32 %v3346, %v3679
        %v3734 = vadd.f32 %v3347, %v3684
        %v3735 = vadd.f32 %v3348, %v3689
        %v3736 = vadd.f32 %v3349, %v3694
        %v3737 = vadd.f32 %v3350, %v3699
        %v3738 = vadd.f32 %v3351, %v3704
        %v3739 = vld [vmem:[%s2] sm:$0x1]
        %v3741 = vlaneseq
        %v3742 = vshrl.u32 %v3741, 7
        %v3743 = vsub.s32 0, %v3742
        %v3744 = vrot.slane %v3739, %v3743
        %v3746 = vadd.f32 %v3707, %v3744
        %v3747 = vadd.f32 %v3708, %v3744
        %v3748 = vadd.f32 %v3709, %v3744
        %v3749 = vadd.f32 %v3710, %v3744
        %v3750 = vadd.f32 %v3711, %v3744
        %v3751 = vadd.f32 %v3712, %v3744
        %v3752 = vadd.f32 %v3713, %v3744
        %v3753 = vadd.f32 %v3714, %v3744
        %v3754 = vadd.f32 %v3715, %v3744
        %v3755 = vadd.f32 %v3716, %v3744
        %v3756 = vadd.f32 %v3717, %v3744
        %v3757 = vadd.f32 %v3718, %v3744
        %v3758 = vadd.f32 %v3719, %v3744
        %v3759 = vadd.f32 %v3720, %v3744
        %v3760 = vadd.f32 %v3721, %v3744
        %v3761 = vadd.f32 %v3722, %v3744
        %v3762 = vadd.f32 %v3723, %v3744
        %v3763 = vadd.f32 %v3724, %v3744
        %v3764 = vadd.f32 %v3725, %v3744
        %v3765 = vadd.f32 %v3726, %v3744
        %v3766 = vadd.f32 %v3727, %v3744
        %v3767 = vadd.f32 %v3728, %v3744
        %v3768 = vadd.f32 %v3729, %v3744
        %v3769 = vadd.f32 %v3730, %v3744
        %v3770 = vadd.f32 %v3731, %v3744
        %v3771 = vadd.f32 %v3732, %v3744
        %v3772 = vadd.f32 %v3733, %v3744
        %v3773 = vadd.f32 %v3734, %v3744
        %v3774 = vadd.f32 %v3735, %v3744
        %v3775 = vadd.f32 %v3736, %v3744
        %v3776 = vadd.f32 %v3737, %v3744
        %v3777 = vadd.f32 %v3738, %v3744
        %3778 = vst.msk [vmem:[%s208] sm:$0xff] %vm241, %v3746
        %3779 = vst.msk [vmem:[%s208 + $0x8] sm:$0xff] %vm241, %v3747
        %3780 = vst.msk [vmem:[%s208 + $0x10] sm:$0xff] %vm241, %v3748
        %3781 = vst.msk [vmem:[%s208 + $0x18] sm:$0xff] %vm241, %v3749
        %3782 = vst.msk [vmem:[%s208 + $0x20] sm:$0xff] %vm241, %v3750
        %3783 = vst.msk [vmem:[%s208 + $0x28] sm:$0xff] %vm241, %v3751
        %3784 = vst.msk [vmem:[%s208 + $0x30] sm:$0xff] %vm241, %v3752
        %3785 = vst.msk [vmem:[%s208 + $0x38] sm:$0xff] %vm241, %v3753
        %3786 = vst.msk [vmem:[%s208 + $0x40] sm:$0xff] %vm241, %v3754
        %3787 = vst.msk [vmem:[%s208 + $0x48] sm:$0xff] %vm241, %v3755
        %3788 = vst.msk [vmem:[%s208 + $0x50] sm:$0xff] %vm241, %v3756
        %3789 = vst.msk [vmem:[%s208 + $0x58] sm:$0xff] %vm241, %v3757
        %3790 = vst.msk [vmem:[%s208 + $0x60] sm:$0xff] %vm241, %v3758
        %3791 = vst.msk [vmem:[%s208 + $0x68] sm:$0xff] %vm241, %v3759
        %3792 = vst.msk [vmem:[%s208 + $0x70] sm:$0xff] %vm241, %v3760
        %3793 = vst.msk [vmem:[%s208 + $0x78] sm:$0xff] %vm241, %v3761
        %3794 = vst.msk [vmem:[%s208 + $0x80] sm:$0xff] %vm241, %v3762
        %3795 = vst.msk [vmem:[%s208 + $0x88] sm:$0xff] %vm241, %v3763
        %3796 = vst.msk [vmem:[%s208 + $0x90] sm:$0xff] %vm241, %v3764
        %3797 = vst.msk [vmem:[%s208 + $0x98] sm:$0xff] %vm241, %v3765
        %3798 = vst.msk [vmem:[%s208 + $0xa0] sm:$0xff] %vm241, %v3766
        %3799 = vst.msk [vmem:[%s208 + $0xa8] sm:$0xff] %vm241, %v3767
        %3800 = vst.msk [vmem:[%s208 + $0xb0] sm:$0xff] %vm241, %v3768
        %3801 = vst.msk [vmem:[%s208 + $0xb8] sm:$0xff] %vm241, %v3769
        %3802 = vst.msk [vmem:[%s208 + $0xc0] sm:$0xff] %vm241, %v3770
        %3803 = vst.msk [vmem:[%s208 + $0xc8] sm:$0xff] %vm241, %v3771
        %3804 = vst.msk [vmem:[%s208 + $0xd0] sm:$0xff] %vm241, %v3772
        %3805 = vst.msk [vmem:[%s208 + $0xd8] sm:$0xff] %vm241, %v3773
        %3806 = vst.msk [vmem:[%s208 + $0xe0] sm:$0xff] %vm241, %v3774
        %3807 = vst.msk [vmem:[%s208 + $0xe8] sm:$0xff] %vm241, %v3775
        %3808 = vst.msk [vmem:[%s208 + $0xf0] sm:$0xff] %vm241, %v3776
        %3809 = vst.msk [vmem:[%s208 + $0xf8] sm:$0xff] %vm241, %v3777
        %v3810 = vsel %vm241, %v3746, 0.0
        %v3811 = vsel %vm241, %v3747, 0.0
        %v3812 = vadd.f32 %v3810, %v3811
        %v3813 = vsel %vm241, %v3748, 0.0
        %v3814 = vadd.f32 %v3812, %v3813
        %v3815 = vsel %vm241, %v3749, 0.0
        %v3816 = vadd.f32 %v3814, %v3815
        %v3817 = vsel %vm241, %v3750, 0.0
        %v3818 = vadd.f32 %v3816, %v3817
        %v3819 = vsel %vm241, %v3751, 0.0
        %v3820 = vadd.f32 %v3818, %v3819
        %v3821 = vsel %vm241, %v3752, 0.0
        %v3822 = vadd.f32 %v3820, %v3821
        %v3823 = vsel %vm241, %v3753, 0.0
        %v3824 = vadd.f32 %v3822, %v3823
        %v3825 = vsel %vm241, %v3754, 0.0
        %v3826 = vadd.f32 %v3824, %v3825
        %v3827 = vsel %vm241, %v3755, 0.0
        %v3828 = vadd.f32 %v3826, %v3827
        %v3829 = vsel %vm241, %v3756, 0.0
        %v3830 = vadd.f32 %v3828, %v3829
        %v3831 = vsel %vm241, %v3757, 0.0
        %v3832 = vadd.f32 %v3830, %v3831
        %v3833 = vsel %vm241, %v3758, 0.0
        %v3834 = vadd.f32 %v3832, %v3833
        %v3835 = vsel %vm241, %v3759, 0.0
        %v3836 = vadd.f32 %v3834, %v3835
        %v3837 = vsel %vm241, %v3760, 0.0
        %v3838 = vadd.f32 %v3836, %v3837
        %v3839 = vsel %vm241, %v3761, 0.0
        %v3840 = vadd.f32 %v3838, %v3839
        %v3841 = vsel %vm241, %v3762, 0.0
        %v3842 = vadd.f32 %v3840, %v3841
        %v3843 = vsel %vm241, %v3763, 0.0
        %v3844 = vadd.f32 %v3842, %v3843
        %v3845 = vsel %vm241, %v3764, 0.0
        %v3846 = vadd.f32 %v3844, %v3845
        %v3847 = vsel %vm241, %v3765, 0.0
        %v3848 = vadd.f32 %v3846, %v3847
        %v3849 = vsel %vm241, %v3766, 0.0
        %v3850 = vadd.f32 %v3848, %v3849
        %v3851 = vsel %vm241, %v3767, 0.0
        %v3852 = vadd.f32 %v3850, %v3851
        %v3853 = vsel %vm241, %v3768, 0.0
        %v3854 = vadd.f32 %v3852, %v3853
        %v3855 = vsel %vm241, %v3769, 0.0
        %v3856 = vadd.f32 %v3854, %v3855
        %v3857 = vsel %vm241, %v3770, 0.0
        %v3858 = vadd.f32 %v3856, %v3857
        %v3859 = vsel %vm241, %v3771, 0.0
        %v3860 = vadd.f32 %v3858, %v3859
        %v3861 = vsel %vm241, %v3772, 0.0
        %v3862 = vadd.f32 %v3860, %v3861
        %v3863 = vsel %vm241, %v3773, 0.0
        %v3864 = vadd.f32 %v3862, %v3863
        %v3865 = vsel %vm241, %v3774, 0.0
        %v3866 = vadd.f32 %v3864, %v3865
        %v3867 = vsel %vm241, %v3775, 0.0
        %v3868 = vadd.f32 %v3866, %v3867
        %v3869 = vsel %vm241, %v3776, 0.0
        %v3870 = vadd.f32 %v3868, %v3869
        %v3871 = vsel %vm241, %v3777, 0.0
        %v3872 = vadd.f32 %v3870, %v3871
        %v3873 = vrot.slane %v3872, 4
        %v3874 = vadd.f32 %v3872, %v3873
        %v3875 = vrot.slane %v3874, 2
        %v3876 = vadd.f32 %v3874, %v3875
        %v3877 = vrot.slane %v3876, 1
        %v3878 = vadd.f32 %v3876, %v3877
        %3879 = vst.msk [vmem:[%s198] sm:$0x1] %vm250, %v3878
        %v3880 = vmul.f32 %v3746, %v3746
        %v3881 = vmul.f32 %v3747, %v3747
        %v3882 = vmul.f32 %v3748, %v3748
        %v3883 = vmul.f32 %v3749, %v3749
        %v3884 = vmul.f32 %v3750, %v3750
        %v3885 = vmul.f32 %v3751, %v3751
        %v3886 = vmul.f32 %v3752, %v3752
        %v3887 = vmul.f32 %v3753, %v3753
        %v3888 = vmul.f32 %v3754, %v3754
        %v3889 = vmul.f32 %v3755, %v3755
        %v3890 = vmul.f32 %v3756, %v3756
        %v3891 = vmul.f32 %v3757, %v3757
        %v3892 = vmul.f32 %v3758, %v3758
        %v3893 = vmul.f32 %v3759, %v3759
        %v3894 = vmul.f32 %v3760, %v3760
        %v3895 = vmul.f32 %v3761, %v3761
        %v3896 = vmul.f32 %v3762, %v3762
        %v3897 = vmul.f32 %v3763, %v3763
        %v3898 = vmul.f32 %v3764, %v3764
        %v3899 = vmul.f32 %v3765, %v3765
        %v3900 = vmul.f32 %v3766, %v3766
        %v3901 = vmul.f32 %v3767, %v3767
        %v3902 = vmul.f32 %v3768, %v3768
        %v3903 = vmul.f32 %v3769, %v3769
        %v3904 = vmul.f32 %v3770, %v3770
        %v3905 = vmul.f32 %v3771, %v3771
        %v3906 = vmul.f32 %v3772, %v3772
        %v3907 = vmul.f32 %v3773, %v3773
        %v3908 = vmul.f32 %v3774, %v3774
        %v3909 = vmul.f32 %v3775, %v3775
        %v3910 = vmul.f32 %v3776, %v3776
        %v3911 = vmul.f32 %v3777, %v3777
        %v3912 = vsel %vm241, %v3880, 0.0
        %v3913 = vsel %vm241, %v3881, 0.0
        %v3914 = vadd.f32 %v3912, %v3913
        %v3915 = vsel %vm241, %v3882, 0.0
        %v3916 = vadd.f32 %v3914, %v3915
        %v3917 = vsel %vm241, %v3883, 0.0
        %v3918 = vadd.f32 %v3916, %v3917
        %v3919 = vsel %vm241, %v3884, 0.0
        %v3920 = vadd.f32 %v3918, %v3919
        %v3921 = vsel %vm241, %v3885, 0.0
        %v3922 = vadd.f32 %v3920, %v3921
        %v3923 = vsel %vm241, %v3886, 0.0
        %v3924 = vadd.f32 %v3922, %v3923
        %v3925 = vsel %vm241, %v3887, 0.0
        %v3926 = vadd.f32 %v3924, %v3925
        %v3927 = vsel %vm241, %v3888, 0.0
        %v3928 = vadd.f32 %v3926, %v3927
        %v3929 = vsel %vm241, %v3889, 0.0
        %v3930 = vadd.f32 %v3928, %v3929
        %v3931 = vsel %vm241, %v3890, 0.0
        %v3932 = vadd.f32 %v3930, %v3931
        %v3933 = vsel %vm241, %v3891, 0.0
        %v3934 = vadd.f32 %v3932, %v3933
        %v3935 = vsel %vm241, %v3892, 0.0
        %v3936 = vadd.f32 %v3934, %v3935
        %v3937 = vsel %vm241, %v3893, 0.0
        %v3938 = vadd.f32 %v3936, %v3937
        %v3939 = vsel %vm241, %v3894, 0.0
        %v3940 = vadd.f32 %v3938, %v3939
        %v3941 = vsel %vm241, %v3895, 0.0
        %v3942 = vadd.f32 %v3940, %v3941
        %v3943 = vsel %vm241, %v3896, 0.0
        %v3944 = vadd.f32 %v3942, %v3943
        %v3945 = vsel %vm241, %v3897, 0.0
        %v3946 = vadd.f32 %v3944, %v3945
        %v3947 = vsel %vm241, %v3898, 0.0
        %v3948 = vadd.f32 %v3946, %v3947
        %v3949 = vsel %vm241, %v3899, 0.0
        %v3950 = vadd.f32 %v3948, %v3949
        %v3951 = vsel %vm241, %v3900, 0.0
        %v3952 = vadd.f32 %v3950, %v3951
        %v3953 = vsel %vm241, %v3901, 0.0
        %v3954 = vadd.f32 %v3952, %v3953
        %v3955 = vsel %vm241, %v3902, 0.0
        %v3956 = vadd.f32 %v3954, %v3955
        %v3957 = vsel %vm241, %v3903, 0.0
        %v3958 = vadd.f32 %v3956, %v3957
        %v3959 = vsel %vm241, %v3904, 0.0
        %v3960 = vadd.f32 %v3958, %v3959
        %v3961 = vsel %vm241, %v3905, 0.0
        %v3962 = vadd.f32 %v3960, %v3961
        %v3963 = vsel %vm241, %v3906, 0.0
        %v3964 = vadd.f32 %v3962, %v3963
        %v3965 = vsel %vm241, %v3907, 0.0
        %v3966 = vadd.f32 %v3964, %v3965
        %v3967 = vsel %vm241, %v3908, 0.0
        %v3968 = vadd.f32 %v3966, %v3967
        %v3969 = vsel %vm241, %v3909, 0.0
        %v3970 = vadd.f32 %v3968, %v3969
        %v3971 = vsel %vm241, %v3910, 0.0
        %v3972 = vadd.f32 %v3970, %v3971
        %v3973 = vsel %vm241, %v3911, 0.0
        %v3974 = vadd.f32 %v3972, %v3973
        %v3975 = vrot.slane %v3974, 4
        %v3976 = vadd.f32 %v3974, %v3975
        %v3977 = vrot.slane %v3976, 2
        %v3978 = vadd.f32 %v3976, %v3977
        %v3979 = vrot.slane %v3978, 1
        %v3980 = vadd.f32 %v3978, %v3979
        %3981 = vst.msk [vmem:[%s198 + $0x1] sm:$0x1] %vm250, %v3980
        %p3982 = scmp.lt.s32.totalorder %s19, 1
        %s3983 = scalar_select %p3982, %s19, 1
        %s3984 = smul.addr %s3983, 32
        %s3985 = smul.addr %s3984, 8
        %s3986 = scalar_lea.vmem %s3, %s3985
        %s3987 = sand.u32 %s121, 1
        %s3988 = scalar_lea.sflag [#allocation4], %s3987
        %s3989 = sand.u32 %s121, 1
        %s3990 = smul.addr %s3989, 2
        %s3991 = scalar_lea.vmem [#allocation3], %s3990
        // Predicated region
        $region33: #{tpu_custom_call.1} parent=31 // pred_check
          %p3992 = pneg %p105
        $region34: #{tpu_custom_call.1} parent=31 // pred_check_branch
          %3994 = sbr.rel (%p3992) target = $region36
        $region35: #{tpu_custom_call.1} parent=31 // pred_region
          _
        $region36: #{tpu_custom_call.1} parent=31 // pred_fallthru
          _
        // Predicated region
        $region37: #{tpu_custom_call.1} parent=31 // pred_check
          %p3995 = pneg %p131
        $region38: #{tpu_custom_call.1} parent=31 // pred_check_branch
          %3997 = sbr.rel (%p3995) target = $region40
        $region39: #{tpu_custom_call.1} parent=31 // pred_region
          %s3999 = ssub.s32 32, 32
          %4000 = vsyncadd %s3988, %s3999
          %s4001 = smul.addr %s19, 32
          %s4002 = scalar_lea.hbm %s4, %s4001
          %s4004 = sshll.u32 %s3991, 4
          %s4005 = int_to_ptr.vmem [resolvable:$true] %s4004
          %4007 = dma.vmem_to_hbm [thread:$0]  %s4005, 32, %s4002, %s3988
        $region40: #{tpu_custom_call.1} parent=31 // pred_fallthru
          _
      $region32: #{tpu_custom_call.1} parent=5 // pred_fallthru
        _
      %p4008 = scmp.le.s32.totalorder 2, %s14
      // Predicated region
      $region41: #{tpu_custom_call.1} parent=5 // pred_check
        %p4009 = pneg %p4008
      $region42: #{tpu_custom_call.1} parent=5 // pred_check_branch
        %4011 = sbr.rel (%p4009) target = $region44
      $region43: #{tpu_custom_call.1} parent=5 // pred_region
        %s4012 = ssub.s32 %s14, 2
        // Predicated region
        $region45: #{tpu_custom_call.1} parent=43 // pred_check
          %p4013 = pneg %p111
        $region46: #{tpu_custom_call.1} parent=43 // pred_check_branch
          %4015 = sbr.rel (%p4013) target = $region48
        $region47: #{tpu_custom_call.1} parent=43 // pred_region
          %p4016 = scmp.lt.s32.totalorder %s20, 1
          %s4017 = scalar_select %p4016, %s20, 1
          %s4018 = smul.addr %s4017, 32
          %s4019 = smul.addr %s4018, 8
          %s4020 = scalar_lea.vmem %s3, %s4019
        $region48: #{tpu_custom_call.1} parent=43 // pred_fallthru
          _
        // Predicated region
        $region49: #{tpu_custom_call.1} parent=43 // pred_check
          %p4021 = pneg %p137
        $region50: #{tpu_custom_call.1} parent=43 // pred_check_branch
          %4023 = sbr.rel (%p4021) target = $region52
        $region51: #{tpu_custom_call.1} parent=43 // pred_region
          %s4024 = sand.u32 %s122, 1
          %s4025 = scalar_lea.sflag [#allocation4], %s4024
          %s4026 = sand.u32 %s122, 1
          %s4027 = smul.addr %s4026, 2
          %s4028 = scalar_lea.vmem [#allocation3], %s4027
          %4029 = dma.done %s4025, 32
        $region52: #{tpu_custom_call.1} parent=43 // pred_fallthru
          _
      $region44: #{tpu_custom_call.1} parent=5 // pred_fallthru
        _
    $region6: #{tpu_custom_call.1} parent=1 // loop_footer
      %s18 = sadd.s32 1, %s14
    $region7: #{tpu_custom_call.1} parent=1 // loop_footer_branch
      %13 = sbr.rel target = $region3
    $region8: #{tpu_custom_call.1} parent=1 // loop_exit
      _
    %4030 = vsyncpa [#allocation4], 1
    %s4031 = scalar_lea.sflag [#allocation4], 1
    %4032 = vsyncpa %s4031, 1

</llo_original>
